<compile_context>
chip_gen: v5e
topology: v5e:2x2
jax: 0.10.0
libtpu: 0.0.40
codegen_flags: <defaults>
</compile_context>

<pallas_src>
import numpy as np
import jax
import jax.numpy as jnp
from jax.experimental import pallas as pl
from jax.experimental.pallas import tpu as pltpu


# ----------------------------- layout constants ---------------------------- #
WP1 = 34                 # row stride (padded width) of the 34x34 conv1 input
XCOLS1 = 1280            # flat width of the conv1 input buffer (34*34=1156 + zero slack)
NQ1 = 1152               # conv1 output columns computed (multiple of 128; h>=32 is junk)
LM1 = 1088               # pool1 shifted-max extent (needs q = 68*h2 + 2*w2 <= 1050)
SHIFTS1 = tuple(kh * WP1 + kw for kh in range(3) for kw in range(3))

WP2 = 18                 # row stride (padded width) of the 18x18 conv2 input
XF2_COLS = 384           # flat width of the conv2 input buffer (18*18=324 + zero slack)
NQ2 = 304                # conv2 output columns computed (>= 16*18 = 288; rest is junk)
LM2 = 272                # pool2 shifted-max extent (needs q = 36*h3 + 2*w3 <= 266)
SHIFTS2 = tuple(kh * WP2 + kw for kh in range(3) for kw in range(3))

SEL_K = 272              # K of both pool selection matmuls
SEL1_COLS = 4 * WP2      # 72: four padded conv2-input rows per pool1 row-group
SEL2_COLS = 64           # 8x8 pool2 outputs

# Invariants tying the tile constants together (VMEM refs have no runtime bounds check).
assert NQ1 + SHIFTS1[-1] <= XCOLS1                   # conv1 im2col reads stay in-bounds
assert LM1 + WP1 + 1 <= NQ1                          # pool1 shifted slices inside relu1
assert 2 * 15 * WP1 + 2 * 15 < LM1                   # last pool1 source lane inside maxed1
assert 4 * SEL_K == LM1                              # pool1 row-group chunks tile maxed1
assert 3 * 2 * WP1 + 2 * 15 < SEL_K                  # last pool1 source lane inside a chunk
assert (4 * 3 + 1) * WP2 + SEL1_COLS <= XF2_COLS     # last pool1 store stays in-bounds
assert NQ2 + SHIFTS2[-1] <= XF2_COLS                 # conv2 im2col reads stay in-bounds
assert LM2 + WP2 + 1 <= NQ2                          # pool2 shifted slices inside relu2
assert 2 * 7 * WP2 + 2 * 7 < LM2                     # last pool2 source lane inside maxed2
assert LM2 == SEL_K                                  # pool2 matmul K matches


# --------------------------------- kernel ----------------------------------- #

def net_kernel(x_ref, w1_ref, w2_ref, sel_ref, wfc_ref, bfc_ref, o_ref,
               im1_ref, im2_ref, stk_ref, xf2_ref):
    f32, bf16 = jnp.float32, jnp.bfloat16

    # ---- conv1 + bias + ReLU: one (4, 28) @ (28, 1152) lane-dense MXU matmul -------
    for si, s in enumerate(SHIFTS1):                  # im2col rows: 9 taps x 3 channels
        im1_ref[pl.ds(3 * si, 3), :] = x_ref[:, pl.ds(s, NQ1)]
    im1_ref[pl.ds(27, 1), :] = jnp.ones((1, NQ1), f32)        # ones row -> folded bias
    relu1 = jnp.maximum(
        jnp.dot(w1_ref[...], im1_ref[...].astype(bf16),
                preferred_element_type=f32), 0.0)              # (4, 1152) f32

    # ---- maxpool #1: 3 lane-shifted VPU maxes + one (16,272)@(272,72) selection ----
    m1 = jnp.maximum(
        jnp.maximum(relu1[:, 0:LM1], relu1[:, 1:LM1 + 1]),
        jnp.maximum(relu1[:, WP1:WP1 + LM1], relu1[:, WP1 + 1:WP1 + 1 + LM1]))
    for g in range(4):                                # stack 4 output-row groups
        stk_ref[pl.ds(4 * g, 4), :] = m1[:, SEL_K * g:SEL_K * (g + 1)]
    pooled = jnp.dot(stk_ref[...].astype(bf16), sel_ref[:, pl.ds(0, SEL1_COLS)],
                     preferred_element_type=f32)               # (16, 72) f32
    xf2_ref[...] = jnp.zeros_like(xf2_ref)            # zero halo / slack for conv2
    for g in range(4):                                # scatter groups into padded rows
        xf2_ref[:, pl.ds((4 * g + 1) * WP2, SEL1_COLS)] = pooled[4 * g:4 * g + 4, :]

    # ---- conv2 + bias + ReLU: one (8, 37) @ (37, 304) lane-dense MXU matmul --------
    for si, s in enumerate(SHIFTS2):                  # im2col rows: 9 taps x 4 channels
        im2_ref[pl.ds(4 * si, 4), :] = xf2_ref[:, pl.ds(s, NQ2)]
    im2_ref[pl.ds(36, 1), :] = jnp.ones((1, NQ2), f32)
    relu2 = jnp.maximum(
        jnp.dot(w2_ref[...], im2_ref[...].astype(bf16),
                preferred_element_type=f32), 0.0)              # (8, 304) f32

    # ---- maxpool #2: 3 lane-shifted VPU maxes + one (8,272)@(272,64) selection -----
    m2 = jnp.maximum(
        jnp.maximum(relu2[:, 0:LM2], relu2[:, 1:LM2 + 1]),
        jnp.maximum(relu2[:, WP2:WP2 + LM2], relu2[:, WP2 + 1:WP2 + 1 + LM2]))
    p2 = jnp.dot(m2.astype(bf16), sel_ref[:, pl.ds(SEL1_COLS, SEL2_COLS)],
                 preferred_element_type=f32)                   # (8, 64) f32

    # ---- fc on the MXU: out[m] = bfc[m] + sum_c p2[c, :] @ wfc[c, :, m] ------------
    acc = bfc_ref[...]                                         # (1, 128) f32 (padded)
    for c in range(8):
        acc = acc + jnp.dot(p2[c:c + 1, :].astype(bf16), wfc_ref[c],
                            preferred_element_type=f32)        # (1, 128)
    o_ref[...] = acc


# -------------------------------- wrappers ----------------------------------- #

def _pool_select_matrices():
    """Constant 0/1 pool-decimation matrices (built once on the host).

    S1 (272, 72): pool1.  The stacked LHS holds 4 pool output rows (h2 = 4g + r) of
    the shifted-max buffer, each starting at local lane 68*r.  Column j = r*18 + wcol
    selects local lane 68*r + 2*(wcol-1) for wcol in [1, 16]; columns wcol in {0, 17}
    stay zero so the conv2 halo columns remain 0.

    S2 (272, 64): pool2.  Column h3*8 + w3 selects lane 36*h3 + 2*w3.
    """
    s1 = np.zeros((SEL_K, SEL1_COLS), np.float32)
    for r in range(4):
        for w2 in range(16):
            s1[2 * r * WP1 + 2 * w2, r * WP2 + (w2 + 1)] = 1.0
    s2 = np.zeros((SEL_K, SEL2_COLS), np.float32)
    for h3 in range(8):
        for w3 in range(8):
            s2[2 * h3 * WP2 + 2 * w3, 8 * h3 + w3] = 1.0
    return jnp.asarray(np.concatenate([s1, s2], axis=1), dtype=jnp.bfloat16)


def prepare_params(params):
    """One-time parameter layout prep (hoisted out of the jitted forward)."""
    w1, b1, w2, b2, wfc, bfc = params
    # Conv taps as (Cout, (kh*3+kw)*Cin + cin); bias folded in as the last column
    # (it multiplies the im2col ones-row).
    w1m = jnp.transpose(w1, (0, 2, 3, 1)).reshape(4, 27)
    w1m = jnp.concatenate([w1m, b1[:, None]], axis=1).astype(jnp.bfloat16)     # (4, 28)
    w2m = jnp.transpose(w2, (0, 2, 3, 1)).reshape(8, 36)
    w2m = jnp.concatenate([w2m, b2[:, None]], axis=1).astype(jnp.bfloat16)     # (8, 37)
    # fc weights as (channel, h*8+w, out), out padded to a lane-dense 128.
    wfc3 = jnp.transpose(wfc.reshape(10, 8, 64), (1, 2, 0))                    # (8, 64, 10)
    wfc3 = jnp.pad(wfc3, ((0, 0), (0, 0), (0, 118))).astype(jnp.bfloat16)      # (8, 64, 128)
    bfcp = jnp.pad(bfc, (0, 118)).reshape(1, 128).astype(jnp.float32)          # (1, 128)
    return w1m, w2m, _pool_select_matrices(), wfc3, bfcp


def net_forward(x_nchw, prep):
    """Forward pass of `Net`: one fused Pallas kernel call for the whole batch."""
    w1m, w2m, sel, wfc3, bfcp = prep
    n = x_nchw.shape[0]
    # Host-side glue: zero-pad the 1px conv halo, flatten spatial row-major over the
    # padded width (channels stay leading = sublanes), add zero lane slack.
    x = jnp.pad(x_nchw, ((0, 0), (0, 0), (1, 1), (1, 1)))          # (N, 3, 34, 34)
    x = x.reshape(n, 3, WP1 * WP1)
    x = jnp.pad(x, ((0, 0), (0, 0), (0, XCOLS1 - WP1 * WP1)))      # (N, 3, 1280) f32

    out = pl.pallas_call(
        net_kernel,
        out_shape=jax.ShapeDtypeStruct((n, 1, 128), jnp.float32),
        grid=(n,),
        in_specs=[
            pl.BlockSpec((None, 3, XCOLS1), lambda i: (i, 0, 0)),            # per-image input
            pl.BlockSpec((4, 28), lambda i: (0, 0)),                         # conv1 taps+bias
            pl.BlockSpec((8, 37), lambda i: (0, 0)),                         # conv2 taps+bias
            pl.BlockSpec((SEL_K, SEL1_COLS + SEL2_COLS), lambda i: (0, 0)),  # pool selections
            pl.BlockSpec((8, 64, 128), lambda i: (0, 0, 0)),                 # fc weights
            pl.BlockSpec((1, 128), lambda i: (0, 0)),                        # fc bias (padded)
        ],
        out_specs=pl.BlockSpec((None, 1, 128), lambda i: (i, 0, 0)),
        scratch_shapes=[
            pltpu.VMEM((28, NQ1), jnp.float32),       # conv1 im2col (+ ones row)
            pltpu.VMEM((37, NQ2), jnp.float32),       # conv2 im2col (+ ones row)
            pltpu.VMEM((16, SEL_K), jnp.float32),     # stacked pool1 row groups
            pltpu.VMEM((4, XF2_COLS), jnp.float32),   # zero-padded conv2 input
        ],
        compiler_params=pltpu.CompilerParams(
            dimension_semantics=("parallel",)),        # 1 image/step -> both v7x cores busy
    )(x, w1m, w2m, sel, wfc3, bfcp)
    return out.reshape(n, 128)[:, :10]


# ------------------------- reference (plain JAX, f32) ------------------------ #

def net_reference(x, params):
    w1, b1, w2, b2, wfc, bfc = params

    def conv(x, w, b):
        y = jax.lax.conv_general_dilated(
            x, w, window_strides=(1, 1), padding=((1, 1), (1, 1)),
            dimension_numbers=("NCHW", "OIHW", "NCHW"),
            precision=jax.lax.Precision.HIGHEST)
        return y + b[None, :, None, None]

    def pool(x):
        return jax.lax.reduce_window(x, -jnp.inf, jax.lax.max,
                                     (1, 1, 2, 2), (1, 1, 2, 2), "VALID")

    y = pool(jnp.maximum(conv(x, w1, b1), 0.0))
    y = pool(jnp.maximum(conv(y, w2, b2), 0.0))
    y = y.reshape(y.shape[0], -1)
    return jnp.dot(y, wfc.T, precision=jax.lax.Precision.HIGHEST) + bfc


# ----------------------------------- main ------------------------------------ #

def init_params(key):
    ks = jax.random.split(key, 6)
    w1 = 0.10 * jax.random.normal(ks[0], (4, 3, 3, 3), jnp.float32)
    b1 = 0.10 * jax.random.normal(ks[1], (4,), jnp.float32)
    w2 = 0.10 * jax.random.normal(ks[2], (8, 4, 3, 3), jnp.float32)
    b2 = 0.10 * jax.random.normal(ks[3], (8,), jnp.float32)
    wfc = 0.05 * jax.random.normal(ks[4], (10, 8 * 8 * 8), jnp.float32)
    bfc = 0.05 * jax.random.normal(ks[5], (10,), jnp.float32)
    return w1, b1, w2, b2, wfc, bfc


if __name__ == "__main__":
    key = jax.random.PRNGKey(0)
    k_x, k_p = jax.random.split(key)
    params = init_params(k_p)
    prep = prepare_params(params)          # one-time parameter layout prep
    # fc expects 8*8*8 features after two stride-2 pools -> 32x32 spatial input.
    x = jax.random.normal(k_x, (2, 3, 32, 32), jnp.float32)

    out = jax.block_until_ready(jax.jit(net_forward)(x, prep))
    ref = jax.block_until_ready(net_reference(x, params))

    assert out.shape == (2, 10), out.shape
    # bf16 MXU operands with f32 accumulation -> tolerance slightly looser than f32.
    assert jnp.allclose(out, ref, atol=3e-2, rtol=3e-2), \
        f"max abs diff = {jnp.max(jnp.abs(out - ref))}"

    print("KERNEL_OK")
</pallas_src>

<mosaic_0001>
module attributes {stable_mosaic.version = 11 : i64} {
  func.func @net_kernel(%arg0: i32, %arg1: memref<1x3x1280xf32, #tpu.memory_space<vmem>>, %arg2: memref<4x28xbf16, #tpu.memory_space<vmem>>, %arg3: memref<8x37xbf16, #tpu.memory_space<vmem>>, %arg4: memref<272x136xbf16, #tpu.memory_space<vmem>>, %arg5: memref<8x64x128xbf16, #tpu.memory_space<vmem>>, %arg6: memref<1x128xf32, #tpu.memory_space<vmem>>, %arg7: memref<1x1x128xf32, #tpu.memory_space<vmem>>, %arg8: memref<28x1152xf32, #tpu.memory_space<vmem>>, %arg9: memref<37x304xf32, #tpu.memory_space<vmem>>, %arg10: memref<16x272xf32, #tpu.memory_space<vmem>>, %arg11: memref<4x384xf32, #tpu.memory_space<vmem>>) attributes {dimension_semantics = [#tpu.dimension_semantics<parallel>], iteration_bounds = array<i64: 2>, scalar_prefetch = 0 : i64, scratch_operands = 4 : i64, tpu.core_type = #tpu.core_type<tc>, window_params = [{transform_indices = @transform_0, window_bounds = array<i64: 1, 3, 1280>}, {pipeline_mode = #tpu.pipeline_mode<synchronous>, transform_indices = @transform_1, window_bounds = array<i64: 4, 28>}, {pipeline_mode = #tpu.pipeline_mode<synchronous>, transform_indices = @transform_2, window_bounds = array<i64: 8, 37>}, {pipeline_mode = #tpu.pipeline_mode<synchronous>, transform_indices = @transform_3, window_bounds = array<i64: 272, 136>}, {pipeline_mode = #tpu.pipeline_mode<synchronous>, transform_indices = @transform_4, window_bounds = array<i64: 8, 64, 128>}, {pipeline_mode = #tpu.pipeline_mode<synchronous>, transform_indices = @transform_5, window_bounds = array<i64: 1, 128>}, {transform_indices = @transform_6, window_bounds = array<i64: 1, 1, 128>}]} {
    %c0 = arith.constant 0 : index
    %c0_0 = arith.constant 0 : index
    %c0_1 = arith.constant 0 : index
    %0 = vector.load %arg1[%c0, %c0_0, %c0_1] : memref<1x3x1280xf32, #tpu.memory_space<vmem>>, vector<1x3x1152xf32>
    %1 = vector.shape_cast %0 : vector<1x3x1152xf32> to vector<3x1152xf32>
    %c0_2 = arith.constant 0 : index
    %c0_3 = arith.constant 0 : index
    %2 = vector.load %arg8[%c0_2, %c0_3] : memref<28x1152xf32, #tpu.memory_space<vmem>>, vector<3x1152xf32>
    tpu.vector_store %arg8[%c0_2, %c0_3], %1 {strides = array<i32>} : memref<28x1152xf32, #tpu.memory_space<vmem>>, vector<3x1152xf32>,
    %c0_4 = arith.constant 0 : index
    %c0_5 = arith.constant 0 : index
    %c1 = arith.constant 1 : index
    %3 = vector.load %arg1[%c0_4, %c0_5, %c1] : memref<1x3x1280xf32, #tpu.memory_space<vmem>>, vector<1x3x1152xf32>
    %4 = vector.shape_cast %3 : vector<1x3x1152xf32> to vector<3x1152xf32>
    %c3 = arith.constant 3 : index
    %c0_6 = arith.constant 0 : index
    %5 = vector.load %arg8[%c3, %c0_6] : memref<28x1152xf32, #tpu.memory_space<vmem>>, vector<3x1152xf32>
    tpu.vector_store %arg8[%c3, %c0_6], %4 {strides = array<i32>} : memref<28x1152xf32, #tpu.memory_space<vmem>>, vector<3x1152xf32>,
    %c0_7 = arith.constant 0 : index
    %c0_8 = arith.constant 0 : index
    %c2 = arith.constant 2 : index
    %6 = vector.load %arg1[%c0_7, %c0_8, %c2] : memref<1x3x1280xf32, #tpu.memory_space<vmem>>, vector<1x3x1152xf32>
    %7 = vector.shape_cast %6 : vector<1x3x1152xf32> to vector<3x1152xf32>
    %c6 = arith.constant 6 : index
    %c0_9 = arith.constant 0 : index
    %8 = vector.load %arg8[%c6, %c0_9] : memref<28x1152xf32, #tpu.memory_space<vmem>>, vector<3x1152xf32>
    tpu.vector_store %arg8[%c6, %c0_9], %7 {strides = array<i32>} : memref<28x1152xf32, #tpu.memory_space<vmem>>, vector<3x1152xf32>,
    %c0_10 = arith.constant 0 : index
    %c0_11 = arith.constant 0 : index
    %c34 = arith.constant 34 : index
    %9 = vector.load %arg1[%c0_10, %c0_11, %c34] : memref<1x3x1280xf32, #tpu.memory_space<vmem>>, vector<1x3x1152xf32>
    %10 = vector.shape_cast %9 : vector<1x3x1152xf32> to vector<3x1152xf32>
    %c9 = arith.constant 9 : index
    %c0_12 = arith.constant 0 : index
    %11 = vector.load %arg8[%c9, %c0_12] : memref<28x1152xf32, #tpu.memory_space<vmem>>, vector<3x1152xf32>
    tpu.vector_store %arg8[%c9, %c0_12], %10 {strides = array<i32>} : memref<28x1152xf32, #tpu.memory_space<vmem>>, vector<3x1152xf32>,
    %c0_13 = arith.constant 0 : index
    %c0_14 = arith.constant 0 : index
    %c35 = arith.constant 35 : index
    %12 = vector.load %arg1[%c0_13, %c0_14, %c35] : memref<1x3x1280xf32, #tpu.memory_space<vmem>>, vector<1x3x1152xf32>
    %13 = vector.shape_cast %12 : vector<1x3x1152xf32> to vector<3x1152xf32>
    %c12 = arith.constant 12 : index
    %c0_15 = arith.constant 0 : index
    %14 = vector.load %arg8[%c12, %c0_15] : memref<28x1152xf32, #tpu.memory_space<vmem>>, vector<3x1152xf32>
    tpu.vector_store %arg8[%c12, %c0_15], %13 {strides = array<i32>} : memref<28x1152xf32, #tpu.memory_space<vmem>>, vector<3x1152xf32>,
    %c0_16 = arith.constant 0 : index
    %c0_17 = arith.constant 0 : index
    %c36 = arith.constant 36 : index
    %15 = vector.load %arg1[%c0_16, %c0_17, %c36] : memref<1x3x1280xf32, #tpu.memory_space<vmem>>, vector<1x3x1152xf32>
    %16 = vector.shape_cast %15 : vector<1x3x1152xf32> to vector<3x1152xf32>
    %c15 = arith.constant 15 : index
    %c0_18 = arith.constant 0 : index
    %17 = vector.load %arg8[%c15, %c0_18] : memref<28x1152xf32, #tpu.memory_space<vmem>>, vector<3x1152xf32>
    tpu.vector_store %arg8[%c15, %c0_18], %16 {strides = array<i32>} : memref<28x1152xf32, #tpu.memory_space<vmem>>, vector<3x1152xf32>,
    %c0_19 = arith.constant 0 : index
    %c0_20 = arith.constant 0 : index
    %c68 = arith.constant 68 : index
    %18 = vector.load %arg1[%c0_19, %c0_20, %c68] : memref<1x3x1280xf32, #tpu.memory_space<vmem>>, vector<1x3x1152xf32>
    %19 = vector.shape_cast %18 : vector<1x3x1152xf32> to vector<3x1152xf32>
    %c18 = arith.constant 18 : index
    %c0_21 = arith.constant 0 : index
    %20 = vector.load %arg8[%c18, %c0_21] : memref<28x1152xf32, #tpu.memory_space<vmem>>, vector<3x1152xf32>
    tpu.vector_store %arg8[%c18, %c0_21], %19 {strides = array<i32>} : memref<28x1152xf32, #tpu.memory_space<vmem>>, vector<3x1152xf32>,
    %c0_22 = arith.constant 0 : index
    %c0_23 = arith.constant 0 : index
    %c69 = arith.constant 69 : index
    %21 = vector.load %arg1[%c0_22, %c0_23, %c69] : memref<1x3x1280xf32, #tpu.memory_space<vmem>>, vector<1x3x1152xf32>
    %22 = vector.shape_cast %21 : vector<1x3x1152xf32> to vector<3x1152xf32>
    %c21 = arith.constant 21 : index
    %c0_24 = arith.constant 0 : index
    %23 = vector.load %arg8[%c21, %c0_24] : memref<28x1152xf32, #tpu.memory_space<vmem>>, vector<3x1152xf32>
    tpu.vector_store %arg8[%c21, %c0_24], %22 {strides = array<i32>} : memref<28x1152xf32, #tpu.memory_space<vmem>>, vector<3x1152xf32>,
    %c0_25 = arith.constant 0 : index
    %c0_26 = arith.constant 0 : index
    %c70 = arith.constant 70 : index
    %24 = vector.load %arg1[%c0_25, %c0_26, %c70] : memref<1x3x1280xf32, #tpu.memory_space<vmem>>, vector<1x3x1152xf32>
    %25 = vector.shape_cast %24 : vector<1x3x1152xf32> to vector<3x1152xf32>
    %c24 = arith.constant 24 : index
    %c0_27 = arith.constant 0 : index
    %26 = vector.load %arg8[%c24, %c0_27] : memref<28x1152xf32, #tpu.memory_space<vmem>>, vector<3x1152xf32>
    tpu.vector_store %arg8[%c24, %c0_27], %25 {strides = array<i32>} : memref<28x1152xf32, #tpu.memory_space<vmem>>, vector<3x1152xf32>,
    %cst = arith.constant 1.000000e+00 : f32
    %27 = vector.broadcast %cst : f32 to vector<1x1152xf32>
    %c27 = arith.constant 27 : index
    %c0_28 = arith.constant 0 : index
    %28 = vector.load %arg8[%c27, %c0_28] : memref<28x1152xf32, #tpu.memory_space<vmem>>, vector<1x1152xf32>
    tpu.vector_store %arg8[%c27, %c0_28], %27 {strides = array<i32>} : memref<28x1152xf32, #tpu.memory_space<vmem>>, vector<1x1152xf32>,
    %c0_29 = arith.constant 0 : index
    %c0_30 = arith.constant 0 : index
    %29 = vector.load %arg2[%c0_29, %c0_30] : memref<4x28xbf16, #tpu.memory_space<vmem>>, vector<4x28xbf16>
    %c0_31 = arith.constant 0 : index
    %c0_32 = arith.constant 0 : index
    %30 = vector.load %arg8[%c0_31, %c0_32] : memref<28x1152xf32, #tpu.memory_space<vmem>>, vector<28x1152xf32>
    %31 = arith.truncf %30 : vector<28x1152xf32> to vector<28x1152xbf16>
    %cst_33 = arith.constant dense<0.000000e+00> : vector<4x1152xf32>
    %32 = tpu.matmul %29, %31, %cst_33 {dimension_numbers = #tpu.dot_dimension_numbers<[1], [0], [0], [1], [0, 0, 1, 1], [], []>} : vector<4x28xbf16>, vector<28x1152xbf16>, vector<4x1152xf32> -> vector<4x1152xf32>
    %cst_34 = arith.constant 0.000000e+00 : f32
    %33 = vector.broadcast %cst_34 : f32 to vector<4x1152xf32>
    %34 = arith.maximumf %32, %33 : vector<4x1152xf32>
    %35 = vector.extract_strided_slice %34 {offsets = [0, 0], sizes = [4, 1088], strides = [1, 1]} : vector<4x1152xf32> to vector<4x1088xf32>
    %36 = vector.extract_strided_slice %34 {offsets = [0, 1], sizes = [4, 1088], strides = [1, 1]} : vector<4x1152xf32> to vector<4x1088xf32>
    %37 = arith.maximumf %35, %36 : vector<4x1088xf32>
    %38 = vector.extract_strided_slice %34 {offsets = [0, 34], sizes = [4, 1088], strides = [1, 1]} : vector<4x1152xf32> to vector<4x1088xf32>
    %39 = vector.extract_strided_slice %34 {offsets = [0, 35], sizes = [4, 1088], strides = [1, 1]} : vector<4x1152xf32> to vector<4x1088xf32>
    %40 = arith.maximumf %38, %39 : vector<4x1088xf32>
    %41 = arith.maximumf %37, %40 : vector<4x1088xf32>
    %42 = vector.extract_strided_slice %41 {offsets = [0, 0], sizes = [4, 272], strides = [1, 1]} : vector<4x1088xf32> to vector<4x272xf32>
    %c0_35 = arith.constant 0 : index
    %c0_36 = arith.constant 0 : index
    %43 = vector.load %arg10[%c0_35, %c0_36] : memref<16x272xf32, #tpu.memory_space<vmem>>, vector<4x272xf32>
    tpu.vector_store %arg10[%c0_35, %c0_36], %42 {strides = array<i32>} : memref<16x272xf32, #tpu.memory_space<vmem>>, vector<4x272xf32>,
    %44 = vector.extract_strided_slice %41 {offsets = [0, 272], sizes = [4, 272], strides = [1, 1]} : vector<4x1088xf32> to vector<4x272xf32>
    %c4 = arith.constant 4 : index
    %c0_37 = arith.constant 0 : index
    %45 = vector.load %arg10[%c4, %c0_37] : memref<16x272xf32, #tpu.memory_space<vmem>>, vector<4x272xf32>
    tpu.vector_store %arg10[%c4, %c0_37], %44 {strides = array<i32>} : memref<16x272xf32, #tpu.memory_space<vmem>>, vector<4x272xf32>,
    %46 = vector.extract_strided_slice %41 {offsets = [0, 544], sizes = [4, 272], strides = [1, 1]} : vector<4x1088xf32> to vector<4x272xf32>
    %c8 = arith.constant 8 : index
    %c0_38 = arith.constant 0 : index
    %47 = vector.load %arg10[%c8, %c0_38] : memref<16x272xf32, #tpu.memory_space<vmem>>, vector<4x272xf32>
    tpu.vector_store %arg10[%c8, %c0_38], %46 {strides = array<i32>} : memref<16x272xf32, #tpu.memory_space<vmem>>, vector<4x272xf32>,
    %48 = vector.extract_strided_slice %41 {offsets = [0, 816], sizes = [4, 272], strides = [1, 1]} : vector<4x1088xf32> to vector<4x272xf32>
    %c12_39 = arith.constant 12 : index
    %c0_40 = arith.constant 0 : index
    %49 = vector.load %arg10[%c12_39, %c0_40] : memref<16x272xf32, #tpu.memory_space<vmem>>, vector<4x272xf32>
    tpu.vector_store %arg10[%c12_39, %c0_40], %48 {strides = array<i32>} : memref<16x272xf32, #tpu.memory_space<vmem>>, vector<4x272xf32>,
    %c0_41 = arith.constant 0 : index
    %c0_42 = arith.constant 0 : index
    %50 = vector.load %arg10[%c0_41, %c0_42] : memref<16x272xf32, #tpu.memory_space<vmem>>, vector<16x272xf32>
    %51 = arith.truncf %50 : vector<16x272xf32> to vector<16x272xbf16>
    %c0_43 = arith.constant 0 : index
    %c0_44 = arith.constant 0 : index
    %52 = vector.load %arg4[%c0_43, %c0_44] : memref<272x136xbf16, #tpu.memory_space<vmem>>, vector<272x72xbf16>
    %cst_45 = arith.constant dense<0.000000e+00> : vector<16x72xf32>
    %53 = tpu.matmul %51, %52, %cst_45 {dimension_numbers = #tpu.dot_dimension_numbers<[1], [0], [0], [1], [0, 0, 1, 1], [], []>} : vector<16x272xbf16>, vector<272x72xbf16>, vector<16x72xf32> -> vector<16x72xf32>
    %cst_46 = arith.constant 0.000000e+00 : f32
    %54 = vector.broadcast %cst_46 : f32 to vector<4x384xf32>
    %c0_47 = arith.constant 0 : index
    %c0_48 = arith.constant 0 : index
    %55 = vector.load %arg11[%c0_47, %c0_48] : memref<4x384xf32, #tpu.memory_space<vmem>>, vector<4x384xf32>
    tpu.vector_store %arg11[%c0_47, %c0_48], %54 {strides = array<i32>} : memref<4x384xf32, #tpu.memory_space<vmem>>, vector<4x384xf32>,
    %56 = vector.extract_strided_slice %53 {offsets = [0, 0], sizes = [4, 72], strides = [1, 1]} : vector<16x72xf32> to vector<4x72xf32>
    %c0_49 = arith.constant 0 : index
    %c18_50 = arith.constant 18 : index
    %57 = vector.load %arg11[%c0_49, %c18_50] : memref<4x384xf32, #tpu.memory_space<vmem>>, vector<4x72xf32>
    tpu.vector_store %arg11[%c0_49, %c18_50], %56 {strides = array<i32>} : memref<4x384xf32, #tpu.memory_space<vmem>>, vector<4x72xf32>,
    %58 = vector.extract_strided_slice %53 {offsets = [4, 0], sizes = [4, 72], strides = [1, 1]} : vector<16x72xf32> to vector<4x72xf32>
    %c0_51 = arith.constant 0 : index
    %c90 = arith.constant 90 : index
    %59 = vector.load %arg11[%c0_51, %c90] : memref<4x384xf32, #tpu.memory_space<vmem>>, vector<4x72xf32>
    tpu.vector_store %arg11[%c0_51, %c90], %58 {strides = array<i32>} : memref<4x384xf32, #tpu.memory_space<vmem>>, vector<4x72xf32>,
    %60 = vector.extract_strided_slice %53 {offsets = [8, 0], sizes = [4, 72], strides = [1, 1]} : vector<16x72xf32> to vector<4x72xf32>
    %c0_52 = arith.constant 0 : index
    %c162 = arith.constant 162 : index
    %61 = vector.load %arg11[%c0_52, %c162] : memref<4x384xf32, #tpu.memory_space<vmem>>, vector<4x72xf32>
    tpu.vector_store %arg11[%c0_52, %c162], %60 {strides = array<i32>} : memref<4x384xf32, #tpu.memory_space<vmem>>, vector<4x72xf32>,
    %62 = vector.extract_strided_slice %53 {offsets = [12, 0], sizes = [4, 72], strides = [1, 1]} : vector<16x72xf32> to vector<4x72xf32>
    %c0_53 = arith.constant 0 : index
    %c234 = arith.constant 234 : index
    %63 = vector.load %arg11[%c0_53, %c234] : memref<4x384xf32, #tpu.memory_space<vmem>>, vector<4x72xf32>
    tpu.vector_store %arg11[%c0_53, %c234], %62 {strides = array<i32>} : memref<4x384xf32, #tpu.memory_space<vmem>>, vector<4x72xf32>,
    %c0_54 = arith.constant 0 : index
    %c0_55 = arith.constant 0 : index
    %64 = vector.load %arg11[%c0_54, %c0_55] : memref<4x384xf32, #tpu.memory_space<vmem>>, vector<4x304xf32>
    %c0_56 = arith.constant 0 : index
    %c0_57 = arith.constant 0 : index
    %65 = vector.load %arg9[%c0_56, %c0_57] : memref<37x304xf32, #tpu.memory_space<vmem>>, vector<4x304xf32>
    tpu.vector_store %arg9[%c0_56, %c0_57], %64 {strides = array<i32>} : memref<37x304xf32, #tpu.memory_space<vmem>>, vector<4x304xf32>,
    %c0_58 = arith.constant 0 : index
    %c1_59 = arith.constant 1 : index
    %66 = vector.load %arg11[%c0_58, %c1_59] : memref<4x384xf32, #tpu.memory_space<vmem>>, vector<4x304xf32>
    %c4_60 = arith.constant 4 : index
    %c0_61 = arith.constant 0 : index
    %67 = vector.load %arg9[%c4_60, %c0_61] : memref<37x304xf32, #tpu.memory_space<vmem>>, vector<4x304xf32>
    tpu.vector_store %arg9[%c4_60, %c0_61], %66 {strides = array<i32>} : memref<37x304xf32, #tpu.memory_space<vmem>>, vector<4x304xf32>,
    %c0_62 = arith.constant 0 : index
    %c2_63 = arith.constant 2 : index
    %68 = vector.load %arg11[%c0_62, %c2_63] : memref<4x384xf32, #tpu.memory_space<vmem>>, vector<4x304xf32>
    %c8_64 = arith.constant 8 : index
    %c0_65 = arith.constant 0 : index
    %69 = vector.load %arg9[%c8_64, %c0_65] : memref<37x304xf32, #tpu.memory_space<vmem>>, vector<4x304xf32>
    tpu.vector_store %arg9[%c8_64, %c0_65], %68 {strides = array<i32>} : memref<37x304xf32, #tpu.memory_space<vmem>>, vector<4x304xf32>,
    %c0_66 = arith.constant 0 : index
    %c18_67 = arith.constant 18 : index
    %70 = vector.load %arg11[%c0_66, %c18_67] : memref<4x384xf32, #tpu.memory_space<vmem>>, vector<4x304xf32>
    %c12_68 = arith.constant 12 : index
    %c0_69 = arith.constant 0 : index
    %71 = vector.load %arg9[%c12_68, %c0_69] : memref<37x304xf32, #tpu.memory_space<vmem>>, vector<4x304xf32>
    tpu.vector_store %arg9[%c12_68, %c0_69], %70 {strides = array<i32>} : memref<37x304xf32, #tpu.memory_space<vmem>>, vector<4x304xf32>,
    %c0_70 = arith.constant 0 : index
    %c19 = arith.constant 19 : index
    %72 = vector.load %arg11[%c0_70, %c19] : memref<4x384xf32, #tpu.memory_space<vmem>>, vector<4x304xf32>
    %c16 = arith.constant 16 : index
    %c0_71 = arith.constant 0 : index
    %73 = vector.load %arg9[%c16, %c0_71] : memref<37x304xf32, #tpu.memory_space<vmem>>, vector<4x304xf32>
    tpu.vector_store %arg9[%c16, %c0_71], %72 {strides = array<i32>} : memref<37x304xf32, #tpu.memory_space<vmem>>, vector<4x304xf32>,
    %c0_72 = arith.constant 0 : index
    %c20 = arith.constant 20 : index
    %74 = vector.load %arg11[%c0_72, %c20] : memref<4x384xf32, #tpu.memory_space<vmem>>, vector<4x304xf32>
    %c20_73 = arith.constant 20 : index
    %c0_74 = arith.constant 0 : index
    %75 = vector.load %arg9[%c20_73, %c0_74] : memref<37x304xf32, #tpu.memory_space<vmem>>, vector<4x304xf32>
    tpu.vector_store %arg9[%c20_73, %c0_74], %74 {strides = array<i32>} : memref<37x304xf32, #tpu.memory_space<vmem>>, vector<4x304xf32>,
    %c0_75 = arith.constant 0 : index
    %c36_76 = arith.constant 36 : index
    %76 = vector.load %arg11[%c0_75, %c36_76] : memref<4x384xf32, #tpu.memory_space<vmem>>, vector<4x304xf32>
    %c24_77 = arith.constant 24 : index
    %c0_78 = arith.constant 0 : index
    %77 = vector.load %arg9[%c24_77, %c0_78] : memref<37x304xf32, #tpu.memory_space<vmem>>, vector<4x304xf32>
    tpu.vector_store %arg9[%c24_77, %c0_78], %76 {strides = array<i32>} : memref<37x304xf32, #tpu.memory_space<vmem>>, vector<4x304xf32>,
    %c0_79 = arith.constant 0 : index
    %c37 = arith.constant 37 : index
    %78 = vector.load %arg11[%c0_79, %c37] : memref<4x384xf32, #tpu.memory_space<vmem>>, vector<4x304xf32>
    %c28 = arith.constant 28 : index
    %c0_80 = arith.constant 0 : index
    %79 = vector.load %arg9[%c28, %c0_80] : memref<37x304xf32, #tpu.memory_space<vmem>>, vector<4x304xf32>
    tpu.vector_store %arg9[%c28, %c0_80], %78 {strides = array<i32>} : memref<37x304xf32, #tpu.memory_space<vmem>>, vector<4x304xf32>,
    %c0_81 = arith.constant 0 : index
    %c38 = arith.constant 38 : index
    %80 = vector.load %arg11[%c0_81, %c38] : memref<4x384xf32, #tpu.memory_space<vmem>>, vector<4x304xf32>
    %c32 = arith.constant 32 : index
    %c0_82 = arith.constant 0 : index
    %81 = vector.load %arg9[%c32, %c0_82] : memref<37x304xf32, #tpu.memory_space<vmem>>, vector<4x304xf32>
    tpu.vector_store %arg9[%c32, %c0_82], %80 {strides = array<i32>} : memref<37x304xf32, #tpu.memory_space<vmem>>, vector<4x304xf32>,
    %cst_83 = arith.constant 1.000000e+00 : f32
    %82 = vector.broadcast %cst_83 : f32 to vector<1x304xf32>
    %c36_84 = arith.constant 36 : index
    %c0_85 = arith.constant 0 : index
    %83 = vector.load %arg9[%c36_84, %c0_85] : memref<37x304xf32, #tpu.memory_space<vmem>>, vector<1x304xf32>
    tpu.vector_store %arg9[%c36_84, %c0_85], %82 {strides = array<i32>} : memref<37x304xf32, #tpu.memory_space<vmem>>, vector<1x304xf32>,
    %c0_86 = arith.constant 0 : index
    %c0_87 = arith.constant 0 : index
    %84 = vector.load %arg3[%c0_86, %c0_87] : memref<8x37xbf16, #tpu.memory_space<vmem>>, vector<8x37xbf16>
    %c0_88 = arith.constant 0 : index
    %c0_89 = arith.constant 0 : index
    %85 = vector.load %arg9[%c0_88, %c0_89] : memref<37x304xf32, #tpu.memory_space<vmem>>, vector<37x304xf32>
    %86 = arith.truncf %85 : vector<37x304xf32> to vector<37x304xbf16>
    %cst_90 = arith.constant dense<0.000000e+00> : vector<8x304xf32>
    %87 = tpu.matmul %84, %86, %cst_90 {dimension_numbers = #tpu.dot_dimension_numbers<[1], [0], [0], [1], [0, 0, 1, 1], [], []>} : vector<8x37xbf16>, vector<37x304xbf16>, vector<8x304xf32> -> vector<8x304xf32>
    %cst_91 = arith.constant 0.000000e+00 : f32
    %88 = vector.broadcast %cst_91 : f32 to vector<8x304xf32>
    %89 = arith.maximumf %87, %88 : vector<8x304xf32>
    %90 = vector.extract_strided_slice %89 {offsets = [0, 0], sizes = [8, 272], strides = [1, 1]} : vector<8x304xf32> to vector<8x272xf32>
    %91 = vector.extract_strided_slice %89 {offsets = [0, 1], sizes = [8, 272], strides = [1, 1]} : vector<8x304xf32> to vector<8x272xf32>
    %92 = arith.maximumf %90, %91 : vector<8x272xf32>
    %93 = vector.extract_strided_slice %89 {offsets = [0, 18], sizes = [8, 272], strides = [1, 1]} : vector<8x304xf32> to vector<8x272xf32>
    %94 = vector.extract_strided_slice %89 {offsets = [0, 19], sizes = [8, 272], strides = [1, 1]} : vector<8x304xf32> to vector<8x272xf32>
    %95 = arith.maximumf %93, %94 : vector<8x272xf32>
    %96 = arith.maximumf %92, %95 : vector<8x272xf32>
    %97 = arith.truncf %96 : vector<8x272xf32> to vector<8x272xbf16>
    %c0_92 = arith.constant 0 : index
    %c72 = arith.constant 72 : index
    %98 = vector.load %arg4[%c0_92, %c72] : memref<272x136xbf16, #tpu.memory_space<vmem>>, vector<272x64xbf16>
    %cst_93 = arith.constant dense<0.000000e+00> : vector<8x64xf32>
    %99 = tpu.matmul %97, %98, %cst_93 {dimension_numbers = #tpu.dot_dimension_numbers<[1], [0], [0], [1], [0, 0, 1, 1], [], []>} : vector<8x272xbf16>, vector<272x64xbf16>, vector<8x64xf32> -> vector<8x64xf32>
    %c0_94 = arith.constant 0 : index
    %c0_95 = arith.constant 0 : index
    %100 = vector.load %arg6[%c0_94, %c0_95] : memref<1x128xf32, #tpu.memory_space<vmem>>, vector<1x128xf32>
    %101 = vector.extract_strided_slice %99 {offsets = [0, 0], sizes = [1, 64], strides = [1, 1]} : vector<8x64xf32> to vector<1x64xf32>
    %102 = arith.truncf %101 : vector<1x64xf32> to vector<1x64xbf16>
    %c0_96 = arith.constant 0 : index
    %c0_97 = arith.constant 0 : index
    %c0_98 = arith.constant 0 : index
    %103 = vector.load %arg5[%c0_96, %c0_97, %c0_98] : memref<8x64x128xbf16, #tpu.memory_space<vmem>>, vector<1x64x128xbf16>
    %104 = vector.shape_cast %103 : vector<1x64x128xbf16> to vector<64x128xbf16>
    %cst_99 = arith.constant dense<0.000000e+00> : vector<1x128xf32>
    %105 = tpu.matmul %102, %104, %cst_99 {dimension_numbers = #tpu.dot_dimension_numbers<[1], [0], [0], [1], [0, 0, 1, 1], [], []>} : vector<1x64xbf16>, vector<64x128xbf16>, vector<1x128xf32> -> vector<1x128xf32>
    %106 = arith.addf %100, %105 : vector<1x128xf32>
    %107 = vector.extract_strided_slice %99 {offsets = [1, 0], sizes = [1, 64], strides = [1, 1]} : vector<8x64xf32> to vector<1x64xf32>
    %108 = arith.truncf %107 : vector<1x64xf32> to vector<1x64xbf16>
    %c1_100 = arith.constant 1 : index
    %c0_101 = arith.constant 0 : index
    %c0_102 = arith.constant 0 : index
    %109 = vector.load %arg5[%c1_100, %c0_101, %c0_102] : memref<8x64x128xbf16, #tpu.memory_space<vmem>>, vector<1x64x128xbf16>
    %110 = vector.shape_cast %109 : vector<1x64x128xbf16> to vector<64x128xbf16>
    %cst_103 = arith.constant dense<0.000000e+00> : vector<1x128xf32>
    %111 = tpu.matmul %108, %110, %cst_103 {dimension_numbers = #tpu.dot_dimension_numbers<[1], [0], [0], [1], [0, 0, 1, 1], [], []>} : vector<1x64xbf16>, vector<64x128xbf16>, vector<1x128xf32> -> vector<1x128xf32>
    %112 = arith.addf %106, %111 : vector<1x128xf32>
    %113 = vector.extract_strided_slice %99 {offsets = [2, 0], sizes = [1, 64], strides = [1, 1]} : vector<8x64xf32> to vector<1x64xf32>
    %114 = arith.truncf %113 : vector<1x64xf32> to vector<1x64xbf16>
    %c2_104 = arith.constant 2 : index
    %c0_105 = arith.constant 0 : index
    %c0_106 = arith.constant 0 : index
    %115 = vector.load %arg5[%c2_104, %c0_105, %c0_106] : memref<8x64x128xbf16, #tpu.memory_space<vmem>>, vector<1x64x128xbf16>
    %116 = vector.shape_cast %115 : vector<1x64x128xbf16> to vector<64x128xbf16>
    %cst_107 = arith.constant dense<0.000000e+00> : vector<1x128xf32>
    %117 = tpu.matmul %114, %116, %cst_107 {dimension_numbers = #tpu.dot_dimension_numbers<[1], [0], [0], [1], [0, 0, 1, 1], [], []>} : vector<1x64xbf16>, vector<64x128xbf16>, vector<1x128xf32> -> vector<1x128xf32>
    %118 = arith.addf %112, %117 : vector<1x128xf32>
    %119 = vector.extract_strided_slice %99 {offsets = [3, 0], sizes = [1, 64], strides = [1, 1]} : vector<8x64xf32> to vector<1x64xf32>
    %120 = arith.truncf %119 : vector<1x64xf32> to vector<1x64xbf16>
    %c3_108 = arith.constant 3 : index
    %c0_109 = arith.constant 0 : index
    %c0_110 = arith.constant 0 : index
    %121 = vector.load %arg5[%c3_108, %c0_109, %c0_110] : memref<8x64x128xbf16, #tpu.memory_space<vmem>>, vector<1x64x128xbf16>
    %122 = vector.shape_cast %121 : vector<1x64x128xbf16> to vector<64x128xbf16>
    %cst_111 = arith.constant dense<0.000000e+00> : vector<1x128xf32>
    %123 = tpu.matmul %120, %122, %cst_111 {dimension_numbers = #tpu.dot_dimension_numbers<[1], [0], [0], [1], [0, 0, 1, 1], [], []>} : vector<1x64xbf16>, vector<64x128xbf16>, vector<1x128xf32> -> vector<1x128xf32>
    %124 = arith.addf %118, %123 : vector<1x128xf32>
    %125 = vector.extract_strided_slice %99 {offsets = [4, 0], sizes = [1, 64], strides = [1, 1]} : vector<8x64xf32> to vector<1x64xf32>
    %126 = arith.truncf %125 : vector<1x64xf32> to vector<1x64xbf16>
    %c4_112 = arith.constant 4 : index
    %c0_113 = arith.constant 0 : index
    %c0_114 = arith.constant 0 : index
    %127 = vector.load %arg5[%c4_112, %c0_113, %c0_114] : memref<8x64x128xbf16, #tpu.memory_space<vmem>>, vector<1x64x128xbf16>
    %128 = vector.shape_cast %127 : vector<1x64x128xbf16> to vector<64x128xbf16>
    %cst_115 = arith.constant dense<0.000000e+00> : vector<1x128xf32>
    %129 = tpu.matmul %126, %128, %cst_115 {dimension_numbers = #tpu.dot_dimension_numbers<[1], [0], [0], [1], [0, 0, 1, 1], [], []>} : vector<1x64xbf16>, vector<64x128xbf16>, vector<1x128xf32> -> vector<1x128xf32>
    %130 = arith.addf %124, %129 : vector<1x128xf32>
    %131 = vector.extract_strided_slice %99 {offsets = [5, 0], sizes = [1, 64], strides = [1, 1]} : vector<8x64xf32> to vector<1x64xf32>
    %132 = arith.truncf %131 : vector<1x64xf32> to vector<1x64xbf16>
    %c5 = arith.constant 5 : index
    %c0_116 = arith.constant 0 : index
    %c0_117 = arith.constant 0 : index
    %133 = vector.load %arg5[%c5, %c0_116, %c0_117] : memref<8x64x128xbf16, #tpu.memory_space<vmem>>, vector<1x64x128xbf16>
    %134 = vector.shape_cast %133 : vector<1x64x128xbf16> to vector<64x128xbf16>
    %cst_118 = arith.constant dense<0.000000e+00> : vector<1x128xf32>
    %135 = tpu.matmul %132, %134, %cst_118 {dimension_numbers = #tpu.dot_dimension_numbers<[1], [0], [0], [1], [0, 0, 1, 1], [], []>} : vector<1x64xbf16>, vector<64x128xbf16>, vector<1x128xf32> -> vector<1x128xf32>
    %136 = arith.addf %130, %135 : vector<1x128xf32>
    %137 = vector.extract_strided_slice %99 {offsets = [6, 0], sizes = [1, 64], strides = [1, 1]} : vector<8x64xf32> to vector<1x64xf32>
    %138 = arith.truncf %137 : vector<1x64xf32> to vector<1x64xbf16>
    %c6_119 = arith.constant 6 : index
    %c0_120 = arith.constant 0 : index
    %c0_121 = arith.constant 0 : index
    %139 = vector.load %arg5[%c6_119, %c0_120, %c0_121] : memref<8x64x128xbf16, #tpu.memory_space<vmem>>, vector<1x64x128xbf16>
    %140 = vector.shape_cast %139 : vector<1x64x128xbf16> to vector<64x128xbf16>
    %cst_122 = arith.constant dense<0.000000e+00> : vector<1x128xf32>
    %141 = tpu.matmul %138, %140, %cst_122 {dimension_numbers = #tpu.dot_dimension_numbers<[1], [0], [0], [1], [0, 0, 1, 1], [], []>} : vector<1x64xbf16>, vector<64x128xbf16>, vector<1x128xf32> -> vector<1x128xf32>
    %142 = arith.addf %136, %141 : vector<1x128xf32>
    %143 = vector.extract_strided_slice %99 {offsets = [7, 0], sizes = [1, 64], strides = [1, 1]} : vector<8x64xf32> to vector<1x64xf32>
    %144 = arith.truncf %143 : vector<1x64xf32> to vector<1x64xbf16>
    %c7 = arith.constant 7 : index
    %c0_123 = arith.constant 0 : index
    %c0_124 = arith.constant 0 : index
    %145 = vector.load %arg5[%c7, %c0_123, %c0_124] : memref<8x64x128xbf16, #tpu.memory_space<vmem>>, vector<1x64x128xbf16>
    %146 = vector.shape_cast %145 : vector<1x64x128xbf16> to vector<64x128xbf16>
    %cst_125 = arith.constant dense<0.000000e+00> : vector<1x128xf32>
    %147 = tpu.matmul %144, %146, %cst_125 {dimension_numbers = #tpu.dot_dimension_numbers<[1], [0], [0], [1], [0, 0, 1, 1], [], []>} : vector<1x64xbf16>, vector<64x128xbf16>, vector<1x128xf32> -> vector<1x128xf32>
    %148 = arith.addf %142, %147 : vector<1x128xf32>
    %c0_126 = arith.constant 0 : index
    %c0_127 = arith.constant 0 : index
    %c0_128 = arith.constant 0 : index
    %149 = vector.load %arg7[%c0_126, %c0_127, %c0_128] : memref<1x1x128xf32, #tpu.memory_space<vmem>>, vector<1x1x128xf32>
    %150 = vector.shape_cast %149 : vector<1x1x128xf32> to vector<1x128xf32>
    %151 = vector.shape_cast %148 : vector<1x128xf32> to vector<1x1x128xf32>
    tpu.vector_store %arg7[%c0_126, %c0_127, %c0_128], %151 {strides = array<i32>} : memref<1x1x128xf32, #tpu.memory_space<vmem>>, vector<1x1x128xf32>,
    return
  }
  func.func @transform_0(%arg0: i32) -> (i32, i32, i32) {
    %c0_i32 = arith.constant 0 : i32
    %c0_i32_0 = arith.constant 0 : i32
    %c0_i32_1 = arith.constant 0 : i32
    return %arg0, %c0_i32, %c0_i32_0 : i32, i32, i32
  }
  func.func @transform_1(%arg0: i32) -> (i32, i32) {
    %c0_i32 = arith.constant 0 : i32
    %c0_i32_0 = arith.constant 0 : i32
    %c0_i32_1 = arith.constant 0 : i32
    return %c0_i32, %c0_i32_0 : i32, i32
  }
  func.func @transform_2(%arg0: i32) -> (i32, i32) {
    %c0_i32 = arith.constant 0 : i32
    %c0_i32_0 = arith.constant 0 : i32
    %c0_i32_1 = arith.constant 0 : i32
    return %c0_i32, %c0_i32_0 : i32, i32
  }
  func.func @transform_3(%arg0: i32) -> (i32, i32) {
    %c0_i32 = arith.constant 0 : i32
    %c0_i32_0 = arith.constant 0 : i32
    %c0_i32_1 = arith.constant 0 : i32
    return %c0_i32, %c0_i32_0 : i32, i32
  }
  func.func @transform_4(%arg0: i32) -> (i32, i32, i32) {
    %c0_i32 = arith.constant 0 : i32
    %c0_i32_0 = arith.constant 0 : i32
    %c0_i32_1 = arith.constant 0 : i32
    %c0_i32_2 = arith.constant 0 : i32
    return %c0_i32, %c0_i32_0, %c0_i32_1 : i32, i32, i32
  }
  func.func @transform_5(%arg0: i32) -> (i32, i32) {
    %c0_i32 = arith.constant 0 : i32
    %c0_i32_0 = arith.constant 0 : i32
    %c0_i32_1 = arith.constant 0 : i32
    return %c0_i32, %c0_i32_0 : i32, i32
  }
  func.func @transform_6(%arg0: i32) -> (i32, i32, i32) {
    %c0_i32 = arith.constant 0 : i32
    %c0_i32_0 = arith.constant 0 : i32
    %c0_i32_1 = arith.constant 0 : i32
    return %arg0, %c0_i32, %c0_i32_0 : i32, i32, i32
  }
}

</mosaic_0001>

<llo_original>
// kernel: net_forward.1
$region0: #{net_forward.1}
  #allocation0 [shape = 'u32[]', space=smem, size = 0x4, offset = 0x4, fixed_abs, tag = 'smem constant byte address 0x4 - core index']
  #allocation1 [shape = 'u32[72,128]{1,0:T(1,128)}', space=vmem, size = 0x9000, scoped, tag = 'internal scratch']
  #allocation2 [shape = 'f32[28,1152]{1,0:T(8,128)}', space=vmem, size = 0x24000, scoped, tag = 'scratch operand']
  #allocation3 [shape = 'f32[37,304]{1,0:T(8,128)}', space=vmem, size = 0xf000, scoped, tag = 'scratch operand']
  #allocation4 [shape = 'f32[16,272]{1,0:T(8,128)}', space=vmem, size = 0x6000, scoped, tag = 'scratch operand']
  #allocation5 [shape = 'f32[4,384]{1,0:T(4,128)}', space=vmem, size = 0x1800, scoped, tag = 'scratch operand']
  %s0 = inlined_call_operand.vmem [shape: f32[2,3,1280], index: 0, kind: input, shape index: {}]
  %s1 = inlined_call_operand.vmem [shape: bf16[4,28], index: 1, kind: input, shape index: {}]
  %s2 = inlined_call_operand.vmem [shape: bf16[8,37], index: 2, kind: input, shape index: {}]
  %s3 = inlined_call_operand.vmem [shape: bf16[272,136], index: 3, kind: input, shape index: {}]
  %s4 = inlined_call_operand.vmem [shape: bf16[8,64,128], index: 4, kind: input, shape index: {}]
  %s5 = inlined_call_operand.vmem [shape: f32[1,128], index: 5, kind: input, shape index: {}]
  %s6 = inlined_call_operand.hbm [shape: f32[2,1,128], index: 6, kind: output, shape index: {}]
  %s7 = sld [smem:[#allocation0]]
  $region57: #{net_forward.1} parent=0
    _
  %s9 = ssub.s32 1, %s7
  %s10 = scalar_select 0, %s9, %s7
  $region1: #{net_forward.1} parent=0
    #allocation6 [shape = 'u8[1024]{0}', space=vmem, size = 0x400, scoped, tag = 'output window, operand 0']
    #allocation7 [shape = 's32[2]{0}', space=sflag, size = 0x8, scoped, tag = 'scoped memory for net_forward.1']
    %11 = vsyncpa [#allocation7], 0
    %s12 = scalar_lea.sflag [#allocation7], 1
    %13 = vsyncpa %s12, 0
    loop: start=0, step=1, limit=4
    $region2: #{net_forward.1} parent=1 // loop_pre_header
      _
    $region3: #{net_forward.1} parent=1 // loop_header
      %s15 = sphi 0, %s19
      %p16 = scmp.ge.s32.totalorder %s15, 4
      %s25 = sphi 0, %s27
      %s28 = sphi 0, %s25
      %s29 = sphi 0, %s28
      %s45 = sphi 0, %s29
      %s49 = sphi 0, %s49
      %s51 = sphi 0, %s49
      %s52 = sphi 0, %s51
      %s66 = sphi 0, %s52
      %s70 = sphi 0, %s70
      %s72 = sphi 0, %s70
      %s73 = sphi 0, %s72
      %s87 = sphi 0, %s73
      %s91 = sphi 0, %s91
      %s93 = sphi 0, %s91
      %s94 = sphi 0, %s93
      %s108 = sphi 0, %s94
      %s112 = sphi 0, %s112
      %s114 = sphi 0, %s112
      %s115 = sphi 0, %s114
      %s129 = sphi 0, %s115
      %s133 = sphi 0, %s133
      %s135 = sphi 0, %s133
      %s136 = sphi 0, %s135
      %s150 = sphi 0, %s136
      %s156 = sphi 0, %s158
      %s159 = sphi 0, %s156
      %s160 = sphi 0, %s159
      %s176 = sphi 0, %s160
    $region4: #{net_forward.1} parent=1 // loop_header_branch
      %18 = sbr.rel (%p16) target = $region8
    $region5: #{net_forward.1} parent=1 // loop_body
      %s20 = ssub.s32 %s15, 1
      %s21 = ssub.s32 %s15, 2
      %s22 = sadd.s32 %s15, 1
      %s23 = ssub.s32 %s15, %s22
      %p24 = scmp.eq.s32.totalorder %s23, 0
      %s26 = sadd.s32 %s25, 1
      %s27 = scalar_select %p24, %s25, %s26
      %p30 = pneg %p24
      %p31 = scmp.eq.s32.totalorder %s15, 1
      %p32 = por %p30, %p31
      %p33 = scmp.ne.s32.totalorder %s25, %s28
      %p34 = scmp.eq.s32.totalorder %s15, 0
      %p35 = por %p33, %p34
      %p36 = scmp.ne.s32.totalorder %s25, %s28
      %p37 = scmp.eq.s32.totalorder %s20, 1
      %p38 = por %p36, %p37
      %p39 = scmp.ne.s32.totalorder %s28, %s29
      %p40 = scmp.eq.s32.totalorder %s20, 0
      %p41 = por %p39, %p40
      %p42 = scmp.ne.s32.totalorder %s28, %s29
      %p43 = scmp.eq.s32.totalorder %s21, 1
      %p44 = por %p42, %p43
      %p46 = scmp.ne.s32.totalorder %s29, %s45
      %p47 = scmp.eq.s32.totalorder %s21, 0
      %p48 = por %p46, %p47
      %s50 = sadd.s32 %s49, 1
      %p53 = scmp.eq.s32.totalorder %s15, 1
      %p54 = scmp.ne.s32.totalorder %s49, %s51
      %p55 = scmp.eq.s32.totalorder %s15, 0
      %p56 = por %p54, %p55
      %p57 = scmp.ne.s32.totalorder %s49, %s51
      %p58 = scmp.eq.s32.totalorder %s20, 1
      %p59 = por %p57, %p58
      %p60 = scmp.ne.s32.totalorder %s51, %s52
      %p61 = scmp.eq.s32.totalorder %s20, 0
      %p62 = por %p60, %p61
      %p63 = scmp.ne.s32.totalorder %s51, %s52
      %p64 = scmp.eq.s32.totalorder %s21, 1
      %p65 = por %p63, %p64
      %p67 = scmp.ne.s32.totalorder %s52, %s66
      %p68 = scmp.eq.s32.totalorder %s21, 0
      %p69 = por %p67, %p68
      %s71 = sadd.s32 %s70, 1
      %p74 = scmp.eq.s32.totalorder %s15, 1
      %p75 = scmp.ne.s32.totalorder %s70, %s72
      %p76 = scmp.eq.s32.totalorder %s15, 0
      %p77 = por %p75, %p76
      %p78 = scmp.ne.s32.totalorder %s70, %s72
      %p79 = scmp.eq.s32.totalorder %s20, 1
      %p80 = por %p78, %p79
      %p81 = scmp.ne.s32.totalorder %s72, %s73
      %p82 = scmp.eq.s32.totalorder %s20, 0
      %p83 = por %p81, %p82
      %p84 = scmp.ne.s32.totalorder %s72, %s73
      %p85 = scmp.eq.s32.totalorder %s21, 1
      %p86 = por %p84, %p85
      %p88 = scmp.ne.s32.totalorder %s73, %s87
      %p89 = scmp.eq.s32.totalorder %s21, 0
      %p90 = por %p88, %p89
      %s92 = sadd.s32 %s91, 1
      %p95 = scmp.eq.s32.totalorder %s15, 1
      %p96 = scmp.ne.s32.totalorder %s91, %s93
      %p97 = scmp.eq.s32.totalorder %s15, 0
      %p98 = por %p96, %p97
      %p99 = scmp.ne.s32.totalorder %s91, %s93
      %p100 = scmp.eq.s32.totalorder %s20, 1
      %p101 = por %p99, %p100
      %p102 = scmp.ne.s32.totalorder %s93, %s94
      %p103 = scmp.eq.s32.totalorder %s20, 0
      %p104 = por %p102, %p103
      %p105 = scmp.ne.s32.totalorder %s93, %s94
      %p106 = scmp.eq.s32.totalorder %s21, 1
      %p107 = por %p105, %p106
      %p109 = scmp.ne.s32.totalorder %s94, %s108
      %p110 = scmp.eq.s32.totalorder %s21, 0
      %p111 = por %p109, %p110
      %s113 = sadd.s32 %s112, 1
      %p116 = scmp.eq.s32.totalorder %s15, 1
      %p117 = scmp.ne.s32.totalorder %s112, %s114
      %p118 = scmp.eq.s32.totalorder %s15, 0
      %p119 = por %p117, %p118
      %p120 = scmp.ne.s32.totalorder %s112, %s114
      %p121 = scmp.eq.s32.totalorder %s20, 1
      %p122 = por %p120, %p121
      %p123 = scmp.ne.s32.totalorder %s114, %s115
      %p124 = scmp.eq.s32.totalorder %s20, 0
      %p125 = por %p123, %p124
      %p126 = scmp.ne.s32.totalorder %s114, %s115
      %p127 = scmp.eq.s32.totalorder %s21, 1
      %p128 = por %p126, %p127
      %p130 = scmp.ne.s32.totalorder %s115, %s129
      %p131 = scmp.eq.s32.totalorder %s21, 0
      %p132 = por %p130, %p131
      %s134 = sadd.s32 %s133, 1
      %p137 = scmp.eq.s32.totalorder %s15, 1
      %p138 = scmp.ne.s32.totalorder %s133, %s135
      %p139 = scmp.eq.s32.totalorder %s15, 0
      %p140 = por %p138, %p139
      %p141 = scmp.ne.s32.totalorder %s133, %s135
      %p142 = scmp.eq.s32.totalorder %s20, 1
      %p143 = por %p141, %p142
      %p144 = scmp.ne.s32.totalorder %s135, %s136
      %p145 = scmp.eq.s32.totalorder %s20, 0
      %p146 = por %p144, %p145
      %p147 = scmp.ne.s32.totalorder %s135, %s136
      %p148 = scmp.eq.s32.totalorder %s21, 1
      %p149 = por %p147, %p148
      %p151 = scmp.ne.s32.totalorder %s136, %s150
      %p152 = scmp.eq.s32.totalorder %s21, 0
      %p153 = por %p151, %p152
      %s154 = ssub.s32 %s15, %s22
      %p155 = scmp.eq.s32.totalorder %s154, 0
      %s157 = sadd.s32 %s156, 1
      %s158 = scalar_select %p155, %s156, %s157
      %p161 = pneg %p155
      %p162 = scmp.eq.s32.totalorder %s15, 1
      %p163 = por %p161, %p162
      %p164 = scmp.ne.s32.totalorder %s156, %s159
      %p165 = scmp.eq.s32.totalorder %s15, 0
      %p166 = por %p164, %p165
      %p167 = scmp.ne.s32.totalorder %s156, %s159
      %p168 = scmp.eq.s32.totalorder %s20, 1
      %p169 = por %p167, %p168
      %p170 = scmp.ne.s32.totalorder %s159, %s160
      %p171 = scmp.eq.s32.totalorder %s20, 0
      %p172 = por %p170, %p171
      %p173 = scmp.ne.s32.totalorder %s159, %s160
      %p174 = scmp.eq.s32.totalorder %s21, 1
      %p175 = por %p173, %p174
      %p177 = scmp.ne.s32.totalorder %s160, %s176
      %p178 = scmp.eq.s32.totalorder %s21, 0
      %p179 = por %p177, %p178
      %p180 = scmp.le.s32.totalorder 1, %s15
      %p181 = scmp.lt.s32.totalorder %s15, 3
      %p182 = pnand %p180, %p181
      %p183 = pneg %p182
      // Predicated region
      $region9: #{net_forward.1} parent=5 // pred_check
        _
      $region10: #{net_forward.1} parent=5 // pred_check_branch
        %185 = sbr.rel (%p182) target = $region12
      $region11: #{net_forward.1} parent=5 // pred_region
        %s186 = ssub.s32 %s15, 1
        // Predicated region
        $region13: #{net_forward.1} parent=11 // pred_check
          %p187 = pneg %p62
        $region14: #{net_forward.1} parent=11 // pred_check_branch
          %189 = sbr.rel (%p187) target = $region16
        $region15: #{net_forward.1} parent=11 // pred_region
          _
        $region16: #{net_forward.1} parent=11 // pred_fallthru
          _
        // Predicated region
        $region17: #{net_forward.1} parent=11 // pred_check
          %p190 = pneg %p83
        $region18: #{net_forward.1} parent=11 // pred_check_branch
          %192 = sbr.rel (%p190) target = $region20
        $region19: #{net_forward.1} parent=11 // pred_region
          _
        $region20: #{net_forward.1} parent=11 // pred_fallthru
          _
        // Predicated region
        $region21: #{net_forward.1} parent=11 // pred_check
          %p193 = pneg %p104
        $region22: #{net_forward.1} parent=11 // pred_check_branch
          %195 = sbr.rel (%p193) target = $region24
        $region23: #{net_forward.1} parent=11 // pred_region
          _
        $region24: #{net_forward.1} parent=11 // pred_fallthru
          _
        // Predicated region
        $region25: #{net_forward.1} parent=11 // pred_check
          %p196 = pneg %p125
        $region26: #{net_forward.1} parent=11 // pred_check_branch
          %198 = sbr.rel (%p196) target = $region28
        $region27: #{net_forward.1} parent=11 // pred_region
          _
        $region28: #{net_forward.1} parent=11 // pred_fallthru
          _
        // Predicated region
        $region29: #{net_forward.1} parent=11 // pred_check
          %p199 = pneg %p146
        $region30: #{net_forward.1} parent=11 // pred_check_branch
          %201 = sbr.rel (%p199) target = $region32
        $region31: #{net_forward.1} parent=11 // pred_region
          _
        $region32: #{net_forward.1} parent=11 // pred_fallthru
          _
      $region12: #{net_forward.1} parent=5 // pred_fallthru
        _
      %p202 = scmp.lt.s32.totalorder %s15, 2
      // Predicated region
      $region33: #{net_forward.1} parent=5 // pred_check
        %p203 = pneg %p202
      $region34: #{net_forward.1} parent=5 // pred_check_branch
        %205 = sbr.rel (%p203) target = $region36
      $region35: #{net_forward.1} parent=5 // pred_region
        // Predicated region
        $region37: #{net_forward.1} parent=35 // pred_check
          %p206 = pneg %p35
        $region38: #{net_forward.1} parent=35 // pred_check_branch
          %208 = sbr.rel (%p206) target = $region40
        $region39: #{net_forward.1} parent=35 // pred_region
          %p209 = scmp.lt.s32.totalorder %s15, 1
          %s210 = scalar_select %p209, %s15, 1
          %s211 = smul.addr %s210, 10
          %s212 = smul.addr %s211, 4
          %s213 = scalar_lea.vmem %s0, %s212
        $region40: #{net_forward.1} parent=35 // pred_fallthru
          _
      $region36: #{net_forward.1} parent=5 // pred_fallthru
        _
      %p214 = scmp.le.s32.totalorder 1, %s15
      %p215 = scmp.lt.s32.totalorder %s15, 3
      %p216 = pnand %p214, %p215
      %p217 = pneg %p216
      // Predicated region
      $region41: #{net_forward.1} parent=5 // pred_check
        _
      $region42: #{net_forward.1} parent=5 // pred_check_branch
        %219 = sbr.rel (%p216) target = $region44
      $region43: #{net_forward.1} parent=5 // pred_region
        %s220 = ssub.s32 %s15, 1
        %p221 = scmp.lt.s32.totalorder %s20, 1
        %s222 = scalar_select %p221, %s20, 1
        %s223 = smul.addr %s222, 10
        %s224 = smul.addr %s223, 4
        %s225 = scalar_lea.vmem %s0, %s224
        %p226 = pneg %p41
        %p227 = pneg %p38
        %p228 = pneg %p62
        %p229 = pneg %p59
        %p230 = pneg %p83
        %p231 = pneg %p80
        %p232 = pneg %p104
        %p233 = pneg %p101
        %p234 = pneg %p125
        %p235 = pneg %p122
        %p236 = pneg %p146
        %p237 = pneg %p143
        %p238 = pneg %p172
        %p239 = pneg %p169
        %s240 = sand.u32 %s159, 1
        %s241 = scalar_lea.sflag [#allocation7], %s240
        %s242 = sand.u32 %s159, 1
        %s243 = scalar_lea.vmem [#allocation6], %s242
        %p244 = scmp.lt.s32.totalorder %s20, 1
        %s245 = scalar_select %p244, %s20, 1
        %s246 = smul.addr %s245, 10
        %s247 = smul.addr %s246, 4
        %s248 = scalar_lea.vmem %s0, %s247
        %v250 = vld [vmem:[%s248] sm:$0x77]
        %v251 = vld [vmem:[%s248 + $0x8] sm:$0x77]
        %v252 = vld [vmem:[%s248 + $0x10] sm:$0x77]
        %v253 = vld [vmem:[%s248 + $0x18] sm:$0x77]
        %v254 = vld [vmem:[%s248 + $0x20] sm:$0x7]
        %260 = vst [vmem:[#allocation1] ss:$2 sm:$0xff] %v250
        %s261 = scalar_lea.vmem [#allocation1], 16
        %262 = vst [vmem:[%s261] ss:$2 sm:$0xff] %v251
        %s263 = scalar_lea.vmem [#allocation1], 32
        %264 = vst [vmem:[%s263] ss:$2 sm:$0xff] %v252
        %s265 = scalar_lea.vmem [#allocation1], 48
        %266 = vst [vmem:[%s265] ss:$2 sm:$0xff] %v253
        %v267 = vld.sshfl [vmem:[#allocation1] sm:$0xff pattern:$0x75316420]
        %v268 = vld.sshfl [vmem:[#allocation1 + $0x8] sm:$0xff pattern:$0x75316420]
        %v269 = vld.sshfl [vmem:[#allocation1 + $0x10] sm:$0xff pattern:$0x75316420]
        %v270 = vld.sshfl [vmem:[#allocation1 + $0x18] sm:$0xff pattern:$0x75316420]
        %v271 = vld.sshfl [vmem:[#allocation1 + $0x20] sm:$0xff pattern:$0x75316420]
        %v272 = vld.sshfl [vmem:[#allocation1 + $0x28] sm:$0xff pattern:$0x75316420]
        %v273 = vld.sshfl [vmem:[#allocation1 + $0x30] sm:$0xff pattern:$0x75316420]
        %v274 = vld.sshfl [vmem:[#allocation1 + $0x38] sm:$0xff pattern:$0x75316420]
        %275 = vst [vmem:[#allocation1] ss:$2 sm:$0xff] %v254
        %v276 = vld.sshfl [vmem:[#allocation1] sm:$0xff pattern:$0x75316420]
        %286 = vst [vmem:[#allocation2] sm:$0x7] %v267
        %287 = vst [vmem:[#allocation2 + $0x8] sm:$0x7] %v268
        %288 = vst [vmem:[#allocation2 + $0x10] sm:$0x7] %v269
        %289 = vst [vmem:[#allocation2 + $0x18] sm:$0x7] %v270
        %290 = vst [vmem:[#allocation2 + $0x20] sm:$0x7] %v271
        %291 = vst [vmem:[#allocation2 + $0x28] sm:$0x7] %v272
        %292 = vst [vmem:[#allocation2 + $0x30] sm:$0x7] %v273
        %293 = vst [vmem:[#allocation2 + $0x38] sm:$0x7] %v274
        %294 = vst [vmem:[#allocation2 + $0x40] sm:$0x7] %v276
        %v295 = vld [vmem:[%s248] sm:$0x77]
        %v296 = vld [vmem:[%s248 + $0x8] sm:$0x77]
        %v297 = vld [vmem:[%s248 + $0x10] sm:$0x77]
        %v298 = vld [vmem:[%s248 + $0x18] sm:$0x77]
        %v299 = vld [vmem:[%s248 + $0x20] sm:$0x77]
        %305 = vst [vmem:[#allocation1] ss:$2 sm:$0xff] %v295
        %s306 = scalar_lea.vmem [#allocation1], 16
        %307 = vst [vmem:[%s306] ss:$2 sm:$0xff] %v296
        %s308 = scalar_lea.vmem [#allocation1], 32
        %309 = vst [vmem:[%s308] ss:$2 sm:$0xff] %v297
        %s310 = scalar_lea.vmem [#allocation1], 48
        %311 = vst [vmem:[%s310] ss:$2 sm:$0xff] %v298
        %v312 = vld.sshfl [vmem:[#allocation1] sm:$0xff pattern:$0x75316420]
        %v313 = vld.sshfl [vmem:[#allocation1 + $0x8] sm:$0xff pattern:$0x75316420]
        %v314 = vld.sshfl [vmem:[#allocation1 + $0x10] sm:$0xff pattern:$0x75316420]
        %v315 = vld.sshfl [vmem:[#allocation1 + $0x18] sm:$0xff pattern:$0x75316420]
        %v316 = vld.sshfl [vmem:[#allocation1 + $0x20] sm:$0xff pattern:$0x75316420]
        %v317 = vld.sshfl [vmem:[#allocation1 + $0x28] sm:$0xff pattern:$0x75316420]
        %v318 = vld.sshfl [vmem:[#allocation1 + $0x30] sm:$0xff pattern:$0x75316420]
        %v319 = vld.sshfl [vmem:[#allocation1 + $0x38] sm:$0xff pattern:$0x75316420]
        %320 = vst [vmem:[#allocation1] ss:$2 sm:$0xff] %v299
        %v321 = vld.sshfl [vmem:[#allocation1] sm:$0xff pattern:$0x75316420]
        %v322 = vld.sshfl [vmem:[#allocation1 + $0x8] sm:$0xff pattern:$0x75316420]
        %v323 = vrot.slane %v312, 5
        %v324 = vrot.slane %v313, 5
        %v325 = vrot.slane %v314, 5
        %v326 = vrot.slane %v315, 5
        %v327 = vrot.slane %v316, 5
        %v328 = vrot.slane %v317, 5
        %v329 = vrot.slane %v318, 5
        %v330 = vrot.slane %v319, 5
        %v331 = vrot.slane %v321, 5
        %v332 = vrot.slane %v322, 5
        %333 = vrot.lane.b32.xlu0 %v323, 127
        %v334 = vpop.permute.xlu0 %333
        %335 = vrot.lane.b32.xlu0 %v324, 127
        %v336 = vpop.permute.xlu0 %335
        %337 = vrot.lane.b32.xlu0 %v325, 127
        %v338 = vpop.permute.xlu0 %337
        %339 = vrot.lane.b32.xlu0 %v326, 127
        %v340 = vpop.permute.xlu0 %339
        %341 = vrot.lane.b32.xlu0 %v327, 127
        %v342 = vpop.permute.xlu0 %341
        %343 = vrot.lane.b32.xlu0 %v328, 127
        %v344 = vpop.permute.xlu0 %343
        %345 = vrot.lane.b32.xlu0 %v329, 127
        %v346 = vpop.permute.xlu0 %345
        %347 = vrot.lane.b32.xlu0 %v330, 127
        %v348 = vpop.permute.xlu0 %347
        %349 = vrot.lane.b32.xlu0 %v331, 127
        %v350 = vpop.permute.xlu0 %349
        %351 = vrot.lane.b32.xlu0 %v332, 127
        %v352 = vpop.permute.xlu0 %351
        %vm353 = vcmask 1039360
        %v354 = vsel %vm353, %v334, %v336
        %v355 = vsel %vm353, %v336, %v338
        %v356 = vsel %vm353, %v338, %v340
        %v357 = vsel %vm353, %v340, %v342
        %v358 = vsel %vm353, %v342, %v344
        %v359 = vsel %vm353, %v344, %v346
        %v360 = vsel %vm353, %v346, %v348
        %v361 = vsel %vm353, %v348, %v350
        %v362 = vsel %vm353, %v350, %v352
        %372 = vst [vmem:[#allocation2] sm:$0x38] %v354
        %373 = vst [vmem:[#allocation2 + $0x8] sm:$0x38] %v355
        %374 = vst [vmem:[#allocation2 + $0x10] sm:$0x38] %v356
        %375 = vst [vmem:[#allocation2 + $0x18] sm:$0x38] %v357
        %376 = vst [vmem:[#allocation2 + $0x20] sm:$0x38] %v358
        %377 = vst [vmem:[#allocation2 + $0x28] sm:$0x38] %v359
        %378 = vst [vmem:[#allocation2 + $0x30] sm:$0x38] %v360
        %379 = vst [vmem:[#allocation2 + $0x38] sm:$0x38] %v361
        %380 = vst [vmem:[#allocation2 + $0x40] sm:$0x38] %v362
        %v381 = vld [vmem:[%s248] sm:$0x77]
        %v382 = vld [vmem:[%s248 + $0x8] sm:$0x77]
        %v383 = vld [vmem:[%s248 + $0x10] sm:$0x77]
        %v384 = vld [vmem:[%s248 + $0x18] sm:$0x77]
        %v385 = vld [vmem:[%s248 + $0x20] sm:$0x77]
        %391 = vst [vmem:[#allocation1] ss:$2 sm:$0xff] %v381
        %s392 = scalar_lea.vmem [#allocation1], 16
        %393 = vst [vmem:[%s392] ss:$2 sm:$0xff] %v382
        %s394 = scalar_lea.vmem [#allocation1], 32
        %395 = vst [vmem:[%s394] ss:$2 sm:$0xff] %v383
        %s396 = scalar_lea.vmem [#allocation1], 48
        %397 = vst [vmem:[%s396] ss:$2 sm:$0xff] %v384
        %v398 = vld.sshfl [vmem:[#allocation1] sm:$0xff pattern:$0x75316420]
        %v399 = vld.sshfl [vmem:[#allocation1 + $0x8] sm:$0xff pattern:$0x75316420]
        %v400 = vld.sshfl [vmem:[#allocation1 + $0x10] sm:$0xff pattern:$0x75316420]
        %v401 = vld.sshfl [vmem:[#allocation1 + $0x18] sm:$0xff pattern:$0x75316420]
        %v402 = vld.sshfl [vmem:[#allocation1 + $0x20] sm:$0xff pattern:$0x75316420]
        %v403 = vld.sshfl [vmem:[#allocation1 + $0x28] sm:$0xff pattern:$0x75316420]
        %v404 = vld.sshfl [vmem:[#allocation1 + $0x30] sm:$0xff pattern:$0x75316420]
        %v405 = vld.sshfl [vmem:[#allocation1 + $0x38] sm:$0xff pattern:$0x75316420]
        %406 = vst [vmem:[#allocation1] ss:$2 sm:$0xff] %v385
        %v407 = vld.sshfl [vmem:[#allocation1] sm:$0xff pattern:$0x75316420]
        %v408 = vld.sshfl [vmem:[#allocation1 + $0x8] sm:$0xff pattern:$0x75316420]
        %v409 = vrot.slane %v398, 2
        %v410 = vrot.slane %v399, 2
        %v411 = vrot.slane %v400, 2
        %v412 = vrot.slane %v401, 2
        %v413 = vrot.slane %v402, 2
        %v414 = vrot.slane %v403, 2
        %v415 = vrot.slane %v404, 2
        %v416 = vrot.slane %v405, 2
        %v417 = vrot.slane %v407, 2
        %v418 = vrot.slane %v408, 2
        %419 = vrot.lane.b32.xlu0 %v409, 126
        %v420 = vpop.permute.xlu0 %419
        %421 = vrot.lane.b32.xlu0 %v410, 126
        %v422 = vpop.permute.xlu0 %421
        %423 = vrot.lane.b32.xlu0 %v411, 126
        %v424 = vpop.permute.xlu0 %423
        %425 = vrot.lane.b32.xlu0 %v412, 126
        %v426 = vpop.permute.xlu0 %425
        %427 = vrot.lane.b32.xlu0 %v413, 126
        %v428 = vpop.permute.xlu0 %427
        %429 = vrot.lane.b32.xlu0 %v414, 126
        %v430 = vpop.permute.xlu0 %429
        %431 = vrot.lane.b32.xlu0 %v415, 126
        %v432 = vpop.permute.xlu0 %431
        %433 = vrot.lane.b32.xlu0 %v416, 126
        %v434 = vpop.permute.xlu0 %433
        %435 = vrot.lane.b32.xlu0 %v417, 126
        %v436 = vpop.permute.xlu0 %435
        %437 = vrot.lane.b32.xlu0 %v418, 126
        %v438 = vpop.permute.xlu0 %437
        %vm439 = vcmask 1031168
        %v440 = vsel %vm439, %v420, %v422
        %v441 = vsel %vm439, %v422, %v424
        %v442 = vsel %vm439, %v424, %v426
        %v443 = vsel %vm439, %v426, %v428
        %v444 = vsel %vm439, %v428, %v430
        %v445 = vsel %vm439, %v430, %v432
        %v446 = vsel %vm439, %v432, %v434
        %v447 = vsel %vm439, %v434, %v436
        %v448 = vsel %vm439, %v436, %v438
        %458 = vst [vmem:[#allocation2] sm:$0xc0] %v440
        %459 = vst [vmem:[#allocation2 + $0x8] sm:$0xc0] %v441
        %460 = vst [vmem:[#allocation2 + $0x10] sm:$0xc0] %v442
        %461 = vst [vmem:[#allocation2 + $0x18] sm:$0xc0] %v443
        %462 = vst [vmem:[#allocation2 + $0x20] sm:$0xc0] %v444
        %463 = vst [vmem:[#allocation2 + $0x28] sm:$0xc0] %v445
        %464 = vst [vmem:[#allocation2 + $0x30] sm:$0xc0] %v446
        %465 = vst [vmem:[#allocation2 + $0x38] sm:$0xc0] %v447
        %466 = vst [vmem:[#allocation2 + $0x40] sm:$0xc0] %v448
        %467 = vst [vmem:[#allocation2 + $0x48] sm:$0x1] %v440
        %468 = vst [vmem:[#allocation2 + $0x50] sm:$0x1] %v441
        %469 = vst [vmem:[#allocation2 + $0x58] sm:$0x1] %v442
        %470 = vst [vmem:[#allocation2 + $0x60] sm:$0x1] %v443
        %471 = vst [vmem:[#allocation2 + $0x68] sm:$0x1] %v444
        %472 = vst [vmem:[#allocation2 + $0x70] sm:$0x1] %v445
        %473 = vst [vmem:[#allocation2 + $0x78] sm:$0x1] %v446
        %474 = vst [vmem:[#allocation2 + $0x80] sm:$0x1] %v447
        %475 = vst [vmem:[#allocation2 + $0x88] sm:$0x1] %v448
        %v476 = vld [vmem:[%s248] sm:$0x77]
        %v477 = vld [vmem:[%s248 + $0x8] sm:$0x77]
        %v478 = vld [vmem:[%s248 + $0x10] sm:$0x77]
        %v479 = vld [vmem:[%s248 + $0x18] sm:$0x77]
        %v480 = vld [vmem:[%s248 + $0x20] sm:$0x77]
        %486 = vst [vmem:[#allocation1] ss:$2 sm:$0xff] %v476
        %s487 = scalar_lea.vmem [#allocation1], 16
        %488 = vst [vmem:[%s487] ss:$2 sm:$0xff] %v477
        %s489 = scalar_lea.vmem [#allocation1], 32
        %490 = vst [vmem:[%s489] ss:$2 sm:$0xff] %v478
        %s491 = scalar_lea.vmem [#allocation1], 48
        %492 = vst [vmem:[%s491] ss:$2 sm:$0xff] %v479
        %v493 = vld.sshfl [vmem:[#allocation1] sm:$0xff pattern:$0x75316420]
        %v494 = vld.sshfl [vmem:[#allocation1 + $0x8] sm:$0xff pattern:$0x75316420]
        %v495 = vld.sshfl [vmem:[#allocation1 + $0x10] sm:$0xff pattern:$0x75316420]
        %v496 = vld.sshfl [vmem:[#allocation1 + $0x18] sm:$0xff pattern:$0x75316420]
        %v497 = vld.sshfl [vmem:[#allocation1 + $0x20] sm:$0xff pattern:$0x75316420]
        %v498 = vld.sshfl [vmem:[#allocation1 + $0x28] sm:$0xff pattern:$0x75316420]
        %v499 = vld.sshfl [vmem:[#allocation1 + $0x30] sm:$0xff pattern:$0x75316420]
        %v500 = vld.sshfl [vmem:[#allocation1 + $0x38] sm:$0xff pattern:$0x75316420]
        %501 = vst [vmem:[#allocation1] ss:$2 sm:$0xff] %v480
        %v502 = vld.sshfl [vmem:[#allocation1] sm:$0xff pattern:$0x75316420]
        %v503 = vld.sshfl [vmem:[#allocation1 + $0x8] sm:$0xff pattern:$0x75316420]
        %v504 = vrot.slane %v493, 7
        %v505 = vrot.slane %v494, 7
        %v506 = vrot.slane %v495, 7
        %v507 = vrot.slane %v496, 7
        %v508 = vrot.slane %v497, 7
        %v509 = vrot.slane %v498, 7
        %v510 = vrot.slane %v499, 7
        %v511 = vrot.slane %v500, 7
        %v512 = vrot.slane %v502, 7
        %v513 = vrot.slane %v503, 7
        %514 = vrot.lane.b32.xlu0 %v504, 94
        %v515 = vpop.permute.xlu0 %514
        %516 = vrot.lane.b32.xlu0 %v505, 94
        %v517 = vpop.permute.xlu0 %516
        %518 = vrot.lane.b32.xlu0 %v506, 94
        %v519 = vpop.permute.xlu0 %518
        %520 = vrot.lane.b32.xlu0 %v507, 94
        %v521 = vpop.permute.xlu0 %520
        %522 = vrot.lane.b32.xlu0 %v508, 94
        %v523 = vpop.permute.xlu0 %522
        %524 = vrot.lane.b32.xlu0 %v509, 94
        %v525 = vpop.permute.xlu0 %524
        %526 = vrot.lane.b32.xlu0 %v510, 94
        %v527 = vpop.permute.xlu0 %526
        %528 = vrot.lane.b32.xlu0 %v511, 94
        %v529 = vpop.permute.xlu0 %528
        %530 = vrot.lane.b32.xlu0 %v512, 94
        %v531 = vpop.permute.xlu0 %530
        %532 = vrot.lane.b32.xlu0 %v513, 94
        %v533 = vpop.permute.xlu0 %532
        %vm534 = vcmask 769024
        %v535 = vsel %vm534, %v515, %v517
        %v536 = vsel %vm534, %v517, %v519
        %v537 = vsel %vm534, %v519, %v521
        %v538 = vsel %vm534, %v521, %v523
        %v539 = vsel %vm534, %v523, %v525
        %v540 = vsel %vm534, %v525, %v527
        %v541 = vsel %vm534, %v527, %v529
        %v542 = vsel %vm534, %v529, %v531
        %v543 = vsel %vm534, %v531, %v533
        %553 = vst [vmem:[#allocation2 + $0x48] sm:$0xe] %v535
        %554 = vst [vmem:[#allocation2 + $0x50] sm:$0xe] %v536
        %555 = vst [vmem:[#allocation2 + $0x58] sm:$0xe] %v537
        %556 = vst [vmem:[#allocation2 + $0x60] sm:$0xe] %v538
        %557 = vst [vmem:[#allocation2 + $0x68] sm:$0xe] %v539
        %558 = vst [vmem:[#allocation2 + $0x70] sm:$0xe] %v540
        %559 = vst [vmem:[#allocation2 + $0x78] sm:$0xe] %v541
        %560 = vst [vmem:[#allocation2 + $0x80] sm:$0xe] %v542
        %561 = vst [vmem:[#allocation2 + $0x88] sm:$0xe] %v543
        %v562 = vld [vmem:[%s248] sm:$0x77]
        %v563 = vld [vmem:[%s248 + $0x8] sm:$0x77]
        %v564 = vld [vmem:[%s248 + $0x10] sm:$0x77]
        %v565 = vld [vmem:[%s248 + $0x18] sm:$0x77]
        %v566 = vld [vmem:[%s248 + $0x20] sm:$0x77]
        %s572 = scalar_lea.vmem [#allocation1], 1
        %573 = vst [vmem:[%s572] ss:$2 sm:$0xff] %v562
        %s574 = scalar_lea.vmem [#allocation1], 17
        %575 = vst [vmem:[%s574] ss:$2 sm:$0xff] %v563
        %s576 = scalar_lea.vmem [#allocation1], 33
        %577 = vst [vmem:[%s576] ss:$2 sm:$0xff] %v564
        %s578 = scalar_lea.vmem [#allocation1], 49
        %579 = vst [vmem:[%s578] ss:$2 sm:$0xff] %v565
        %v580 = vld.sshfl [vmem:[#allocation1] sm:$0xff pattern:$0x75316420]
        %v581 = vld.sshfl [vmem:[#allocation1 + $0x8] sm:$0xff pattern:$0x75316420]
        %v582 = vld.sshfl [vmem:[#allocation1 + $0x10] sm:$0xff pattern:$0x75316420]
        %v583 = vld.sshfl [vmem:[#allocation1 + $0x18] sm:$0xff pattern:$0x75316420]
        %v584 = vld.sshfl [vmem:[#allocation1 + $0x20] sm:$0xff pattern:$0x75316420]
        %v585 = vld.sshfl [vmem:[#allocation1 + $0x28] sm:$0xff pattern:$0x75316420]
        %v586 = vld.sshfl [vmem:[#allocation1 + $0x30] sm:$0xff pattern:$0x75316420]
        %v587 = vld.sshfl [vmem:[#allocation1 + $0x38] sm:$0xff pattern:$0x75316420]
        %588 = vst [vmem:[%s572] ss:$2 sm:$0xff] %v566
        %v589 = vld.sshfl [vmem:[#allocation1] sm:$0xff pattern:$0x75316420]
        %v590 = vld.sshfl [vmem:[#allocation1 + $0x8] sm:$0xff pattern:$0x75316420]
        %591 = vrot.lane.b32.xlu0 %v580, 93
        %v592 = vpop.permute.xlu0 %591
        %593 = vrot.lane.b32.xlu0 %v581, 93
        %v594 = vpop.permute.xlu0 %593
        %595 = vrot.lane.b32.xlu0 %v582, 93
        %v596 = vpop.permute.xlu0 %595
        %597 = vrot.lane.b32.xlu0 %v583, 93
        %v598 = vpop.permute.xlu0 %597
        %599 = vrot.lane.b32.xlu0 %v584, 93
        %v600 = vpop.permute.xlu0 %599
        %601 = vrot.lane.b32.xlu0 %v585, 93
        %v602 = vpop.permute.xlu0 %601
        %603 = vrot.lane.b32.xlu0 %v586, 93
        %v604 = vpop.permute.xlu0 %603
        %605 = vrot.lane.b32.xlu0 %v587, 93
        %v606 = vpop.permute.xlu0 %605
        %607 = vrot.lane.b32.xlu0 %v589, 93
        %v608 = vpop.permute.xlu0 %607
        %609 = vrot.lane.b32.xlu0 %v590, 93
        %v610 = vpop.permute.xlu0 %609
        %vm611 = vcmask 760832
        %v612 = vsel %vm611, %v592, %v594
        %v613 = vsel %vm611, %v594, %v596
        %v614 = vsel %vm611, %v596, %v598
        %v615 = vsel %vm611, %v598, %v600
        %v616 = vsel %vm611, %v600, %v602
        %v617 = vsel %vm611, %v602, %v604
        %v618 = vsel %vm611, %v604, %v606
        %v619 = vsel %vm611, %v606, %v608
        %v620 = vsel %vm611, %v608, %v610
        %630 = vst [vmem:[#allocation2 + $0x48] sm:$0x70] %v612
        %631 = vst [vmem:[#allocation2 + $0x50] sm:$0x70] %v613
        %632 = vst [vmem:[#allocation2 + $0x58] sm:$0x70] %v614
        %633 = vst [vmem:[#allocation2 + $0x60] sm:$0x70] %v615
        %634 = vst [vmem:[#allocation2 + $0x68] sm:$0x70] %v616
        %635 = vst [vmem:[#allocation2 + $0x70] sm:$0x70] %v617
        %636 = vst [vmem:[#allocation2 + $0x78] sm:$0x70] %v618
        %637 = vst [vmem:[#allocation2 + $0x80] sm:$0x70] %v619
        %638 = vst [vmem:[#allocation2 + $0x88] sm:$0x70] %v620
        %v639 = vld [vmem:[%s248] sm:$0x77]
        %v640 = vld [vmem:[%s248 + $0x8] sm:$0x77]
        %v641 = vld [vmem:[%s248 + $0x10] sm:$0x77]
        %v642 = vld [vmem:[%s248 + $0x18] sm:$0x77]
        %v643 = vld [vmem:[%s248 + $0x20] sm:$0x77]
        %649 = vst [vmem:[#allocation1] ss:$2 sm:$0xff] %v639
        %s650 = scalar_lea.vmem [#allocation1], 16
        %651 = vst [vmem:[%s650] ss:$2 sm:$0xff] %v640
        %s652 = scalar_lea.vmem [#allocation1], 32
        %653 = vst [vmem:[%s652] ss:$2 sm:$0xff] %v641
        %s654 = scalar_lea.vmem [#allocation1], 48
        %655 = vst [vmem:[%s654] ss:$2 sm:$0xff] %v642
        %v656 = vld.sshfl [vmem:[#allocation1] sm:$0xff pattern:$0x75316420]
        %v657 = vld.sshfl [vmem:[#allocation1 + $0x8] sm:$0xff pattern:$0x75316420]
        %v658 = vld.sshfl [vmem:[#allocation1 + $0x10] sm:$0xff pattern:$0x75316420]
        %v659 = vld.sshfl [vmem:[#allocation1 + $0x18] sm:$0xff pattern:$0x75316420]
        %v660 = vld.sshfl [vmem:[#allocation1 + $0x20] sm:$0xff pattern:$0x75316420]
        %v661 = vld.sshfl [vmem:[#allocation1 + $0x28] sm:$0xff pattern:$0x75316420]
        %v662 = vld.sshfl [vmem:[#allocation1 + $0x30] sm:$0xff pattern:$0x75316420]
        %v663 = vld.sshfl [vmem:[#allocation1 + $0x38] sm:$0xff pattern:$0x75316420]
        %664 = vst [vmem:[#allocation1] ss:$2 sm:$0xff] %v643
        %v665 = vld.sshfl [vmem:[#allocation1] sm:$0xff pattern:$0x75316420]
        %v666 = vld.sshfl [vmem:[#allocation1 + $0x8] sm:$0xff pattern:$0x75316420]
        %v667 = vrot.slane %v656, 1
        %v668 = vrot.slane %v657, 1
        %v669 = vrot.slane %v658, 1
        %v670 = vrot.slane %v659, 1
        %v671 = vrot.slane %v660, 1
        %v672 = vrot.slane %v661, 1
        %v673 = vrot.slane %v662, 1
        %v674 = vrot.slane %v663, 1
        %v675 = vrot.slane %v665, 1
        %v676 = vrot.slane %v666, 1
        %677 = vrot.lane.b32.xlu0 %v667, 92
        %v678 = vpop.permute.xlu0 %677
        %679 = vrot.lane.b32.xlu0 %v668, 92
        %v680 = vpop.permute.xlu0 %679
        %681 = vrot.lane.b32.xlu0 %v669, 92
        %v682 = vpop.permute.xlu0 %681
        %683 = vrot.lane.b32.xlu0 %v670, 92
        %v684 = vpop.permute.xlu0 %683
        %685 = vrot.lane.b32.xlu0 %v671, 92
        %v686 = vpop.permute.xlu0 %685
        %687 = vrot.lane.b32.xlu0 %v672, 92
        %v688 = vpop.permute.xlu0 %687
        %689 = vrot.lane.b32.xlu0 %v673, 92
        %v690 = vpop.permute.xlu0 %689
        %691 = vrot.lane.b32.xlu0 %v674, 92
        %v692 = vpop.permute.xlu0 %691
        %693 = vrot.lane.b32.xlu0 %v675, 92
        %v694 = vpop.permute.xlu0 %693
        %695 = vrot.lane.b32.xlu0 %v676, 92
        %v696 = vpop.permute.xlu0 %695
        %vm697 = vcmask 752640
        %v698 = vsel %vm697, %v678, %v680
        %v699 = vsel %vm697, %v680, %v682
        %v700 = vsel %vm697, %v682, %v684
        %v701 = vsel %vm697, %v684, %v686
        %v702 = vsel %vm697, %v686, %v688
        %v703 = vsel %vm697, %v688, %v690
        %v704 = vsel %vm697, %v690, %v692
        %v705 = vsel %vm697, %v692, %v694
        %v706 = vsel %vm697, %v694, %v696
        %716 = vst [vmem:[#allocation2 + $0x48] sm:$0x80] %v698
        %717 = vst [vmem:[#allocation2 + $0x50] sm:$0x80] %v699
        %718 = vst [vmem:[#allocation2 + $0x58] sm:$0x80] %v700
        %719 = vst [vmem:[#allocation2 + $0x60] sm:$0x80] %v701
        %720 = vst [vmem:[#allocation2 + $0x68] sm:$0x80] %v702
        %721 = vst [vmem:[#allocation2 + $0x70] sm:$0x80] %v703
        %722 = vst [vmem:[#allocation2 + $0x78] sm:$0x80] %v704
        %723 = vst [vmem:[#allocation2 + $0x80] sm:$0x80] %v705
        %724 = vst [vmem:[#allocation2 + $0x88] sm:$0x80] %v706
        %725 = vst [vmem:[#allocation2 + $0x90] sm:$0x3] %v698
        %726 = vst [vmem:[#allocation2 + $0x98] sm:$0x3] %v699
        %727 = vst [vmem:[#allocation2 + $0xa0] sm:$0x3] %v700
        %728 = vst [vmem:[#allocation2 + $0xa8] sm:$0x3] %v701
        %729 = vst [vmem:[#allocation2 + $0xb0] sm:$0x3] %v702
        %730 = vst [vmem:[#allocation2 + $0xb8] sm:$0x3] %v703
        %731 = vst [vmem:[#allocation2 + $0xc0] sm:$0x3] %v704
        %732 = vst [vmem:[#allocation2 + $0xc8] sm:$0x3] %v705
        %733 = vst [vmem:[#allocation2 + $0xd0] sm:$0x3] %v706
        %v734 = vld [vmem:[%s248] sm:$0x77]
        %v735 = vld [vmem:[%s248 + $0x8] sm:$0x77]
        %v736 = vld [vmem:[%s248 + $0x10] sm:$0x77]
        %v737 = vld [vmem:[%s248 + $0x18] sm:$0x77]
        %v738 = vld [vmem:[%s248 + $0x20] sm:$0x77]
        %744 = vst [vmem:[#allocation1] ss:$2 sm:$0xff] %v734
        %s745 = scalar_lea.vmem [#allocation1], 16
        %746 = vst [vmem:[%s745] ss:$2 sm:$0xff] %v735
        %s747 = scalar_lea.vmem [#allocation1], 32
        %748 = vst [vmem:[%s747] ss:$2 sm:$0xff] %v736
        %s749 = scalar_lea.vmem [#allocation1], 48
        %750 = vst [vmem:[%s749] ss:$2 sm:$0xff] %v737
        %v751 = vld.sshfl [vmem:[#allocation1] sm:$0xff pattern:$0x75316420]
        %v752 = vld.sshfl [vmem:[#allocation1 + $0x8] sm:$0xff pattern:$0x75316420]
        %v753 = vld.sshfl [vmem:[#allocation1 + $0x10] sm:$0xff pattern:$0x75316420]
        %v754 = vld.sshfl [vmem:[#allocation1 + $0x18] sm:$0xff pattern:$0x75316420]
        %v755 = vld.sshfl [vmem:[#allocation1 + $0x20] sm:$0xff pattern:$0x75316420]
        %v756 = vld.sshfl [vmem:[#allocation1 + $0x28] sm:$0xff pattern:$0x75316420]
        %v757 = vld.sshfl [vmem:[#allocation1 + $0x30] sm:$0xff pattern:$0x75316420]
        %v758 = vld.sshfl [vmem:[#allocation1 + $0x38] sm:$0xff pattern:$0x75316420]
        %759 = vst [vmem:[#allocation1] ss:$2 sm:$0xff] %v738
        %v760 = vld.sshfl [vmem:[#allocation1] sm:$0xff pattern:$0x75316420]
        %v761 = vld.sshfl [vmem:[#allocation1 + $0x8] sm:$0xff pattern:$0x75316420]
        %v762 = vrot.slane %v751, 6
        %v763 = vrot.slane %v752, 6
        %v764 = vrot.slane %v753, 6
        %v765 = vrot.slane %v754, 6
        %v766 = vrot.slane %v755, 6
        %v767 = vrot.slane %v756, 6
        %v768 = vrot.slane %v757, 6
        %v769 = vrot.slane %v758, 6
        %v770 = vrot.slane %v760, 6
        %v771 = vrot.slane %v761, 6
        %772 = vrot.lane.b32.xlu0 %v762, 60
        %v773 = vpop.permute.xlu0 %772
        %774 = vrot.lane.b32.xlu0 %v763, 60
        %v775 = vpop.permute.xlu0 %774
        %776 = vrot.lane.b32.xlu0 %v764, 60
        %v777 = vpop.permute.xlu0 %776
        %778 = vrot.lane.b32.xlu0 %v765, 60
        %v779 = vpop.permute.xlu0 %778
        %780 = vrot.lane.b32.xlu0 %v766, 60
        %v781 = vpop.permute.xlu0 %780
        %782 = vrot.lane.b32.xlu0 %v767, 60
        %v783 = vpop.permute.xlu0 %782
        %784 = vrot.lane.b32.xlu0 %v768, 60
        %v785 = vpop.permute.xlu0 %784
        %786 = vrot.lane.b32.xlu0 %v769, 60
        %v787 = vpop.permute.xlu0 %786
        %788 = vrot.lane.b32.xlu0 %v770, 60
        %v789 = vpop.permute.xlu0 %788
        %790 = vrot.lane.b32.xlu0 %v771, 60
        %v791 = vpop.permute.xlu0 %790
        %vm792 = vcmask 490496
        %v793 = vsel %vm792, %v773, %v775
        %v794 = vsel %vm792, %v775, %v777
        %v795 = vsel %vm792, %v777, %v779
        %v796 = vsel %vm792, %v779, %v781
        %v797 = vsel %vm792, %v781, %v783
        %v798 = vsel %vm792, %v783, %v785
        %v799 = vsel %vm792, %v785, %v787
        %v800 = vsel %vm792, %v787, %v789
        %v801 = vsel %vm792, %v789, %v791
        %811 = vst [vmem:[#allocation2 + $0x90] sm:$0x1c] %v793
        %812 = vst [vmem:[#allocation2 + $0x98] sm:$0x1c] %v794
        %813 = vst [vmem:[#allocation2 + $0xa0] sm:$0x1c] %v795
        %814 = vst [vmem:[#allocation2 + $0xa8] sm:$0x1c] %v796
        %815 = vst [vmem:[#allocation2 + $0xb0] sm:$0x1c] %v797
        %816 = vst [vmem:[#allocation2 + $0xb8] sm:$0x1c] %v798
        %817 = vst [vmem:[#allocation2 + $0xc0] sm:$0x1c] %v799
        %818 = vst [vmem:[#allocation2 + $0xc8] sm:$0x1c] %v800
        %819 = vst [vmem:[#allocation2 + $0xd0] sm:$0x1c] %v801
        %v820 = vld [vmem:[%s248] sm:$0x77]
        %v821 = vld [vmem:[%s248 + $0x8] sm:$0x77]
        %v822 = vld [vmem:[%s248 + $0x10] sm:$0x77]
        %v823 = vld [vmem:[%s248 + $0x18] sm:$0x77]
        %v824 = vld [vmem:[%s248 + $0x20] sm:$0x77]
        %830 = vst [vmem:[#allocation1] ss:$2 sm:$0xff] %v820
        %s831 = scalar_lea.vmem [#allocation1], 16
        %832 = vst [vmem:[%s831] ss:$2 sm:$0xff] %v821
        %s833 = scalar_lea.vmem [#allocation1], 32
        %834 = vst [vmem:[%s833] ss:$2 sm:$0xff] %v822
        %s835 = scalar_lea.vmem [#allocation1], 48
        %836 = vst [vmem:[%s835] ss:$2 sm:$0xff] %v823
        %v837 = vld.sshfl [vmem:[#allocation1] sm:$0xff pattern:$0x75316420]
        %v838 = vld.sshfl [vmem:[#allocation1 + $0x8] sm:$0xff pattern:$0x75316420]
        %v839 = vld.sshfl [vmem:[#allocation1 + $0x10] sm:$0xff pattern:$0x75316420]
        %v840 = vld.sshfl [vmem:[#allocation1 + $0x18] sm:$0xff pattern:$0x75316420]
        %v841 = vld.sshfl [vmem:[#allocation1 + $0x20] sm:$0xff pattern:$0x75316420]
        %v842 = vld.sshfl [vmem:[#allocation1 + $0x28] sm:$0xff pattern:$0x75316420]
        %v843 = vld.sshfl [vmem:[#allocation1 + $0x30] sm:$0xff pattern:$0x75316420]
        %v844 = vld.sshfl [vmem:[#allocation1 + $0x38] sm:$0xff pattern:$0x75316420]
        %845 = vst [vmem:[#allocation1] ss:$2 sm:$0xff] %v824
        %v846 = vld.sshfl [vmem:[#allocation1] sm:$0xff pattern:$0x75316420]
        %v847 = vld.sshfl [vmem:[#allocation1 + $0x8] sm:$0xff pattern:$0x75316420]
        %v848 = vrot.slane %v837, 3
        %v849 = vrot.slane %v838, 3
        %v850 = vrot.slane %v839, 3
        %v851 = vrot.slane %v840, 3
        %v852 = vrot.slane %v841, 3
        %v853 = vrot.slane %v842, 3
        %v854 = vrot.slane %v843, 3
        %v855 = vrot.slane %v844, 3
        %v856 = vrot.slane %v846, 3
        %v857 = vrot.slane %v847, 3
        %858 = vrot.lane.b32.xlu0 %v848, 59
        %v859 = vpop.permute.xlu0 %858
        %860 = vrot.lane.b32.xlu0 %v849, 59
        %v861 = vpop.permute.xlu0 %860
        %862 = vrot.lane.b32.xlu0 %v850, 59
        %v863 = vpop.permute.xlu0 %862
        %864 = vrot.lane.b32.xlu0 %v851, 59
        %v865 = vpop.permute.xlu0 %864
        %866 = vrot.lane.b32.xlu0 %v852, 59
        %v867 = vpop.permute.xlu0 %866
        %868 = vrot.lane.b32.xlu0 %v853, 59
        %v869 = vpop.permute.xlu0 %868
        %870 = vrot.lane.b32.xlu0 %v854, 59
        %v871 = vpop.permute.xlu0 %870
        %872 = vrot.lane.b32.xlu0 %v855, 59
        %v873 = vpop.permute.xlu0 %872
        %874 = vrot.lane.b32.xlu0 %v856, 59
        %v875 = vpop.permute.xlu0 %874
        %876 = vrot.lane.b32.xlu0 %v857, 59
        %v877 = vpop.permute.xlu0 %876
        %vm878 = vcmask 482304
        %v879 = vsel %vm878, %v859, %v861
        %v880 = vsel %vm878, %v861, %v863
        %v881 = vsel %vm878, %v863, %v865
        %v882 = vsel %vm878, %v865, %v867
        %v883 = vsel %vm878, %v867, %v869
        %v884 = vsel %vm878, %v869, %v871
        %v885 = vsel %vm878, %v871, %v873
        %v886 = vsel %vm878, %v873, %v875
        %v887 = vsel %vm878, %v875, %v877
        %897 = vst [vmem:[#allocation2 + $0x90] sm:$0xe0] %v879
        %898 = vst [vmem:[#allocation2 + $0x98] sm:$0xe0] %v880
        %899 = vst [vmem:[#allocation2 + $0xa0] sm:$0xe0] %v881
        %900 = vst [vmem:[#allocation2 + $0xa8] sm:$0xe0] %v882
        %901 = vst [vmem:[#allocation2 + $0xb0] sm:$0xe0] %v883
        %902 = vst [vmem:[#allocation2 + $0xb8] sm:$0xe0] %v884
        %903 = vst [vmem:[#allocation2 + $0xc0] sm:$0xe0] %v885
        %904 = vst [vmem:[#allocation2 + $0xc8] sm:$0xe0] %v886
        %905 = vst [vmem:[#allocation2 + $0xd0] sm:$0xe0] %v887
        %v906 = vld [vmem:[%s248] sm:$0x77]
        %v907 = vld [vmem:[%s248 + $0x8] sm:$0x77]
        %v908 = vld [vmem:[%s248 + $0x10] sm:$0x77]
        %v909 = vld [vmem:[%s248 + $0x18] sm:$0x77]
        %v910 = vld [vmem:[%s248 + $0x20] sm:$0x77]
        %916 = vst [vmem:[#allocation1] ss:$2 sm:$0xff] %v906
        %s917 = scalar_lea.vmem [#allocation1], 16
        %918 = vst [vmem:[%s917] ss:$2 sm:$0xff] %v907
        %s919 = scalar_lea.vmem [#allocation1], 32
        %920 = vst [vmem:[%s919] ss:$2 sm:$0xff] %v908
        %s921 = scalar_lea.vmem [#allocation1], 48
        %922 = vst [vmem:[%s921] ss:$2 sm:$0xff] %v909
        %v923 = vld.sshfl [vmem:[#allocation1] sm:$0xff pattern:$0x75316420]
        %v924 = vld.sshfl [vmem:[#allocation1 + $0x8] sm:$0xff pattern:$0x75316420]
        %v925 = vld.sshfl [vmem:[#allocation1 + $0x10] sm:$0xff pattern:$0x75316420]
        %v926 = vld.sshfl [vmem:[#allocation1 + $0x18] sm:$0xff pattern:$0x75316420]
        %v927 = vld.sshfl [vmem:[#allocation1 + $0x20] sm:$0xff pattern:$0x75316420]
        %v928 = vld.sshfl [vmem:[#allocation1 + $0x28] sm:$0xff pattern:$0x75316420]
        %v929 = vld.sshfl [vmem:[#allocation1 + $0x30] sm:$0xff pattern:$0x75316420]
        %v930 = vld.sshfl [vmem:[#allocation1 + $0x38] sm:$0xff pattern:$0x75316420]
        %931 = vst [vmem:[#allocation1] ss:$2 sm:$0xff] %v910
        %v932 = vld.sshfl [vmem:[#allocation1] sm:$0xff pattern:$0x75316420]
        %v933 = vld.sshfl [vmem:[#allocation1 + $0x8] sm:$0xff pattern:$0x75316420]
        %934 = vrot.lane.b32.xlu0 %v923, 58
        %v935 = vpop.permute.xlu0 %934
        %936 = vrot.lane.b32.xlu0 %v924, 58
        %v937 = vpop.permute.xlu0 %936
        %938 = vrot.lane.b32.xlu0 %v925, 58
        %v939 = vpop.permute.xlu0 %938
        %940 = vrot.lane.b32.xlu0 %v926, 58
        %v941 = vpop.permute.xlu0 %940
        %942 = vrot.lane.b32.xlu0 %v927, 58
        %v943 = vpop.permute.xlu0 %942
        %944 = vrot.lane.b32.xlu0 %v928, 58
        %v945 = vpop.permute.xlu0 %944
        %946 = vrot.lane.b32.xlu0 %v929, 58
        %v947 = vpop.permute.xlu0 %946
        %948 = vrot.lane.b32.xlu0 %v930, 58
        %v949 = vpop.permute.xlu0 %948
        %950 = vrot.lane.b32.xlu0 %v932, 58
        %v951 = vpop.permute.xlu0 %950
        %952 = vrot.lane.b32.xlu0 %v933, 58
        %v953 = vpop.permute.xlu0 %952
        %vm954 = vcmask 474112
        %v955 = vsel %vm954, %v935, %v937
        %v956 = vsel %vm954, %v937, %v939
        %v957 = vsel %vm954, %v939, %v941
        %v958 = vsel %vm954, %v941, %v943
        %v959 = vsel %vm954, %v943, %v945
        %v960 = vsel %vm954, %v945, %v947
        %v961 = vsel %vm954, %v947, %v949
        %v962 = vsel %vm954, %v949, %v951
        %v963 = vsel %vm954, %v951, %v953
        %973 = vst [vmem:[#allocation2 + $0xd8] sm:$0x7] %v955
        %974 = vst [vmem:[#allocation2 + $0xe0] sm:$0x7] %v956
        %975 = vst [vmem:[#allocation2 + $0xe8] sm:$0x7] %v957
        %976 = vst [vmem:[#allocation2 + $0xf0] sm:$0x7] %v958
        %977 = vst [vmem:[#allocation2 + $0xf8] sm:$0x7] %v959
        %978 = vst [vmem:[#allocation2 + $0x100] sm:$0x7] %v960
        %979 = vst [vmem:[#allocation2 + $0x108] sm:$0x7] %v961
        %980 = vst [vmem:[#allocation2 + $0x110] sm:$0x7] %v962
        %981 = vst [vmem:[#allocation2 + $0x118] sm:$0x7] %v963
        %s982 = scalar_lea.vmem [#allocation2], 219
        %983 = vst [vmem:[%s982] ss:$8 sm:$0xf] 1.0
        %984 = vst [vmem:[%s982] ss:$8 sm:$0xf0] 1.0
        %v985 = vlaneseq
        %vm986 = vcmp.ge.s32.totalorder %v985, 0
        %vm987 = vcmp.lt.s32.totalorder %v985, 128
        %vm988 = vmand %vm986, %vm987
        %s989 = scalar_lea.vmem [#allocation2], 283
        %990 = vst.msk [vmem:[%s989] ss:$8 sm:$0x1] %vm988, 1.0
        %991 = vst.msk [vmem:[%s989] ss:$8 sm:$0x0] %vm988, 1.0
        %v992 = vld [vmem:[%s1] sm:$0x3]
        %v993 = vld [vmem:[#allocation2] sm:$0xff]
        %v994 = vld [vmem:[#allocation2 + $0x8] sm:$0xff]
        %v995 = vld [vmem:[#allocation2 + $0x10] sm:$0xff]
        %v996 = vld [vmem:[#allocation2 + $0x18] sm:$0xff]
        %v997 = vld [vmem:[#allocation2 + $0x20] sm:$0xff]
        %v998 = vld [vmem:[#allocation2 + $0x28] sm:$0xff]
        %v999 = vld [vmem:[#allocation2 + $0x30] sm:$0xff]
        %v1000 = vld [vmem:[#allocation2 + $0x38] sm:$0xff]
        %v1001 = vld [vmem:[#allocation2 + $0x40] sm:$0xff]
        %v1002 = vld [vmem:[#allocation2 + $0x48] sm:$0xff]
        %v1003 = vld [vmem:[#allocation2 + $0x50] sm:$0xff]
        %v1004 = vld [vmem:[#allocation2 + $0x58] sm:$0xff]
        %v1005 = vld [vmem:[#allocation2 + $0x60] sm:$0xff]
        %v1006 = vld [vmem:[#allocation2 + $0x68] sm:$0xff]
        %v1007 = vld [vmem:[#allocation2 + $0x70] sm:$0xff]
        %v1008 = vld [vmem:[#allocation2 + $0x78] sm:$0xff]
        %v1009 = vld [vmem:[#allocation2 + $0x80] sm:$0xff]
        %v1010 = vld [vmem:[#allocation2 + $0x88] sm:$0xff]
        %v1011 = vld [vmem:[#allocation2 + $0x90] sm:$0xff]
        %v1012 = vld [vmem:[#allocation2 + $0x98] sm:$0xff]
        %v1013 = vld [vmem:[#allocation2 + $0xa0] sm:$0xff]
        %v1014 = vld [vmem:[#allocation2 + $0xa8] sm:$0xff]
        %v1015 = vld [vmem:[#allocation2 + $0xb0] sm:$0xff]
        %v1016 = vld [vmem:[#allocation2 + $0xb8] sm:$0xff]
        %v1017 = vld [vmem:[#allocation2 + $0xc0] sm:$0xff]
        %v1018 = vld [vmem:[#allocation2 + $0xc8] sm:$0xff]
        %v1019 = vld [vmem:[#allocation2 + $0xd0] sm:$0xff]
        %v1020 = vld [vmem:[#allocation2 + $0xd8] sm:$0xf]
        %v1021 = vld [vmem:[#allocation2 + $0xe0] sm:$0xf]
        %v1022 = vld [vmem:[#allocation2 + $0xe8] sm:$0xf]
        %v1023 = vld [vmem:[#allocation2 + $0xf0] sm:$0xf]
        %v1024 = vld [vmem:[#allocation2 + $0xf8] sm:$0xf]
        %v1025 = vld [vmem:[#allocation2 + $0x100] sm:$0xf]
        %v1026 = vld [vmem:[#allocation2 + $0x108] sm:$0xf]
        %v1027 = vld [vmem:[#allocation2 + $0x110] sm:$0xf]
        %v1028 = vld [vmem:[#allocation2 + $0x118] sm:$0xf]
        %v1029 = vpack.c.bf16 %v1002, %v993
        %v1030 = vpack.c.bf16 %v1003, %v994
        %v1031 = vpack.c.bf16 %v1004, %v995
        %v1032 = vpack.c.bf16 %v1005, %v996
        %v1033 = vpack.c.bf16 %v1006, %v997
        %v1034 = vpack.c.bf16 %v1007, %v998
        %v1035 = vpack.c.bf16 %v1008, %v999
        %v1036 = vpack.c.bf16 %v1009, %v1000
        %v1037 = vpack.c.bf16 %v1010, %v1001
        %v1038 = vpack.c.bf16 %v1020, %v1011
        %v1039 = vpack.c.bf16 %v1021, %v1012
        %v1040 = vpack.c.bf16 %v1022, %v1013
        %v1041 = vpack.c.bf16 %v1023, %v1014
        %v1042 = vpack.c.bf16 %v1024, %v1015
        %v1043 = vpack.c.bf16 %v1025, %v1016
        %v1044 = vpack.c.bf16 %v1026, %v1017
        %v1045 = vpack.c.bf16 %v1027, %v1018
        %v1046 = vpack.c.bf16 %v1028, %v1019
        %vm1047 = vcmask 228352
        %v1049 = vsel %vm1047, %v992, 0
        %vm1051 = vcmask 1045504
        %v1053 = vsel %vm1051, %v1038, 0
        %v1056 = vsel %vm1051, %v1039, 0
        %v1059 = vsel %vm1051, %v1040, 0
        %v1062 = vsel %vm1051, %v1041, 0
        %v1065 = vsel %vm1051, %v1042, 0
        %v1068 = vsel %vm1051, %v1043, 0
        %v1071 = vsel %vm1051, %v1044, 0
        %v1074 = vsel %vm1051, %v1045, 0
        %v1077 = vsel %vm1051, %v1046, 0
        %1079 = vmatpush.bf16.msra.mxu0 0
        %1080 = vmatpush.bf16.msra.mxu0 0
        %1081 = vmatpush.bf16.msra.mxu0 0
        %1082 = vmatpush.bf16.msra.mxu0 0
        %1083 = vmatpush.bf16.msra.mxu0 0
        %1084 = vmatpush.bf16.msra.mxu0 0
        %1085 = vmatpush.bf16.msra.mxu0 %v1053
        %1086 = vmatpush.bf16.msra.mxu0 %v1029
        %1087 = vmatmul.bf16.gmra.mxu0 %v1049
        %v1088 = vpop.f32.mrf.mxu0
        %v1089 = vadd.f32 0.0, %v1088
        %v1090 = vpop.f32.mrf.mxu0
        %1091 = vdwg.mxu0
        %1092 = vmatpush.bf16.msra.mxu0 0
        %1093 = vmatpush.bf16.msra.mxu0 0
        %1094 = vmatpush.bf16.msra.mxu0 0
        %1095 = vmatpush.bf16.msra.mxu0 0
        %1096 = vmatpush.bf16.msra.mxu0 0
        %1097 = vmatpush.bf16.msra.mxu0 0
        %1098 = vmatpush.bf16.msra.mxu0 %v1056
        %1099 = vmatpush.bf16.msra.mxu0 %v1030
        %1100 = vmatmul.bf16.gmra.mxu0 %v1049
        %v1101 = vpop.f32.mrf.mxu0
        %v1102 = vadd.f32 0.0, %v1101
        %v1103 = vpop.f32.mrf.mxu0
        %1104 = vdwg.mxu0
        %1105 = vmatpush.bf16.msra.mxu0 0
        %1106 = vmatpush.bf16.msra.mxu0 0
        %1107 = vmatpush.bf16.msra.mxu0 0
        %1108 = vmatpush.bf16.msra.mxu0 0
        %1109 = vmatpush.bf16.msra.mxu0 0
        %1110 = vmatpush.bf16.msra.mxu0 0
        %1111 = vmatpush.bf16.msra.mxu0 %v1059
        %1112 = vmatpush.bf16.msra.mxu0 %v1031
        %1113 = vmatmul.bf16.gmra.mxu0 %v1049
        %v1114 = vpop.f32.mrf.mxu0
        %v1115 = vadd.f32 0.0, %v1114
        %v1116 = vpop.f32.mrf.mxu0
        %1117 = vdwg.mxu0
        %1118 = vmatpush.bf16.msra.mxu0 0
        %1119 = vmatpush.bf16.msra.mxu0 0
        %1120 = vmatpush.bf16.msra.mxu0 0
        %1121 = vmatpush.bf16.msra.mxu0 0
        %1122 = vmatpush.bf16.msra.mxu0 0
        %1123 = vmatpush.bf16.msra.mxu0 0
        %1124 = vmatpush.bf16.msra.mxu0 %v1062
        %1125 = vmatpush.bf16.msra.mxu0 %v1032
        %1126 = vmatmul.bf16.gmra.mxu0 %v1049
        %v1127 = vpop.f32.mrf.mxu0
        %v1128 = vadd.f32 0.0, %v1127
        %v1129 = vpop.f32.mrf.mxu0
        %1130 = vdwg.mxu0
        %1131 = vmatpush.bf16.msra.mxu0 0
        %1132 = vmatpush.bf16.msra.mxu0 0
        %1133 = vmatpush.bf16.msra.mxu0 0
        %1134 = vmatpush.bf16.msra.mxu0 0
        %1135 = vmatpush.bf16.msra.mxu0 0
        %1136 = vmatpush.bf16.msra.mxu0 0
        %1137 = vmatpush.bf16.msra.mxu0 %v1065
        %1138 = vmatpush.bf16.msra.mxu0 %v1033
        %1139 = vmatmul.bf16.gmra.mxu0 %v1049
        %v1140 = vpop.f32.mrf.mxu0
        %v1141 = vadd.f32 0.0, %v1140
        %v1142 = vpop.f32.mrf.mxu0
        %1143 = vdwg.mxu0
        %1144 = vmatpush.bf16.msra.mxu0 0
        %1145 = vmatpush.bf16.msra.mxu0 0
        %1146 = vmatpush.bf16.msra.mxu0 0
        %1147 = vmatpush.bf16.msra.mxu0 0
        %1148 = vmatpush.bf16.msra.mxu0 0
        %1149 = vmatpush.bf16.msra.mxu0 0
        %1150 = vmatpush.bf16.msra.mxu0 %v1068
        %1151 = vmatpush.bf16.msra.mxu0 %v1034
        %1152 = vmatmul.bf16.gmra.mxu0 %v1049
        %v1153 = vpop.f32.mrf.mxu0
        %v1154 = vadd.f32 0.0, %v1153
        %v1155 = vpop.f32.mrf.mxu0
        %1156 = vdwg.mxu0
        %1157 = vmatpush.bf16.msra.mxu0 0
        %1158 = vmatpush.bf16.msra.mxu0 0
        %1159 = vmatpush.bf16.msra.mxu0 0
        %1160 = vmatpush.bf16.msra.mxu0 0
        %1161 = vmatpush.bf16.msra.mxu0 0
        %1162 = vmatpush.bf16.msra.mxu0 0
        %1163 = vmatpush.bf16.msra.mxu0 %v1071
        %1164 = vmatpush.bf16.msra.mxu0 %v1035
        %1165 = vmatmul.bf16.gmra.mxu0 %v1049
        %v1166 = vpop.f32.mrf.mxu0
        %v1167 = vadd.f32 0.0, %v1166
        %v1168 = vpop.f32.mrf.mxu0
        %1169 = vdwg.mxu0
        %1170 = vmatpush.bf16.msra.mxu0 0
        %1171 = vmatpush.bf16.msra.mxu0 0
        %1172 = vmatpush.bf16.msra.mxu0 0
        %1173 = vmatpush.bf16.msra.mxu0 0
        %1174 = vmatpush.bf16.msra.mxu0 0
        %1175 = vmatpush.bf16.msra.mxu0 0
        %1176 = vmatpush.bf16.msra.mxu0 %v1074
        %1177 = vmatpush.bf16.msra.mxu0 %v1036
        %1178 = vmatmul.bf16.gmra.mxu0 %v1049
        %v1179 = vpop.f32.mrf.mxu0
        %v1180 = vadd.f32 0.0, %v1179
        %v1181 = vpop.f32.mrf.mxu0
        %1182 = vdwg.mxu0
        %1183 = vmatpush.bf16.msra.mxu0 0
        %1184 = vmatpush.bf16.msra.mxu0 0
        %1185 = vmatpush.bf16.msra.mxu0 0
        %1186 = vmatpush.bf16.msra.mxu0 0
        %1187 = vmatpush.bf16.msra.mxu0 0
        %1188 = vmatpush.bf16.msra.mxu0 0
        %1189 = vmatpush.bf16.msra.mxu0 %v1077
        %1190 = vmatpush.bf16.msra.mxu0 %v1037
        %1191 = vmatmul.bf16.gmra.mxu0 %v1049
        %v1192 = vpop.f32.mrf.mxu0
        %v1193 = vadd.f32 0.0, %v1192
        %v1194 = vpop.f32.mrf.mxu0
        %1195 = vdwg.mxu0
        %v1196 = vmax.f32 %v1089, 0.0
        %v1197 = vmax.f32 %v1102, 0.0
        %v1198 = vmax.f32 %v1115, 0.0
        %v1199 = vmax.f32 %v1128, 0.0
        %v1200 = vmax.f32 %v1141, 0.0
        %v1201 = vmax.f32 %v1154, 0.0
        %v1202 = vmax.f32 %v1167, 0.0
        %v1203 = vmax.f32 %v1180, 0.0
        %v1204 = vmax.f32 %v1193, 0.0
        %1214 = vrot.lane.b32.xlu0 %v1196, 127
        %v1215 = vpop.permute.xlu0 %1214
        %1216 = vrot.lane.b32.xlu0 %v1197, 127
        %v1217 = vpop.permute.xlu0 %1216
        %1218 = vrot.lane.b32.xlu0 %v1198, 127
        %v1219 = vpop.permute.xlu0 %1218
        %1220 = vrot.lane.b32.xlu0 %v1199, 127
        %v1221 = vpop.permute.xlu0 %1220
        %1222 = vrot.lane.b32.xlu0 %v1200, 127
        %v1223 = vpop.permute.xlu0 %1222
        %1224 = vrot.lane.b32.xlu0 %v1201, 127
        %v1225 = vpop.permute.xlu0 %1224
        %1226 = vrot.lane.b32.xlu0 %v1202, 127
        %v1227 = vpop.permute.xlu0 %1226
        %1228 = vrot.lane.b32.xlu0 %v1203, 127
        %v1229 = vpop.permute.xlu0 %1228
        %1230 = vrot.lane.b32.xlu0 %v1204, 127
        %v1231 = vpop.permute.xlu0 %1230
        %v1232 = vsel %vm353, %v1215, %v1217
        %v1233 = vsel %vm353, %v1217, %v1219
        %v1234 = vsel %vm353, %v1219, %v1221
        %v1235 = vsel %vm353, %v1221, %v1223
        %v1236 = vsel %vm353, %v1223, %v1225
        %v1237 = vsel %vm353, %v1225, %v1227
        %v1238 = vsel %vm353, %v1227, %v1229
        %v1239 = vsel %vm353, %v1229, %v1231
        %v1249 = vmax.f32 %v1196, %v1232
        %v1250 = vmax.f32 %v1197, %v1233
        %v1251 = vmax.f32 %v1198, %v1234
        %v1252 = vmax.f32 %v1199, %v1235
        %v1253 = vmax.f32 %v1200, %v1236
        %v1254 = vmax.f32 %v1201, %v1237
        %v1255 = vmax.f32 %v1202, %v1238
        %v1256 = vmax.f32 %v1203, %v1239
        %v1257 = vmax.f32 %v1204, %v1231
        %1267 = vrot.lane.b32.xlu0 %v1249, 94
        %v1268 = vpop.permute.xlu0 %1267
        %1269 = vrot.lane.b32.xlu0 %v1250, 94
        %v1270 = vpop.permute.xlu0 %1269
        %1271 = vrot.lane.b32.xlu0 %v1251, 94
        %v1272 = vpop.permute.xlu0 %1271
        %1273 = vrot.lane.b32.xlu0 %v1252, 94
        %v1274 = vpop.permute.xlu0 %1273
        %1275 = vrot.lane.b32.xlu0 %v1253, 94
        %v1276 = vpop.permute.xlu0 %1275
        %1277 = vrot.lane.b32.xlu0 %v1254, 94
        %v1278 = vpop.permute.xlu0 %1277
        %1279 = vrot.lane.b32.xlu0 %v1255, 94
        %v1280 = vpop.permute.xlu0 %1279
        %1281 = vrot.lane.b32.xlu0 %v1256, 94
        %v1282 = vpop.permute.xlu0 %1281
        %1283 = vrot.lane.b32.xlu0 %v1257, 94
        %v1284 = vpop.permute.xlu0 %1283
        %v1285 = vsel %vm534, %v1268, %v1270
        %v1286 = vsel %vm534, %v1270, %v1272
        %v1287 = vsel %vm534, %v1272, %v1274
        %v1288 = vsel %vm534, %v1274, %v1276
        %v1289 = vsel %vm534, %v1276, %v1278
        %v1290 = vsel %vm534, %v1278, %v1280
        %v1291 = vsel %vm534, %v1280, %v1282
        %v1292 = vsel %vm534, %v1282, %v1284
        %v1302 = vmax.f32 %v1249, %v1285
        %v1303 = vmax.f32 %v1250, %v1286
        %v1304 = vmax.f32 %v1251, %v1287
        %v1305 = vmax.f32 %v1252, %v1288
        %v1306 = vmax.f32 %v1253, %v1289
        %v1307 = vmax.f32 %v1254, %v1290
        %v1308 = vmax.f32 %v1255, %v1291
        %v1309 = vmax.f32 %v1256, %v1292
        %v1310 = vmax.f32 %v1257, %v1284
        %1311 = vst [vmem:[#allocation4] sm:$0xf] %v1302
        %1312 = vst [vmem:[#allocation4 + $0x8] sm:$0xf] %v1303
        %vm1313 = vcmask 125952
        %1314 = vst.msk [vmem:[#allocation4 + $0x10] sm:$0xf] %vm1313, %v1304
        %v1318 = vrot.slane %v1304, 4
        %v1319 = vrot.slane %v1305, 4
        %v1320 = vrot.slane %v1306, 4
        %1321 = vrot.lane.b32.xlu0 %v1318, 112
        %v1322 = vpop.permute.xlu0 %1321
        %1323 = vrot.lane.b32.xlu0 %v1319, 112
        %v1324 = vpop.permute.xlu0 %1323
        %1325 = vrot.lane.b32.xlu0 %v1320, 112
        %v1326 = vpop.permute.xlu0 %1325
        %vm1327 = vcmask 916480
        %v1328 = vsel %vm1327, %v1322, %v1324
        %v1329 = vsel %vm1327, %v1324, %v1326
        %1333 = vst [vmem:[#allocation4] sm:$0xf0] %v1328
        %1334 = vst [vmem:[#allocation4 + $0x8] sm:$0xf0] %v1329
        %vm1335 = vcmask 130052
        %1336 = vst.msk [vmem:[#allocation4 + $0x10] sm:$0xf0] %vm1335, %v1326
        %1339 = vrot.lane.b32.xlu0 %v1306, 96
        %v1340 = vpop.permute.xlu0 %1339
        %1341 = vrot.lane.b32.xlu0 %v1307, 96
        %v1342 = vpop.permute.xlu0 %1341
        %1343 = vrot.lane.b32.xlu0 %v1308, 96
        %v1344 = vpop.permute.xlu0 %1343
        %vm1345 = vcmask 785408
        %v1346 = vsel %vm1345, %v1340, %v1342
        %v1347 = vsel %vm1345, %v1342, %v1344
        %1351 = vst [vmem:[#allocation4 + $0x18] sm:$0xf] %v1346
        %1352 = vst [vmem:[#allocation4 + $0x20] sm:$0xf] %v1347
        %1353 = vst.msk [vmem:[#allocation4 + $0x28] sm:$0xf] %vm1313, %v1344
        %v1356 = vrot.slane %v1308, 4
        %v1357 = vrot.slane %v1309, 4
        %v1358 = vrot.slane %v1310, 4
        %1359 = vrot.lane.b32.xlu0 %v1356, 80
        %v1360 = vpop.permute.xlu0 %1359
        %1361 = vrot.lane.b32.xlu0 %v1357, 80
        %v1362 = vpop.permute.xlu0 %1361
        %1363 = vrot.lane.b32.xlu0 %v1358, 80
        %v1364 = vpop.permute.xlu0 %1363
        %vm1365 = vcmask 654336
        %v1366 = vsel %vm1365, %v1360, %v1362
        %v1367 = vsel %vm1365, %v1362, %v1364
        %1371 = vst [vmem:[#allocation4 + $0x18] sm:$0xf0] %v1366
        %1372 = vst [vmem:[#allocation4 + $0x20] sm:$0xf0] %v1367
        %1373 = vst.msk [vmem:[#allocation4 + $0x28] sm:$0xf0] %vm1335, %v1364
        %v1374 = vld [vmem:[#allocation4] sm:$0xff]
        %v1375 = vld [vmem:[#allocation4 + $0x8] sm:$0xff]
        %v1376 = vld [vmem:[#allocation4 + $0x10] sm:$0xff]
        %v1377 = vld [vmem:[#allocation4 + $0x18] sm:$0xff]
        %v1378 = vld [vmem:[#allocation4 + $0x20] sm:$0xff]
        %v1379 = vld [vmem:[#allocation4 + $0x28] sm:$0xff]
        %v1380 = vpack.c.bf16 %v1377, %v1374
        %v1381 = vpack.c.bf16 %v1378, %v1375
        %v1382 = vpack.c.bf16 %v1379, %v1376
        %v1383 = vld [vmem:[%s3] sm:$0xf]
        %v1384 = vld [vmem:[%s3 + $0x8] sm:$0xf]
        %v1385 = vld [vmem:[%s3 + $0x10] sm:$0xf]
        %v1386 = vld [vmem:[%s3 + $0x18] sm:$0xf]
        %v1387 = vld [vmem:[%s3 + $0x20] sm:$0xf]
        %v1388 = vld [vmem:[%s3 + $0x28] sm:$0xf]
        %v1389 = vld [vmem:[%s3 + $0x30] sm:$0xf]
        %v1390 = vld [vmem:[%s3 + $0x38] sm:$0xf]
        %v1391 = vld [vmem:[%s3 + $0x40] sm:$0xf]
        %v1392 = vld [vmem:[%s3 + $0x48] sm:$0xf]
        %v1393 = vld [vmem:[%s3 + $0x50] sm:$0xf]
        %v1394 = vld [vmem:[%s3 + $0x58] sm:$0xf]
        %v1395 = vld [vmem:[%s3 + $0x60] sm:$0xf]
        %v1396 = vld [vmem:[%s3 + $0x68] sm:$0xf]
        %v1397 = vld [vmem:[%s3 + $0x70] sm:$0xf]
        %v1398 = vld [vmem:[%s3 + $0x78] sm:$0xf]
        %v1399 = vld [vmem:[%s3 + $0x80] sm:$0xf]
        %v1400 = vld [vmem:[%s3 + $0x88] sm:$0xf]
        %v1401 = vld [vmem:[%s3 + $0x90] sm:$0xf]
        %v1402 = vld [vmem:[%s3 + $0x98] sm:$0xf]
        %v1403 = vld [vmem:[%s3 + $0xa0] sm:$0xf]
        %v1404 = vld [vmem:[%s3 + $0xa8] sm:$0xf]
        %v1405 = vld [vmem:[%s3 + $0xb0] sm:$0xf]
        %v1406 = vld [vmem:[%s3 + $0xb8] sm:$0xf]
        %v1407 = vld [vmem:[%s3 + $0xc0] sm:$0xf]
        %v1408 = vld [vmem:[%s3 + $0xc8] sm:$0xf]
        %v1409 = vld [vmem:[%s3 + $0xd0] sm:$0xf]
        %v1410 = vld [vmem:[%s3 + $0xd8] sm:$0xf]
        %v1411 = vld [vmem:[%s3 + $0xe0] sm:$0xf]
        %v1412 = vld [vmem:[%s3 + $0xe8] sm:$0xf]
        %v1413 = vld [vmem:[%s3 + $0xf0] sm:$0xf]
        %v1414 = vld [vmem:[%s3 + $0xf8] sm:$0xf]
        %v1415 = vld [vmem:[%s3 + $0x100] sm:$0xf]
        %v1416 = vld [vmem:[%s3 + $0x108] sm:$0xf]
        %v1451 = vunpack.c.l.b16 %v1383
        %v1452 = vunpack.c.l.b16 %v1384
        %v1453 = vunpack.c.l.b16 %v1385
        %v1454 = vunpack.c.l.b16 %v1386
        %v1455 = vunpack.c.l.b16 %v1387
        %v1456 = vunpack.c.l.b16 %v1388
        %v1457 = vunpack.c.l.b16 %v1389
        %v1458 = vunpack.c.l.b16 %v1390
        %v1459 = vunpack.c.l.b16 %v1391
        %v1460 = vunpack.c.l.b16 %v1392
        %v1461 = vunpack.c.l.b16 %v1393
        %v1462 = vunpack.c.l.b16 %v1394
        %v1463 = vunpack.c.l.b16 %v1395
        %v1464 = vunpack.c.l.b16 %v1396
        %v1465 = vunpack.c.l.b16 %v1397
        %v1466 = vunpack.c.l.b16 %v1398
        %v1467 = vunpack.c.l.b16 %v1399
        %v1468 = vunpack.c.l.b16 %v1400
        %v1469 = vunpack.c.l.b16 %v1401
        %v1470 = vunpack.c.l.b16 %v1402
        %v1471 = vunpack.c.l.b16 %v1403
        %v1472 = vunpack.c.l.b16 %v1404
        %v1473 = vunpack.c.l.b16 %v1405
        %v1474 = vunpack.c.l.b16 %v1406
        %v1475 = vunpack.c.l.b16 %v1407
        %v1476 = vunpack.c.l.b16 %v1408
        %v1477 = vunpack.c.l.b16 %v1409
        %v1478 = vunpack.c.l.b16 %v1410
        %v1479 = vunpack.c.l.b16 %v1411
        %v1480 = vunpack.c.l.b16 %v1412
        %v1481 = vunpack.c.l.b16 %v1413
        %v1482 = vunpack.c.l.b16 %v1414
        %v1483 = vunpack.c.l.b16 %v1415
        %v1484 = vunpack.c.l.b16 %v1416
        %v1485 = vpack.c.b16 %v1452, %v1451
        %v1486 = vpack.c.b16 %v1454, %v1453
        %v1487 = vpack.c.b16 %v1456, %v1455
        %v1488 = vpack.c.b16 %v1458, %v1457
        %v1489 = vpack.c.b16 %v1460, %v1459
        %v1490 = vpack.c.b16 %v1462, %v1461
        %v1491 = vpack.c.b16 %v1464, %v1463
        %v1492 = vpack.c.b16 %v1466, %v1465
        %v1493 = vpack.c.b16 %v1468, %v1467
        %v1494 = vpack.c.b16 %v1470, %v1469
        %v1495 = vpack.c.b16 %v1472, %v1471
        %v1496 = vpack.c.b16 %v1474, %v1473
        %v1497 = vpack.c.b16 %v1476, %v1475
        %v1498 = vpack.c.b16 %v1478, %v1477
        %v1499 = vpack.c.b16 %v1480, %v1479
        %v1500 = vpack.c.b16 %v1482, %v1481
        %v1501 = vpack.c.b16 %v1484, %v1483
        %vm1519 = vcmask 130048
        %v1521 = vsel %vm1519, %v1382, 0
        %1523 = vmatpush.bf16.msra.mxu0 %v1492
        %1524 = vmatpush.bf16.msra.mxu0 %v1491
        %1525 = vmatpush.bf16.msra.mxu0 %v1490
        %1526 = vmatpush.bf16.msra.mxu0 %v1489
        %1527 = vmatpush.bf16.msra.mxu0 %v1488
        %1528 = vmatpush.bf16.msra.mxu0 %v1487
        %1529 = vmatpush.bf16.msra.mxu0 %v1486
        %1530 = vmatpush.bf16.msra.mxu0 %v1485
        %1531 = vmatmul.bf16.gmra.mxu0 %v1380
        %v1532 = vpop.f32.mrf.mxu0
        %v1533 = vadd.f32 0.0, %v1532
        %v1534 = vpop.f32.mrf.mxu0
        %v1535 = vadd.f32 0.0, %v1534
        %1536 = vdwg.mxu0
        %1537 = vmatpush.bf16.msra.mxu0 %v1500
        %1538 = vmatpush.bf16.msra.mxu0 %v1499
        %1539 = vmatpush.bf16.msra.mxu0 %v1498
        %1540 = vmatpush.bf16.msra.mxu0 %v1497
        %1541 = vmatpush.bf16.msra.mxu0 %v1496
        %1542 = vmatpush.bf16.msra.mxu0 %v1495
        %1543 = vmatpush.bf16.msra.mxu0 %v1494
        %1544 = vmatpush.bf16.msra.mxu0 %v1493
        %1545 = vmatmul.bf16.gmra.mxu0 %v1381
        %v1546 = vpop.f32.mrf.mxu0
        %v1547 = vadd.f32 %v1533, %v1546
        %v1548 = vpop.f32.mrf.mxu0
        %v1549 = vadd.f32 %v1535, %v1548
        %1550 = vdwg.mxu0
        %1551 = vmatpush.bf16.msra.mxu0 0
        %1552 = vmatpush.bf16.msra.mxu0 0
        %1553 = vmatpush.bf16.msra.mxu0 0
        %1554 = vmatpush.bf16.msra.mxu0 0
        %1555 = vmatpush.bf16.msra.mxu0 0
        %1556 = vmatpush.bf16.msra.mxu0 0
        %1557 = vmatpush.bf16.msra.mxu0 0
        %1558 = vmatpush.bf16.msra.mxu0 %v1501
        %1559 = vmatmul.bf16.gmra.mxu0 %v1521
        %v1560 = vpop.f32.mrf.mxu0
        %v1561 = vadd.f32 %v1547, %v1560
        %v1562 = vpop.f32.mrf.mxu0
        %v1563 = vadd.f32 %v1549, %v1562
        %1564 = vdwg.mxu0
        %1565 = vst [vmem:[#allocation5] sm:$0xff] 0.0
        %1566 = vst [vmem:[#allocation5 + $0x8] sm:$0xf] 0.0
        %1568 = vrot.lane.b32.xlu0 %v1561, 18
        %v1569 = vpop.permute.xlu0 %1568
        %vm1571 = vcmask 732304
        %1572 = vst.msk [vmem:[#allocation5] sm:$0xf] %vm1571, %v1569
        %1573 = vst.sshfl [vmem:[#allocation1] sm:$0xff pattern:$0x75316420] %v1561
        %s1574 = scalar_lea.vmem [#allocation1], 1
        %v1575 = vld [vmem:[%s1574] ss:$2 sm:$0xff]
        %1576 = vrot.lane.b32.xlu0 %v1575, 90
        %v1577 = vpop.permute.xlu0 %1576
        %v1578 = vrot.slane %v1577, 4
        %vm1579 = vcmask 736256
        %v1580 = vsel %vm1579, %v1578, %v1577
        %vm1582 = vcmask 1044176
        %vm1583 = vcmask 277508
        %vm1584 = vmor %vm1583, %vm1582
        %1585 = vst.msk [vmem:[#allocation5] sm:$0xff] %vm1584, %v1580
        %1587 = vrot.lane.b32.xlu0 %v1563, 34
        %v1588 = vpop.permute.xlu0 %1587
        %vm1590 = vcmask 863504
        %1591 = vst.msk [vmem:[#allocation5 + $0x4] sm:$0xf] %vm1590, %v1588
        %1592 = vst.sshfl [vmem:[#allocation1] sm:$0xff pattern:$0x75316420] %v1563
        %s1593 = scalar_lea.vmem [#allocation1], 1
        %v1594 = vld [vmem:[%s1593] ss:$2 sm:$0xff]
        %1595 = vrot.lane.b32.xlu0 %v1594, 106
        %v1596 = vpop.permute.xlu0 %1595
        %v1597 = vrot.slane %v1596, 4
        %vm1598 = vcmask 867328
        %v1599 = vsel %vm1598, %v1597, %v1596
        %vm1601 = vcmask 1044304
        %vm1602 = vcmask 408580
        %vm1603 = vmor %vm1602, %vm1601
        %1604 = vst.msk [vmem:[#allocation5 + $0x4] sm:$0xff] %vm1603, %v1599
        %v1605 = vld [vmem:[#allocation5] sm:$0xff]
        %v1606 = vld [vmem:[#allocation5 + $0x8] sm:$0xf]
        %1609 = vst [vmem:[#allocation1] ss:$2 sm:$0xff] %v1605
        %s1610 = scalar_lea.vmem [#allocation1], 16
        %1611 = vst [vmem:[%s1610] ss:$2 sm:$0xff] %v1606
        %v1612 = vld.sshfl [vmem:[#allocation1] sm:$0xff pattern:$0x75316420]
        %v1613 = vld.sshfl [vmem:[#allocation1 + $0x8] sm:$0xff pattern:$0x75316420]
        %v1614 = vld.sshfl [vmem:[#allocation1 + $0x10] sm:$0xff pattern:$0x75316420]
        %1618 = vst [vmem:[#allocation3] sm:$0xf] %v1612
        %1619 = vst [vmem:[#allocation3 + $0x8] sm:$0xf] %v1613
        %vm1620 = vcmask 388096
        %1621 = vst.msk [vmem:[#allocation3 + $0x10] sm:$0xf] %vm1620, %v1614
        %v1622 = vld [vmem:[#allocation5] sm:$0xff]
        %v1623 = vld [vmem:[#allocation5 + $0x8] sm:$0xf]
        %s1626 = scalar_lea.vmem [#allocation1], 1
        %1627 = vst [vmem:[%s1626] ss:$2 sm:$0xff] %v1622
        %s1628 = scalar_lea.vmem [#allocation1], 17
        %1629 = vst [vmem:[%s1628] ss:$2 sm:$0xff] %v1623
        %v1630 = vld.sshfl [vmem:[#allocation1] sm:$0xff pattern:$0x75316420]
        %v1631 = vld.sshfl [vmem:[#allocation1 + $0x8] sm:$0xff pattern:$0x75316420]
        %v1632 = vld.sshfl [vmem:[#allocation1 + $0x10] sm:$0xff pattern:$0x75316420]
        %1633 = vrot.lane.b32.xlu0 %v1630, 127
        %v1634 = vpop.permute.xlu0 %1633
        %1635 = vrot.lane.b32.xlu0 %v1631, 127
        %v1636 = vpop.permute.xlu0 %1635
        %1637 = vrot.lane.b32.xlu0 %v1632, 127
        %v1638 = vpop.permute.xlu0 %1637
        %v1639 = vsel %vm353, %v1634, %v1636
        %v1640 = vsel %vm353, %v1636, %v1638
        %1644 = vst [vmem:[#allocation3] sm:$0xf0] %v1639
        %1645 = vst [vmem:[#allocation3 + $0x8] sm:$0xf0] %v1640
        %vm1646 = vcmask 392196
        %1647 = vst.msk [vmem:[#allocation3 + $0x10] sm:$0xf0] %vm1646, %v1638
        %v1648 = vld [vmem:[#allocation5] sm:$0xff]
        %v1649 = vld [vmem:[#allocation5 + $0x8] sm:$0xf]
        %1652 = vst [vmem:[#allocation1] ss:$2 sm:$0xff] %v1648
        %s1653 = scalar_lea.vmem [#allocation1], 16
        %1654 = vst [vmem:[%s1653] ss:$2 sm:$0xff] %v1649
        %v1655 = vld.sshfl [vmem:[#allocation1] sm:$0xff pattern:$0x75316420]
        %v1656 = vld.sshfl [vmem:[#allocation1 + $0x8] sm:$0xff pattern:$0x75316420]
        %v1657 = vld.sshfl [vmem:[#allocation1 + $0x10] sm:$0xff pattern:$0x75316420]
        %1658 = vrot.lane.b32.xlu0 %v1655, 126
        %v1659 = vpop.permute.xlu0 %1658
        %1660 = vrot.lane.b32.xlu0 %v1656, 126
        %v1661 = vpop.permute.xlu0 %1660
        %1662 = vrot.lane.b32.xlu0 %v1657, 126
        %v1663 = vpop.permute.xlu0 %1662
        %v1664 = vsel %vm439, %v1659, %v1661
        %v1665 = vsel %vm439, %v1661, %v1663
        %1669 = vst [vmem:[#allocation3 + $0x18] sm:$0xf] %v1664
        %1670 = vst [vmem:[#allocation3 + $0x20] sm:$0xf] %v1665
        %1671 = vst.msk [vmem:[#allocation3 + $0x28] sm:$0xf] %vm1620, %v1663
        %v1672 = vld [vmem:[#allocation5] sm:$0xff]
        %v1673 = vld [vmem:[#allocation5 + $0x8] sm:$0xf]
        %s1676 = scalar_lea.vmem [#allocation1], 1
        %1677 = vst [vmem:[%s1676] ss:$2 sm:$0xff] %v1672
        %s1678 = scalar_lea.vmem [#allocation1], 17
        %1679 = vst [vmem:[%s1678] ss:$2 sm:$0xff] %v1673
        %v1680 = vld.sshfl [vmem:[#allocation1] sm:$0xff pattern:$0x75316420]
        %v1681 = vld.sshfl [vmem:[#allocation1 + $0x8] sm:$0xff pattern:$0x75316420]
        %v1682 = vld.sshfl [vmem:[#allocation1 + $0x10] sm:$0xff pattern:$0x75316420]
        %1683 = vrot.lane.b32.xlu0 %v1680, 110
        %v1684 = vpop.permute.xlu0 %1683
        %1685 = vrot.lane.b32.xlu0 %v1681, 110
        %v1686 = vpop.permute.xlu0 %1685
        %1687 = vrot.lane.b32.xlu0 %v1682, 110
        %v1688 = vpop.permute.xlu0 %1687
        %vm1689 = vcmask 900096
        %v1690 = vsel %vm1689, %v1684, %v1686
        %v1691 = vsel %vm1689, %v1686, %v1688
        %1695 = vst [vmem:[#allocation3 + $0x18] sm:$0xf0] %v1690
        %1696 = vst [vmem:[#allocation3 + $0x20] sm:$0xf0] %v1691
        %1697 = vst.msk [vmem:[#allocation3 + $0x28] sm:$0xf0] %vm1646, %v1688
        %v1698 = vld [vmem:[#allocation5] sm:$0xff]
        %v1699 = vld [vmem:[#allocation5 + $0x8] sm:$0xf]
        %1702 = vst [vmem:[#allocation1] ss:$2 sm:$0xff] %v1698
        %s1703 = scalar_lea.vmem [#allocation1], 16
        %1704 = vst [vmem:[%s1703] ss:$2 sm:$0xff] %v1699
        %v1705 = vld.sshfl [vmem:[#allocation1] sm:$0xff pattern:$0x75316420]
        %v1706 = vld.sshfl [vmem:[#allocation1 + $0x8] sm:$0xff pattern:$0x75316420]
        %v1707 = vld.sshfl [vmem:[#allocation1 + $0x10] sm:$0xff pattern:$0x75316420]
        %1708 = vrot.lane.b32.xlu0 %v1705, 109
        %v1709 = vpop.permute.xlu0 %1708
        %1710 = vrot.lane.b32.xlu0 %v1706, 109
        %v1711 = vpop.permute.xlu0 %1710
        %1712 = vrot.lane.b32.xlu0 %v1707, 109
        %v1713 = vpop.permute.xlu0 %1712
        %vm1714 = vcmask 891904
        %v1715 = vsel %vm1714, %v1709, %v1711
        %v1716 = vsel %vm1714, %v1711, %v1713
        %1720 = vst [vmem:[#allocation3 + $0x30] sm:$0xf] %v1715
        %1721 = vst [vmem:[#allocation3 + $0x38] sm:$0xf] %v1716
        %1722 = vst.msk [vmem:[#allocation3 + $0x40] sm:$0xf] %vm1620, %v1713
        %v1723 = vld [vmem:[#allocation5] sm:$0xff]
        %v1724 = vld [vmem:[#allocation5 + $0x8] sm:$0xf]
        %s1727 = scalar_lea.vmem [#allocation1], 1
        %1728 = vst [vmem:[%s1727] ss:$2 sm:$0xff] %v1723
        %s1729 = scalar_lea.vmem [#allocation1], 17
        %1730 = vst [vmem:[%s1729] ss:$2 sm:$0xff] %v1724
        %v1731 = vld.sshfl [vmem:[#allocation1] sm:$0xff pattern:$0x75316420]
        %v1732 = vld.sshfl [vmem:[#allocation1 + $0x8] sm:$0xff pattern:$0x75316420]
        %v1733 = vld.sshfl [vmem:[#allocation1 + $0x10] sm:$0xff pattern:$0x75316420]
        %1734 = vrot.lane.b32.xlu0 %v1731, 108
        %v1735 = vpop.permute.xlu0 %1734
        %1736 = vrot.lane.b32.xlu0 %v1732, 108
        %v1737 = vpop.permute.xlu0 %1736
        %1738 = vrot.lane.b32.xlu0 %v1733, 108
        %v1739 = vpop.permute.xlu0 %1738
        %vm1740 = vcmask 883712
        %v1741 = vsel %vm1740, %v1735, %v1737
        %v1742 = vsel %vm1740, %v1737, %v1739
        %1746 = vst [vmem:[#allocation3 + $0x30] sm:$0xf0] %v1741
        %1747 = vst [vmem:[#allocation3 + $0x38] sm:$0xf0] %v1742
        %1748 = vst.msk [vmem:[#allocation3 + $0x40] sm:$0xf0] %vm1646, %v1739
        %v1749 = vld [vmem:[#allocation5] sm:$0xff]
        %v1750 = vld [vmem:[#allocation5 + $0x8] sm:$0xf]
        %1753 = vst [vmem:[#allocation1] ss:$2 sm:$0xff] %v1749
        %s1754 = scalar_lea.vmem [#allocation1], 16
        %1755 = vst [vmem:[%s1754] ss:$2 sm:$0xff] %v1750
        %v1756 = vld.sshfl [vmem:[#allocation1] sm:$0xff pattern:$0x75316420]
        %v1757 = vld.sshfl [vmem:[#allocation1 + $0x8] sm:$0xff pattern:$0x75316420]
        %v1758 = vld.sshfl [vmem:[#allocation1 + $0x10] sm:$0xff pattern:$0x75316420]
        %1759 = vrot.lane.b32.xlu0 %v1756, 92
        %v1760 = vpop.permute.xlu0 %1759
        %1761 = vrot.lane.b32.xlu0 %v1757, 92
        %v1762 = vpop.permute.xlu0 %1761
        %1763 = vrot.lane.b32.xlu0 %v1758, 92
        %v1764 = vpop.permute.xlu0 %1763
        %v1765 = vsel %vm697, %v1760, %v1762
        %v1766 = vsel %vm697, %v1762, %v1764
        %1770 = vst [vmem:[#allocation3 + $0x48] sm:$0xf] %v1765
        %1771 = vst [vmem:[#allocation3 + $0x50] sm:$0xf] %v1766
        %1772 = vst.msk [vmem:[#allocation3 + $0x58] sm:$0xf] %vm1620, %v1764
        %v1773 = vld [vmem:[#allocation5] sm:$0xff]
        %v1774 = vld [vmem:[#allocation5 + $0x8] sm:$0xf]
        %s1777 = scalar_lea.vmem [#allocation1], 1
        %1778 = vst [vmem:[%s1777] ss:$2 sm:$0xff] %v1773
        %s1779 = scalar_lea.vmem [#allocation1], 17
        %1780 = vst [vmem:[%s1779] ss:$2 sm:$0xff] %v1774
        %v1781 = vld.sshfl [vmem:[#allocation1] sm:$0xff pattern:$0x75316420]
        %v1782 = vld.sshfl [vmem:[#allocation1 + $0x8] sm:$0xff pattern:$0x75316420]
        %v1783 = vld.sshfl [vmem:[#allocation1 + $0x10] sm:$0xff pattern:$0x75316420]
        %1784 = vrot.lane.b32.xlu0 %v1781, 91
        %v1785 = vpop.permute.xlu0 %1784
        %1786 = vrot.lane.b32.xlu0 %v1782, 91
        %v1787 = vpop.permute.xlu0 %1786
        %1788 = vrot.lane.b32.xlu0 %v1783, 91
        %v1789 = vpop.permute.xlu0 %1788
        %vm1790 = vcmask 744448
        %v1791 = vsel %vm1790, %v1785, %v1787
        %v1792 = vsel %vm1790, %v1787, %v1789
        %1796 = vst [vmem:[#allocation3 + $0x48] sm:$0xf0] %v1791
        %1797 = vst [vmem:[#allocation3 + $0x50] sm:$0xf0] %v1792
        %1798 = vst.msk [vmem:[#allocation3 + $0x58] sm:$0xf0] %vm1646, %v1789
        %v1799 = vld [vmem:[#allocation5] sm:$0xff]
        %v1800 = vld [vmem:[#allocation5 + $0x8] sm:$0xf]
        %1803 = vst [vmem:[#allocation1] ss:$2 sm:$0xff] %v1799
        %s1804 = scalar_lea.vmem [#allocation1], 16
        %1805 = vst [vmem:[%s1804] ss:$2 sm:$0xff] %v1800
        %v1806 = vld.sshfl [vmem:[#allocation1] sm:$0xff pattern:$0x75316420]
        %v1807 = vld.sshfl [vmem:[#allocation1 + $0x8] sm:$0xff pattern:$0x75316420]
        %v1808 = vld.sshfl [vmem:[#allocation1 + $0x10] sm:$0xff pattern:$0x75316420]
        %1809 = vrot.lane.b32.xlu0 %v1806, 90
        %v1810 = vpop.permute.xlu0 %1809
        %1811 = vrot.lane.b32.xlu0 %v1807, 90
        %v1812 = vpop.permute.xlu0 %1811
        %1813 = vrot.lane.b32.xlu0 %v1808, 90
        %v1814 = vpop.permute.xlu0 %1813
        %v1815 = vsel %vm1579, %v1810, %v1812
        %v1816 = vsel %vm1579, %v1812, %v1814
        %1820 = vst [vmem:[#allocation3 + $0x60] sm:$0xf] %v1815
        %1821 = vst [vmem:[#allocation3 + $0x68] sm:$0xf] %v1816
        %1822 = vst.msk [vmem:[#allocation3 + $0x70] sm:$0xf] %vm1620, %v1814
        %vm1823 = vcmp.lt.s32.totalorder %v985, 304
        %vm1824 = vmand %vm986, %vm1823
        %s1825 = scalar_lea.vmem [#allocation3], 100
        %1826 = vst.msk [vmem:[%s1825] ss:$8 sm:$0x7] %vm1824, 1.0
        %1827 = vst.msk [vmem:[%s1825] ss:$8 sm:$0x0] %vm1824, 1.0
        %v1828 = vld [vmem:[%s2] sm:$0xf]
        %v1829 = vld [vmem:[#allocation3] sm:$0xff]
        %v1830 = vld [vmem:[#allocation3 + $0x8] sm:$0xff]
        %v1831 = vld [vmem:[#allocation3 + $0x10] sm:$0xff]
        %v1832 = vld [vmem:[#allocation3 + $0x18] sm:$0xff]
        %v1833 = vld [vmem:[#allocation3 + $0x20] sm:$0xff]
        %v1834 = vld [vmem:[#allocation3 + $0x28] sm:$0xff]
        %v1835 = vld [vmem:[#allocation3 + $0x30] sm:$0xff]
        %v1836 = vld [vmem:[#allocation3 + $0x38] sm:$0xff]
        %v1837 = vld [vmem:[#allocation3 + $0x40] sm:$0xff]
        %v1838 = vld [vmem:[#allocation3 + $0x48] sm:$0xff]
        %v1839 = vld [vmem:[#allocation3 + $0x50] sm:$0xff]
        %v1840 = vld [vmem:[#allocation3 + $0x58] sm:$0xff]
        %v1841 = vld [vmem:[#allocation3 + $0x60] sm:$0x1f]
        %v1842 = vld [vmem:[#allocation3 + $0x68] sm:$0x1f]
        %v1843 = vld [vmem:[#allocation3 + $0x70] sm:$0x1f]
        %v1844 = vpack.c.bf16 %v1832, %v1829
        %v1845 = vpack.c.bf16 %v1833, %v1830
        %v1846 = vpack.c.bf16 %v1834, %v1831
        %v1847 = vpack.c.bf16 %v1838, %v1835
        %v1848 = vpack.c.bf16 %v1839, %v1836
        %v1849 = vpack.c.bf16 %v1840, %v1837
        %v1850 = vpack.c.bf16 %v1841, %v1841
        %v1851 = vpack.c.bf16 %v1842, %v1842
        %v1852 = vpack.c.bf16 %v1843, %v1843
        %vm1853 = vcmask 302080
        %v1855 = vsel %vm1853, %v1828, 0
        %vm1857 = vcmask 1041408
        %vm1858 = vcmask 1042432
        %v1859 = vsel %vm1857, 4294967295, 65535
        %v1860 = vsel %vm1858, %v1859, 0
        %v1862 = vand.u32 %v1850, %v1860
        %v1865 = vand.u32 %v1851, %v1860
        %v1868 = vand.u32 %v1852, %v1860
        %1870 = vmatpush.bf16.msra.mxu0 0
        %1871 = vmatpush.bf16.msra.mxu0 0
        %1872 = vmatpush.bf16.msra.mxu0 0
        %1873 = vmatpush.bf16.msra.mxu0 0
        %1874 = vmatpush.bf16.msra.mxu0 0
        %1875 = vmatpush.bf16.msra.mxu0 %v1862
        %1876 = vmatpush.bf16.msra.mxu0 %v1847
        %1877 = vmatpush.bf16.msra.mxu0 %v1844
        %1878 = vmatmul.bf16.gmra.mxu0 %v1855
        %v1879 = vpop.f32.mrf.mxu0
        %v1880 = vadd.f32 0.0, %v1879
        %v1881 = vpop.f32.mrf.mxu0
        %1882 = vdwg.mxu0
        %1883 = vmatpush.bf16.msra.mxu0 0
        %1884 = vmatpush.bf16.msra.mxu0 0
        %1885 = vmatpush.bf16.msra.mxu0 0
        %1886 = vmatpush.bf16.msra.mxu0 0
        %1887 = vmatpush.bf16.msra.mxu0 0
        %1888 = vmatpush.bf16.msra.mxu0 %v1865
        %1889 = vmatpush.bf16.msra.mxu0 %v1848
        %1890 = vmatpush.bf16.msra.mxu0 %v1845
        %1891 = vmatmul.bf16.gmra.mxu0 %v1855
        %v1892 = vpop.f32.mrf.mxu0
        %v1893 = vadd.f32 0.0, %v1892
        %v1894 = vpop.f32.mrf.mxu0
        %1895 = vdwg.mxu0
        %1896 = vmatpush.bf16.msra.mxu0 0
        %1897 = vmatpush.bf16.msra.mxu0 0
        %1898 = vmatpush.bf16.msra.mxu0 0
        %1899 = vmatpush.bf16.msra.mxu0 0
        %1900 = vmatpush.bf16.msra.mxu0 0
        %1901 = vmatpush.bf16.msra.mxu0 %v1868
        %1902 = vmatpush.bf16.msra.mxu0 %v1849
        %1903 = vmatpush.bf16.msra.mxu0 %v1846
        %1904 = vmatmul.bf16.gmra.mxu0 %v1855
        %v1905 = vpop.f32.mrf.mxu0
        %v1906 = vadd.f32 0.0, %v1905
        %v1907 = vpop.f32.mrf.mxu0
        %1908 = vdwg.mxu0
        %v1909 = vmax.f32 %v1880, 0.0
        %v1910 = vmax.f32 %v1893, 0.0
        %v1911 = vmax.f32 %v1906, 0.0
        %1915 = vrot.lane.b32.xlu0 %v1909, 127
        %v1916 = vpop.permute.xlu0 %1915
        %1917 = vrot.lane.b32.xlu0 %v1910, 127
        %v1918 = vpop.permute.xlu0 %1917
        %1919 = vrot.lane.b32.xlu0 %v1911, 127
        %v1920 = vpop.permute.xlu0 %1919
        %v1921 = vsel %vm353, %v1916, %v1918
        %v1922 = vsel %vm353, %v1918, %v1920
        %v1926 = vmax.f32 %v1909, %v1921
        %v1927 = vmax.f32 %v1910, %v1922
        %v1928 = vmax.f32 %v1911, %v1920
        %1932 = vrot.lane.b32.xlu0 %v1926, 110
        %v1933 = vpop.permute.xlu0 %1932
        %1934 = vrot.lane.b32.xlu0 %v1927, 110
        %v1935 = vpop.permute.xlu0 %1934
        %1936 = vrot.lane.b32.xlu0 %v1928, 110
        %v1937 = vpop.permute.xlu0 %1936
        %v1938 = vsel %vm1689, %v1933, %v1935
        %v1939 = vsel %vm1689, %v1935, %v1937
        %v1943 = vmax.f32 %v1926, %v1938
        %v1944 = vmax.f32 %v1927, %v1939
        %v1945 = vmax.f32 %v1928, %v1937
        %v1946 = vpack.c.bf16 %v1943, %v1943
        %v1947 = vpack.c.bf16 %v1944, %v1944
        %v1948 = vpack.c.bf16 %v1945, %v1945
        %v1949 = vld [vmem:[%s3] sm:$0xff]
        %v1950 = vld [vmem:[%s3 + $0x8] sm:$0xff]
        %v1951 = vld [vmem:[%s3 + $0x10] sm:$0xff]
        %v1952 = vld [vmem:[%s3 + $0x18] sm:$0xff]
        %v1953 = vld [vmem:[%s3 + $0x20] sm:$0xff]
        %v1954 = vld [vmem:[%s3 + $0x28] sm:$0xff]
        %v1955 = vld [vmem:[%s3 + $0x30] sm:$0xff]
        %v1956 = vld [vmem:[%s3 + $0x38] sm:$0xff]
        %v1957 = vld [vmem:[%s3 + $0x40] sm:$0xff]
        %v1958 = vld [vmem:[%s3 + $0x48] sm:$0xff]
        %v1959 = vld [vmem:[%s3 + $0x50] sm:$0xff]
        %v1960 = vld [vmem:[%s3 + $0x58] sm:$0xff]
        %v1961 = vld [vmem:[%s3 + $0x60] sm:$0xff]
        %v1962 = vld [vmem:[%s3 + $0x68] sm:$0xff]
        %v1963 = vld [vmem:[%s3 + $0x70] sm:$0xff]
        %v1964 = vld [vmem:[%s3 + $0x78] sm:$0xff]
        %v1965 = vld [vmem:[%s3 + $0x80] sm:$0xff]
        %v1966 = vld [vmem:[%s3 + $0x88] sm:$0xff]
        %v1967 = vld [vmem:[%s3 + $0x90] sm:$0xff]
        %v1968 = vld [vmem:[%s3 + $0x98] sm:$0xff]
        %v1969 = vld [vmem:[%s3 + $0xa0] sm:$0xff]
        %v1970 = vld [vmem:[%s3 + $0xa8] sm:$0xff]
        %v1971 = vld [vmem:[%s3 + $0xb0] sm:$0xff]
        %v1972 = vld [vmem:[%s3 + $0xb8] sm:$0xff]
        %v1973 = vld [vmem:[%s3 + $0xc0] sm:$0xff]
        %v1974 = vld [vmem:[%s3 + $0xc8] sm:$0xff]
        %v1975 = vld [vmem:[%s3 + $0xd0] sm:$0xff]
        %v1976 = vld [vmem:[%s3 + $0xd8] sm:$0xff]
        %v1977 = vld [vmem:[%s3 + $0xe0] sm:$0xff]
        %v1978 = vld [vmem:[%s3 + $0xe8] sm:$0xff]
        %v1979 = vld [vmem:[%s3 + $0xf0] sm:$0xff]
        %v1980 = vld [vmem:[%s3 + $0xf8] sm:$0xff]
        %v1981 = vld [vmem:[%s3 + $0x100] sm:$0xff]
        %v1982 = vld [vmem:[%s3 + $0x108] sm:$0xff]
        %v2017 = vunpack.c.l.b16 %v1949
        %v2018 = vunpack.c.h.b16 %v1949
        %v2019 = vunpack.c.l.b16 %v1950
        %v2020 = vunpack.c.h.b16 %v1950
        %v2021 = vunpack.c.l.b16 %v1951
        %v2022 = vunpack.c.h.b16 %v1951
        %v2023 = vunpack.c.l.b16 %v1952
        %v2024 = vunpack.c.h.b16 %v1952
        %v2025 = vunpack.c.l.b16 %v1953
        %v2026 = vunpack.c.h.b16 %v1953
        %v2027 = vunpack.c.l.b16 %v1954
        %v2028 = vunpack.c.h.b16 %v1954
        %v2029 = vunpack.c.l.b16 %v1955
        %v2030 = vunpack.c.h.b16 %v1955
        %v2031 = vunpack.c.l.b16 %v1956
        %v2032 = vunpack.c.h.b16 %v1956
        %v2033 = vunpack.c.l.b16 %v1957
        %v2034 = vunpack.c.h.b16 %v1957
        %v2035 = vunpack.c.l.b16 %v1958
        %v2036 = vunpack.c.h.b16 %v1958
        %v2037 = vunpack.c.l.b16 %v1959
        %v2038 = vunpack.c.h.b16 %v1959
        %v2039 = vunpack.c.l.b16 %v1960
        %v2040 = vunpack.c.h.b16 %v1960
        %v2041 = vunpack.c.l.b16 %v1961
        %v2042 = vunpack.c.h.b16 %v1961
        %v2043 = vunpack.c.l.b16 %v1962
        %v2044 = vunpack.c.h.b16 %v1962
        %v2045 = vunpack.c.l.b16 %v1963
        %v2046 = vunpack.c.h.b16 %v1963
        %v2047 = vunpack.c.l.b16 %v1964
        %v2048 = vunpack.c.h.b16 %v1964
        %v2049 = vunpack.c.l.b16 %v1965
        %v2050 = vunpack.c.h.b16 %v1965
        %v2051 = vunpack.c.l.b16 %v1966
        %v2052 = vunpack.c.h.b16 %v1966
        %v2053 = vunpack.c.l.b16 %v1967
        %v2054 = vunpack.c.h.b16 %v1967
        %v2055 = vunpack.c.l.b16 %v1968
        %v2056 = vunpack.c.h.b16 %v1968
        %v2057 = vunpack.c.l.b16 %v1969
        %v2058 = vunpack.c.h.b16 %v1969
        %v2059 = vunpack.c.l.b16 %v1970
        %v2060 = vunpack.c.h.b16 %v1970
        %v2061 = vunpack.c.l.b16 %v1971
        %v2062 = vunpack.c.h.b16 %v1971
        %v2063 = vunpack.c.l.b16 %v1972
        %v2064 = vunpack.c.h.b16 %v1972
        %v2065 = vunpack.c.l.b16 %v1973
        %v2066 = vunpack.c.h.b16 %v1973
        %v2067 = vunpack.c.l.b16 %v1974
        %v2068 = vunpack.c.h.b16 %v1974
        %v2069 = vunpack.c.l.b16 %v1975
        %v2070 = vunpack.c.h.b16 %v1975
        %v2071 = vunpack.c.l.b16 %v1976
        %v2072 = vunpack.c.h.b16 %v1976
        %v2073 = vunpack.c.l.b16 %v1977
        %v2074 = vunpack.c.h.b16 %v1977
        %v2075 = vunpack.c.l.b16 %v1978
        %v2076 = vunpack.c.h.b16 %v1978
        %v2077 = vunpack.c.l.b16 %v1979
        %v2078 = vunpack.c.h.b16 %v1979
        %v2079 = vunpack.c.l.b16 %v1980
        %v2080 = vunpack.c.h.b16 %v1980
        %v2081 = vunpack.c.l.b16 %v1981
        %v2082 = vunpack.c.h.b16 %v1981
        %v2083 = vunpack.c.l.b16 %v1982
        %v2084 = vunpack.c.h.b16 %v1982
        %v2085 = vpack.c.b16 %v2019, %v2017
        %v2086 = vpack.c.b16 %v2020, %v2018
        %v2087 = vpack.c.b16 %v2023, %v2021
        %v2088 = vpack.c.b16 %v2024, %v2022
        %v2089 = vpack.c.b16 %v2027, %v2025
        %v2090 = vpack.c.b16 %v2028, %v2026
        %v2091 = vpack.c.b16 %v2031, %v2029
        %v2092 = vpack.c.b16 %v2032, %v2030
        %v2093 = vpack.c.b16 %v2035, %v2033
        %v2094 = vpack.c.b16 %v2036, %v2034
        %v2095 = vpack.c.b16 %v2039, %v2037
        %v2096 = vpack.c.b16 %v2040, %v2038
        %v2097 = vpack.c.b16 %v2043, %v2041
        %v2098 = vpack.c.b16 %v2044, %v2042
        %v2099 = vpack.c.b16 %v2047, %v2045
        %v2100 = vpack.c.b16 %v2048, %v2046
        %v2101 = vpack.c.b16 %v2051, %v2049
        %v2102 = vpack.c.b16 %v2052, %v2050
        %v2103 = vpack.c.b16 %v2055, %v2053
        %v2104 = vpack.c.b16 %v2056, %v2054
        %v2105 = vpack.c.b16 %v2059, %v2057
        %v2106 = vpack.c.b16 %v2060, %v2058
        %v2107 = vpack.c.b16 %v2063, %v2061
        %v2108 = vpack.c.b16 %v2064, %v2062
        %v2109 = vpack.c.b16 %v2067, %v2065
        %v2110 = vpack.c.b16 %v2068, %v2066
        %v2111 = vpack.c.b16 %v2071, %v2069
        %v2112 = vpack.c.b16 %v2072, %v2070
        %v2113 = vpack.c.b16 %v2075, %v2073
        %v2114 = vpack.c.b16 %v2076, %v2074
        %v2115 = vpack.c.b16 %v2079, %v2077
        %v2116 = vpack.c.b16 %v2080, %v2078
        %v2117 = vpack.c.b16 %v2083, %v2081
        %v2118 = vpack.c.b16 %v2084, %v2082
        %2119 = vrot.lane.b32.xlu0 %v2085, 56
        %v2120 = vpop.permute.xlu0 %2119
        %2121 = vrot.lane.b32.xlu0 %v2086, 56
        %v2122 = vpop.permute.xlu0 %2121
        %2123 = vrot.lane.b32.xlu0 %v2087, 56
        %v2124 = vpop.permute.xlu0 %2123
        %2125 = vrot.lane.b32.xlu0 %v2088, 56
        %v2126 = vpop.permute.xlu0 %2125
        %2127 = vrot.lane.b32.xlu0 %v2089, 56
        %v2128 = vpop.permute.xlu0 %2127
        %2129 = vrot.lane.b32.xlu0 %v2090, 56
        %v2130 = vpop.permute.xlu0 %2129
        %2131 = vrot.lane.b32.xlu0 %v2091, 56
        %v2132 = vpop.permute.xlu0 %2131
        %2133 = vrot.lane.b32.xlu0 %v2092, 56
        %v2134 = vpop.permute.xlu0 %2133
        %2135 = vrot.lane.b32.xlu0 %v2093, 56
        %v2136 = vpop.permute.xlu0 %2135
        %2137 = vrot.lane.b32.xlu0 %v2094, 56
        %v2138 = vpop.permute.xlu0 %2137
        %2139 = vrot.lane.b32.xlu0 %v2095, 56
        %v2140 = vpop.permute.xlu0 %2139
        %2141 = vrot.lane.b32.xlu0 %v2096, 56
        %v2142 = vpop.permute.xlu0 %2141
        %2143 = vrot.lane.b32.xlu0 %v2097, 56
        %v2144 = vpop.permute.xlu0 %2143
        %2145 = vrot.lane.b32.xlu0 %v2098, 56
        %v2146 = vpop.permute.xlu0 %2145
        %2147 = vrot.lane.b32.xlu0 %v2099, 56
        %v2148 = vpop.permute.xlu0 %2147
        %2149 = vrot.lane.b32.xlu0 %v2100, 56
        %v2150 = vpop.permute.xlu0 %2149
        %2151 = vrot.lane.b32.xlu0 %v2101, 56
        %v2152 = vpop.permute.xlu0 %2151
        %2153 = vrot.lane.b32.xlu0 %v2102, 56
        %v2154 = vpop.permute.xlu0 %2153
        %2155 = vrot.lane.b32.xlu0 %v2103, 56
        %v2156 = vpop.permute.xlu0 %2155
        %2157 = vrot.lane.b32.xlu0 %v2104, 56
        %v2158 = vpop.permute.xlu0 %2157
        %2159 = vrot.lane.b32.xlu0 %v2105, 56
        %v2160 = vpop.permute.xlu0 %2159
        %2161 = vrot.lane.b32.xlu0 %v2106, 56
        %v2162 = vpop.permute.xlu0 %2161
        %2163 = vrot.lane.b32.xlu0 %v2107, 56
        %v2164 = vpop.permute.xlu0 %2163
        %2165 = vrot.lane.b32.xlu0 %v2108, 56
        %v2166 = vpop.permute.xlu0 %2165
        %2167 = vrot.lane.b32.xlu0 %v2109, 56
        %v2168 = vpop.permute.xlu0 %2167
        %2169 = vrot.lane.b32.xlu0 %v2110, 56
        %v2170 = vpop.permute.xlu0 %2169
        %2171 = vrot.lane.b32.xlu0 %v2111, 56
        %v2172 = vpop.permute.xlu0 %2171
        %2173 = vrot.lane.b32.xlu0 %v2112, 56
        %v2174 = vpop.permute.xlu0 %2173
        %2175 = vrot.lane.b32.xlu0 %v2113, 56
        %v2176 = vpop.permute.xlu0 %2175
        %2177 = vrot.lane.b32.xlu0 %v2114, 56
        %v2178 = vpop.permute.xlu0 %2177
        %2179 = vrot.lane.b32.xlu0 %v2115, 56
        %v2180 = vpop.permute.xlu0 %2179
        %2181 = vrot.lane.b32.xlu0 %v2116, 56
        %v2182 = vpop.permute.xlu0 %2181
        %2183 = vrot.lane.b32.xlu0 %v2117, 56
        %v2184 = vpop.permute.xlu0 %2183
        %2185 = vrot.lane.b32.xlu0 %v2118, 56
        %v2186 = vpop.permute.xlu0 %2185
        %vm2187 = vcmask 457728
        %v2188 = vsel %vm2187, %v2120, %v2122
        %v2189 = vsel %vm2187, %v2124, %v2126
        %v2190 = vsel %vm2187, %v2128, %v2130
        %v2191 = vsel %vm2187, %v2132, %v2134
        %v2192 = vsel %vm2187, %v2136, %v2138
        %v2193 = vsel %vm2187, %v2140, %v2142
        %v2194 = vsel %vm2187, %v2144, %v2146
        %v2195 = vsel %vm2187, %v2148, %v2150
        %v2196 = vsel %vm2187, %v2152, %v2154
        %v2197 = vsel %vm2187, %v2156, %v2158
        %v2198 = vsel %vm2187, %v2160, %v2162
        %v2199 = vsel %vm2187, %v2164, %v2166
        %v2200 = vsel %vm2187, %v2168, %v2170
        %v2201 = vsel %vm2187, %v2172, %v2174
        %v2202 = vsel %vm2187, %v2176, %v2178
        %v2203 = vsel %vm2187, %v2180, %v2182
        %v2204 = vsel %vm2187, %v2184, %v2186
        %v2223 = vsel %vm1519, %v1948, 0
        %2225 = vmatpush.bf16.msra.mxu0 %v2195
        %2226 = vmatpush.bf16.msra.mxu0 %v2194
        %2227 = vmatpush.bf16.msra.mxu0 %v2193
        %2228 = vmatpush.bf16.msra.mxu0 %v2192
        %2229 = vmatpush.bf16.msra.mxu0 %v2191
        %2230 = vmatpush.bf16.msra.mxu0 %v2190
        %2231 = vmatpush.bf16.msra.mxu0 %v2189
        %2232 = vmatpush.bf16.msra.mxu0 %v2188
        %2233 = vmatmul.bf16.gmra.mxu0 %v1946
        %v2234 = vpop.f32.mrf.mxu0
        %v2235 = vadd.f32 0.0, %v2234
        %v2236 = vpop.f32.mrf.mxu0
        %2237 = vdwg.mxu0
        %2238 = vmatpush.bf16.msra.mxu0 %v2203
        %2239 = vmatpush.bf16.msra.mxu0 %v2202
        %2240 = vmatpush.bf16.msra.mxu0 %v2201
        %2241 = vmatpush.bf16.msra.mxu0 %v2200
        %2242 = vmatpush.bf16.msra.mxu0 %v2199
        %2243 = vmatpush.bf16.msra.mxu0 %v2198
        %2244 = vmatpush.bf16.msra.mxu0 %v2197
        %2245 = vmatpush.bf16.msra.mxu0 %v2196
        %2246 = vmatmul.bf16.gmra.mxu0 %v1947
        %v2247 = vpop.f32.mrf.mxu0
        %v2248 = vadd.f32 %v2235, %v2247
        %v2249 = vpop.f32.mrf.mxu0
        %2250 = vdwg.mxu0
        %2251 = vmatpush.bf16.msra.mxu0 0
        %2252 = vmatpush.bf16.msra.mxu0 0
        %2253 = vmatpush.bf16.msra.mxu0 0
        %2254 = vmatpush.bf16.msra.mxu0 0
        %2255 = vmatpush.bf16.msra.mxu0 0
        %2256 = vmatpush.bf16.msra.mxu0 0
        %2257 = vmatpush.bf16.msra.mxu0 0
        %2258 = vmatpush.bf16.msra.mxu0 %v2204
        %2259 = vmatmul.bf16.gmra.mxu0 %v2223
        %v2260 = vpop.f32.mrf.mxu0
        %v2261 = vadd.f32 %v2248, %v2260
        %v2262 = vpop.f32.mrf.mxu0
        %2263 = vdwg.mxu0
        %v2264 = vld [vmem:[%s5] sm:$0x1]
        %v2265 = vpack.c.bf16 %v2261, %v2261
        %v2266 = vld [vmem:[%s4] sm:$0xf]
        %v2267 = vld [vmem:[%s4 + $0x4] sm:$0xf]
        %v2268 = vld [vmem:[%s4 + $0x8] sm:$0xf]
        %v2269 = vld [vmem:[%s4 + $0xc] sm:$0xf]
        %v2270 = vld [vmem:[%s4 + $0x10] sm:$0xf]
        %v2271 = vld [vmem:[%s4 + $0x14] sm:$0xf]
        %v2272 = vld [vmem:[%s4 + $0x18] sm:$0xf]
        %v2273 = vld [vmem:[%s4 + $0x1c] sm:$0xf]
        %v2282 = vunpack.c.l.b16 %v2266
        %v2283 = vunpack.c.l.b16 %v2267
        %v2284 = vunpack.c.l.b16 %v2268
        %v2285 = vunpack.c.l.b16 %v2269
        %v2286 = vunpack.c.l.b16 %v2270
        %v2287 = vunpack.c.l.b16 %v2271
        %v2288 = vunpack.c.l.b16 %v2272
        %v2289 = vunpack.c.l.b16 %v2273
        %v2290 = vpack.c.b16 %v2283, %v2282
        %v2291 = vpack.c.b16 %v2285, %v2284
        %v2292 = vpack.c.b16 %v2287, %v2286
        %v2293 = vpack.c.b16 %v2289, %v2288
        %vm2298 = vcmask 523264
        %v2300 = vsel %vm2298, %v2265, 0
        %2302 = vmatpush.bf16.msra.mxu0 0
        %2303 = vmatpush.bf16.msra.mxu0 0
        %2304 = vmatpush.bf16.msra.mxu0 0
        %2305 = vmatpush.bf16.msra.mxu0 0
        %2306 = vmatpush.bf16.msra.mxu0 %v2293
        %2307 = vmatpush.bf16.msra.mxu0 %v2292
        %2308 = vmatpush.bf16.msra.mxu0 %v2291
        %2309 = vmatpush.bf16.msra.mxu0 %v2290
        %2310 = vmatmul.bf16.gmra.mxu0 %v2300
        %v2311 = vpop.f32.mrf.mxu0
        %v2312 = vadd.f32 0.0, %v2311
        %v2313 = vpop.f32.mrf.mxu0
        %2314 = vdwg.mxu0
        %v2315 = vadd.f32 %v2264, %v2312
        %s2316 = scalar_lea.vmem %s4, 32
        %v2317 = vld [vmem:[%s2316] sm:$0xf]
        %v2318 = vld [vmem:[%s2316 + $0x4] sm:$0xf]
        %v2319 = vld [vmem:[%s2316 + $0x8] sm:$0xf]
        %v2320 = vld [vmem:[%s2316 + $0xc] sm:$0xf]
        %v2321 = vld [vmem:[%s2316 + $0x10] sm:$0xf]
        %v2322 = vld [vmem:[%s2316 + $0x14] sm:$0xf]
        %v2323 = vld [vmem:[%s2316 + $0x18] sm:$0xf]
        %v2324 = vld [vmem:[%s2316 + $0x1c] sm:$0xf]
        %v2325 = vshrl.u32 %v2265, 16
        %v2335 = vunpack.c.l.b16 %v2317
        %v2336 = vunpack.c.l.b16 %v2318
        %v2337 = vunpack.c.l.b16 %v2319
        %v2338 = vunpack.c.l.b16 %v2320
        %v2339 = vunpack.c.l.b16 %v2321
        %v2340 = vunpack.c.l.b16 %v2322
        %v2341 = vunpack.c.l.b16 %v2323
        %v2342 = vunpack.c.l.b16 %v2324
        %v2343 = vpack.c.b16 %v2336, %v2335
        %v2344 = vpack.c.b16 %v2338, %v2337
        %v2345 = vpack.c.b16 %v2340, %v2339
        %v2346 = vpack.c.b16 %v2342, %v2341
        %v2352 = vsel %vm2298, %v2325, 0
        %2354 = vmatpush.bf16.msra.mxu0 0
        %2355 = vmatpush.bf16.msra.mxu0 0
        %2356 = vmatpush.bf16.msra.mxu0 0
        %2357 = vmatpush.bf16.msra.mxu0 0
        %2358 = vmatpush.bf16.msra.mxu0 %v2346
        %2359 = vmatpush.bf16.msra.mxu0 %v2345
        %2360 = vmatpush.bf16.msra.mxu0 %v2344
        %2361 = vmatpush.bf16.msra.mxu0 %v2343
        %2362 = vmatmul.bf16.gmra.mxu0 %v2352
        %v2363 = vpop.f32.mrf.mxu0
        %v2364 = vadd.f32 0.0, %v2363
        %v2365 = vpop.f32.mrf.mxu0
        %2366 = vdwg.mxu0
        %v2367 = vadd.f32 %v2315, %v2364
        %s2368 = scalar_lea.vmem %s4, 64
        %v2369 = vld [vmem:[%s2368] sm:$0xf]
        %v2370 = vld [vmem:[%s2368 + $0x4] sm:$0xf]
        %v2371 = vld [vmem:[%s2368 + $0x8] sm:$0xf]
        %v2372 = vld [vmem:[%s2368 + $0xc] sm:$0xf]
        %v2373 = vld [vmem:[%s2368 + $0x10] sm:$0xf]
        %v2374 = vld [vmem:[%s2368 + $0x14] sm:$0xf]
        %v2375 = vld [vmem:[%s2368 + $0x18] sm:$0xf]
        %v2376 = vld [vmem:[%s2368 + $0x1c] sm:$0xf]
        %v2378 = vrot.slane %v2265, 1
        %v2387 = vunpack.c.l.b16 %v2369
        %v2388 = vunpack.c.l.b16 %v2370
        %v2389 = vunpack.c.l.b16 %v2371
        %v2390 = vunpack.c.l.b16 %v2372
        %v2391 = vunpack.c.l.b16 %v2373
        %v2392 = vunpack.c.l.b16 %v2374
        %v2393 = vunpack.c.l.b16 %v2375
        %v2394 = vunpack.c.l.b16 %v2376
        %v2395 = vpack.c.b16 %v2388, %v2387
        %v2396 = vpack.c.b16 %v2390, %v2389
        %v2397 = vpack.c.b16 %v2392, %v2391
        %v2398 = vpack.c.b16 %v2394, %v2393
        %v2404 = vsel %vm2298, %v2378, 0
        %2406 = vmatpush.bf16.msra.mxu0 0
        %2407 = vmatpush.bf16.msra.mxu0 0
        %2408 = vmatpush.bf16.msra.mxu0 0
        %2409 = vmatpush.bf16.msra.mxu0 0
        %2410 = vmatpush.bf16.msra.mxu0 %v2398
        %2411 = vmatpush.bf16.msra.mxu0 %v2397
        %2412 = vmatpush.bf16.msra.mxu0 %v2396
        %2413 = vmatpush.bf16.msra.mxu0 %v2395
        %2414 = vmatmul.bf16.gmra.mxu0 %v2404
        %v2415 = vpop.f32.mrf.mxu0
        %v2416 = vadd.f32 0.0, %v2415
        %v2417 = vpop.f32.mrf.mxu0
        %2418 = vdwg.mxu0
        %v2419 = vadd.f32 %v2367, %v2416
        %s2420 = scalar_lea.vmem %s4, 96
        %v2421 = vld [vmem:[%s2420] sm:$0xf]
        %v2422 = vld [vmem:[%s2420 + $0x4] sm:$0xf]
        %v2423 = vld [vmem:[%s2420 + $0x8] sm:$0xf]
        %v2424 = vld [vmem:[%s2420 + $0xc] sm:$0xf]
        %v2425 = vld [vmem:[%s2420 + $0x10] sm:$0xf]
        %v2426 = vld [vmem:[%s2420 + $0x14] sm:$0xf]
        %v2427 = vld [vmem:[%s2420 + $0x18] sm:$0xf]
        %v2428 = vld [vmem:[%s2420 + $0x1c] sm:$0xf]
        %v2429 = vrot.slane %v2325, 1
        %v2438 = vunpack.c.l.b16 %v2421
        %v2439 = vunpack.c.l.b16 %v2422
        %v2440 = vunpack.c.l.b16 %v2423
        %v2441 = vunpack.c.l.b16 %v2424
        %v2442 = vunpack.c.l.b16 %v2425
        %v2443 = vunpack.c.l.b16 %v2426
        %v2444 = vunpack.c.l.b16 %v2427
        %v2445 = vunpack.c.l.b16 %v2428
        %v2446 = vpack.c.b16 %v2439, %v2438
        %v2447 = vpack.c.b16 %v2441, %v2440
        %v2448 = vpack.c.b16 %v2443, %v2442
        %v2449 = vpack.c.b16 %v2445, %v2444
        %v2455 = vsel %vm2298, %v2429, 0
        %2457 = vmatpush.bf16.msra.mxu0 0
        %2458 = vmatpush.bf16.msra.mxu0 0
        %2459 = vmatpush.bf16.msra.mxu0 0
        %2460 = vmatpush.bf16.msra.mxu0 0
        %2461 = vmatpush.bf16.msra.mxu0 %v2449
        %2462 = vmatpush.bf16.msra.mxu0 %v2448
        %2463 = vmatpush.bf16.msra.mxu0 %v2447
        %2464 = vmatpush.bf16.msra.mxu0 %v2446
        %2465 = vmatmul.bf16.gmra.mxu0 %v2455
        %v2466 = vpop.f32.mrf.mxu0
        %v2467 = vadd.f32 0.0, %v2466
        %v2468 = vpop.f32.mrf.mxu0
        %2469 = vdwg.mxu0
        %v2470 = vadd.f32 %v2419, %v2467
        %s2471 = scalar_lea.vmem %s4, 128
        %v2472 = vld [vmem:[%s2471] sm:$0xf]
        %v2473 = vld [vmem:[%s2471 + $0x4] sm:$0xf]
        %v2474 = vld [vmem:[%s2471 + $0x8] sm:$0xf]
        %v2475 = vld [vmem:[%s2471 + $0xc] sm:$0xf]
        %v2476 = vld [vmem:[%s2471 + $0x10] sm:$0xf]
        %v2477 = vld [vmem:[%s2471 + $0x14] sm:$0xf]
        %v2478 = vld [vmem:[%s2471 + $0x18] sm:$0xf]
        %v2479 = vld [vmem:[%s2471 + $0x1c] sm:$0xf]
        %v2480 = vrot.slane %v2265, 2
        %v2489 = vunpack.c.l.b16 %v2472
        %v2490 = vunpack.c.l.b16 %v2473
        %v2491 = vunpack.c.l.b16 %v2474
        %v2492 = vunpack.c.l.b16 %v2475
        %v2493 = vunpack.c.l.b16 %v2476
        %v2494 = vunpack.c.l.b16 %v2477
        %v2495 = vunpack.c.l.b16 %v2478
        %v2496 = vunpack.c.l.b16 %v2479
        %v2497 = vpack.c.b16 %v2490, %v2489
        %v2498 = vpack.c.b16 %v2492, %v2491
        %v2499 = vpack.c.b16 %v2494, %v2493
        %v2500 = vpack.c.b16 %v2496, %v2495
        %v2506 = vsel %vm2298, %v2480, 0
        %2508 = vmatpush.bf16.msra.mxu0 0
        %2509 = vmatpush.bf16.msra.mxu0 0
        %2510 = vmatpush.bf16.msra.mxu0 0
        %2511 = vmatpush.bf16.msra.mxu0 0
        %2512 = vmatpush.bf16.msra.mxu0 %v2500
        %2513 = vmatpush.bf16.msra.mxu0 %v2499
        %2514 = vmatpush.bf16.msra.mxu0 %v2498
        %2515 = vmatpush.bf16.msra.mxu0 %v2497
        %2516 = vmatmul.bf16.gmra.mxu0 %v2506
        %v2517 = vpop.f32.mrf.mxu0
        %v2518 = vadd.f32 0.0, %v2517
        %v2519 = vpop.f32.mrf.mxu0
        %2520 = vdwg.mxu0
        %v2521 = vadd.f32 %v2470, %v2518
        %s2522 = scalar_lea.vmem %s4, 160
        %v2523 = vld [vmem:[%s2522] sm:$0xf]
        %v2524 = vld [vmem:[%s2522 + $0x4] sm:$0xf]
        %v2525 = vld [vmem:[%s2522 + $0x8] sm:$0xf]
        %v2526 = vld [vmem:[%s2522 + $0xc] sm:$0xf]
        %v2527 = vld [vmem:[%s2522 + $0x10] sm:$0xf]
        %v2528 = vld [vmem:[%s2522 + $0x14] sm:$0xf]
        %v2529 = vld [vmem:[%s2522 + $0x18] sm:$0xf]
        %v2530 = vld [vmem:[%s2522 + $0x1c] sm:$0xf]
        %v2531 = vrot.slane %v2325, 2
        %v2540 = vunpack.c.l.b16 %v2523
        %v2541 = vunpack.c.l.b16 %v2524
        %v2542 = vunpack.c.l.b16 %v2525
        %v2543 = vunpack.c.l.b16 %v2526
        %v2544 = vunpack.c.l.b16 %v2527
        %v2545 = vunpack.c.l.b16 %v2528
        %v2546 = vunpack.c.l.b16 %v2529
        %v2547 = vunpack.c.l.b16 %v2530
        %v2548 = vpack.c.b16 %v2541, %v2540
        %v2549 = vpack.c.b16 %v2543, %v2542
        %v2550 = vpack.c.b16 %v2545, %v2544
        %v2551 = vpack.c.b16 %v2547, %v2546
        %v2557 = vsel %vm2298, %v2531, 0
        %2559 = vmatpush.bf16.msra.mxu0 0
        %2560 = vmatpush.bf16.msra.mxu0 0
        %2561 = vmatpush.bf16.msra.mxu0 0
        %2562 = vmatpush.bf16.msra.mxu0 0
        %2563 = vmatpush.bf16.msra.mxu0 %v2551
        %2564 = vmatpush.bf16.msra.mxu0 %v2550
        %2565 = vmatpush.bf16.msra.mxu0 %v2549
        %2566 = vmatpush.bf16.msra.mxu0 %v2548
        %2567 = vmatmul.bf16.gmra.mxu0 %v2557
        %v2568 = vpop.f32.mrf.mxu0
        %v2569 = vadd.f32 0.0, %v2568
        %v2570 = vpop.f32.mrf.mxu0
        %2571 = vdwg.mxu0
        %v2572 = vadd.f32 %v2521, %v2569
        %s2573 = scalar_lea.vmem %s4, 192
        %v2574 = vld [vmem:[%s2573] sm:$0xf]
        %v2575 = vld [vmem:[%s2573 + $0x4] sm:$0xf]
        %v2576 = vld [vmem:[%s2573 + $0x8] sm:$0xf]
        %v2577 = vld [vmem:[%s2573 + $0xc] sm:$0xf]
        %v2578 = vld [vmem:[%s2573 + $0x10] sm:$0xf]
        %v2579 = vld [vmem:[%s2573 + $0x14] sm:$0xf]
        %v2580 = vld [vmem:[%s2573 + $0x18] sm:$0xf]
        %v2581 = vld [vmem:[%s2573 + $0x1c] sm:$0xf]
        %v2582 = vrot.slane %v2265, 3
        %v2591 = vunpack.c.l.b16 %v2574
        %v2592 = vunpack.c.l.b16 %v2575
        %v2593 = vunpack.c.l.b16 %v2576
        %v2594 = vunpack.c.l.b16 %v2577
        %v2595 = vunpack.c.l.b16 %v2578
        %v2596 = vunpack.c.l.b16 %v2579
        %v2597 = vunpack.c.l.b16 %v2580
        %v2598 = vunpack.c.l.b16 %v2581
        %v2599 = vpack.c.b16 %v2592, %v2591
        %v2600 = vpack.c.b16 %v2594, %v2593
        %v2601 = vpack.c.b16 %v2596, %v2595
        %v2602 = vpack.c.b16 %v2598, %v2597
        %v2608 = vsel %vm2298, %v2582, 0
        %2610 = vmatpush.bf16.msra.mxu0 0
        %2611 = vmatpush.bf16.msra.mxu0 0
        %2612 = vmatpush.bf16.msra.mxu0 0
        %2613 = vmatpush.bf16.msra.mxu0 0
        %2614 = vmatpush.bf16.msra.mxu0 %v2602
        %2615 = vmatpush.bf16.msra.mxu0 %v2601
        %2616 = vmatpush.bf16.msra.mxu0 %v2600
        %2617 = vmatpush.bf16.msra.mxu0 %v2599
        %2618 = vmatmul.bf16.gmra.mxu0 %v2608
        %v2619 = vpop.f32.mrf.mxu0
        %v2620 = vadd.f32 0.0, %v2619
        %v2621 = vpop.f32.mrf.mxu0
        %2622 = vdwg.mxu0
        %v2623 = vadd.f32 %v2572, %v2620
        %s2624 = scalar_lea.vmem %s4, 224
        %v2625 = vld [vmem:[%s2624] sm:$0xf]
        %v2626 = vld [vmem:[%s2624 + $0x4] sm:$0xf]
        %v2627 = vld [vmem:[%s2624 + $0x8] sm:$0xf]
        %v2628 = vld [vmem:[%s2624 + $0xc] sm:$0xf]
        %v2629 = vld [vmem:[%s2624 + $0x10] sm:$0xf]
        %v2630 = vld [vmem:[%s2624 + $0x14] sm:$0xf]
        %v2631 = vld [vmem:[%s2624 + $0x18] sm:$0xf]
        %v2632 = vld [vmem:[%s2624 + $0x1c] sm:$0xf]
        %v2633 = vrot.slane %v2325, 3
        %v2642 = vunpack.c.l.b16 %v2625
        %v2643 = vunpack.c.l.b16 %v2626
        %v2644 = vunpack.c.l.b16 %v2627
        %v2645 = vunpack.c.l.b16 %v2628
        %v2646 = vunpack.c.l.b16 %v2629
        %v2647 = vunpack.c.l.b16 %v2630
        %v2648 = vunpack.c.l.b16 %v2631
        %v2649 = vunpack.c.l.b16 %v2632
        %v2650 = vpack.c.b16 %v2643, %v2642
        %v2651 = vpack.c.b16 %v2645, %v2644
        %v2652 = vpack.c.b16 %v2647, %v2646
        %v2653 = vpack.c.b16 %v2649, %v2648
        %v2659 = vsel %vm2298, %v2633, 0
        %2661 = vmatpush.bf16.msra.mxu0 0
        %2662 = vmatpush.bf16.msra.mxu0 0
        %2663 = vmatpush.bf16.msra.mxu0 0
        %2664 = vmatpush.bf16.msra.mxu0 0
        %2665 = vmatpush.bf16.msra.mxu0 %v2653
        %2666 = vmatpush.bf16.msra.mxu0 %v2652
        %2667 = vmatpush.bf16.msra.mxu0 %v2651
        %2668 = vmatpush.bf16.msra.mxu0 %v2650
        %2669 = vmatmul.bf16.gmra.mxu0 %v2659
        %v2670 = vpop.f32.mrf.mxu0
        %v2671 = vadd.f32 0.0, %v2670
        %v2672 = vpop.f32.mrf.mxu0
        %2673 = vdwg.mxu0
        %v2674 = vadd.f32 %v2623, %v2671
        %2675 = vst [vmem:[%s243] sm:$0x1] %v2674
        %s2676 = sand.u32 %s159, 1
        %s2677 = scalar_lea.sflag [#allocation7], %s2676
        %s2678 = sand.u32 %s159, 1
        %s2679 = scalar_lea.vmem [#allocation6], %s2678
        // Predicated region
        $region45: #{net_forward.1} parent=43 // pred_check
          %p2680 = pneg %p169
        $region46: #{net_forward.1} parent=43 // pred_check_branch
          %2682 = sbr.rel (%p2680) target = $region48
        $region47: #{net_forward.1} parent=43 // pred_region
          %2684 = vsyncadd %s2677, 0
          %s2685 = scalar_lea.hbm %s6, %s20
          %s2687 = sshll.u32 %s2679, 4
          %s2688 = int_to_ptr.vmem [resolvable:$true] %s2687
          %s2689 = sshll.u32 %s2685, 4
          %s2690 = int_to_ptr.hbm [resolvable:$true] %s2689
          %2692 = dma.vmem_to_hbm [thread:$0]  %s2688, 16, %s2690, %s2677
        $region48: #{net_forward.1} parent=43 // pred_fallthru
          _
      $region44: #{net_forward.1} parent=5 // pred_fallthru
        _
      %p2693 = scmp.le.s32.totalorder 2, %s15
      // Predicated region
      $region49: #{net_forward.1} parent=5 // pred_check
        %p2694 = pneg %p2693
      $region50: #{net_forward.1} parent=5 // pred_check_branch
        %2696 = sbr.rel (%p2694) target = $region52
      $region51: #{net_forward.1} parent=5 // pred_region
        %s2697 = ssub.s32 %s15, 2
        // Predicated region
        $region53: #{net_forward.1} parent=51 // pred_check
          %p2698 = pneg %p175
        $region54: #{net_forward.1} parent=51 // pred_check_branch
          %2700 = sbr.rel (%p2698) target = $region56
        $region55: #{net_forward.1} parent=51 // pred_region
          %s2701 = sand.u32 %s160, 1
          %s2702 = scalar_lea.sflag [#allocation7], %s2701
          %s2703 = sand.u32 %s160, 1
          %s2704 = scalar_lea.vmem [#allocation6], %s2703
          %2706 = dma.done %s2702, 16
        $region56: #{net_forward.1} parent=51 // pred_fallthru
          _
      $region52: #{net_forward.1} parent=5 // pred_fallthru
        _
    $region6: #{net_forward.1} parent=1 // loop_footer
      %s19 = sadd.s32 1, %s15
    $region7: #{net_forward.1} parent=1 // loop_footer_branch
      %14 = sbr.rel target = $region3
    $region8: #{net_forward.1} parent=1 // loop_exit
      _
    %2707 = vsyncpa [#allocation7], 1
    %s2708 = scalar_lea.sflag [#allocation7], 1
    %2709 = vsyncpa %s2708, 1

</llo_original>
